<compile_context>
chip_gen: v7x
topology: tpu7x:2x2x1
jax: 0.10.0
libtpu: 0.0.40
codegen_flags: <defaults>
</compile_context>

<pallas_src>
import functools

import numpy as np
import jax
import jax.numpy as jnp
from jax.experimental import pallas as pl
from jax.experimental.pallas import tpu as pltpu


# ----------------------------------------------------------------------------
# Fused Pallas kernel
# ----------------------------------------------------------------------------
def _encoder_fused_kernel(x_ref, w1_ref, b1_ref, w2_ref, b2_ref, w3_ref, b3_ref,
                          wp_ref, bp_ref, g_ref, beta_ref, o_ref):
    cdt = w1_ref.dtype          # MXU input dtype (bf16 by default, f32 optional)

    # shared_cnn: Conv2d(4->16, 3x3, s2) + ReLU ; Conv2d(16->16, 3x3) + ReLU
    # x arrives f32; cast to the MXU dtype in-kernel (no external cast pass).
    h = jnp.dot(x_ref[...].astype(cdt), w1_ref[...],
                preferred_element_type=jnp.float32)
    h = jnp.maximum(h + b1_ref[...], 0.0)                         # f32 VPU
    h = jnp.dot(h.astype(cdt), w2_ref[...], preferred_element_type=jnp.float32)
    h = jnp.maximum(h + b2_ref[...], 0.0)

    # head_cnn: Conv2d(16->16, 3x3) + ReLU ; its output row IS the CHW flatten.
    h = jnp.dot(h.astype(cdt), w3_ref[...], preferred_element_type=jnp.float32)
    h = jnp.maximum(h + b3_ref[...], 0.0)

    # projection: Linear -> LayerNorm(eps=1e-5, PyTorch) -> Tanh, all f32.
    y = jnp.dot(h.astype(cdt), wp_ref[...], preferred_element_type=jnp.float32)
    y = y + bp_ref[...]
    mean = jnp.mean(y, axis=-1, keepdims=True)
    var = jnp.mean((y - mean) ** 2, axis=-1, keepdims=True)
    y = (y - mean) * jax.lax.rsqrt(var + 1e-5)
    o_ref[...] = jnp.tanh(y * g_ref[...] + beta_ref[...])


def _pick_batch_tile(B):
    """Batch tile selection (perf-review policy).

    - B >= 1024 : 512-row tiles  (amortize per-step overhead, 256-aligned M)
    - B >=  512 : 256-row tiles
    - 8 < B < 512 : split into >= 2 grid steps (v7x: both TensorCores busy),
      tile rounded up to a multiple of 8 for the (8,128) sublane rule.
    - B <= 8    : one step with tb == B (full-dim block is always legal).
    """
    if B >= 1024:
        return 512
    if B >= 512:
        return 256
    if B > 8:
        half = -(-B // 2)                 # cdiv(B, 2)
        return ((half + 7) // 8) * 8      # round up to multiple of 8
    return B


def encoder_forward_pallas(params, x_flat):
    """x_flat: (B, C*H*W) CHW-flattened f32 input rows (x.reshape(B, -1) of NCHW)."""
    B = x_flat.shape[0]
    w1, w2, w3, wp = params["w1"], params["w2"], params["w3"], params["wp"]
    d0, d1 = w1.shape
    d2 = w2.shape[1]
    d3 = w3.shape[1]
    dout = wp.shape[1]

    tb = _pick_batch_tile(B)
    grid = (pl.cdiv(B, tb),)

    row = lambda i: (i, 0)        # batch-tiled operands
    resident = lambda i: (0, 0)   # weights/biases: same block every step -> stay in VMEM

    return pl.pallas_call(
        _encoder_fused_kernel,
        out_shape=jax.ShapeDtypeStruct((B, dout), jnp.float32),
        grid=grid,
        in_specs=[
            pl.BlockSpec((tb, d0), row),                            # x (f32, cast in-kernel)
            pl.BlockSpec((d0, d1), resident), pl.BlockSpec((1, d1), resident),
            pl.BlockSpec((d1, d2), resident), pl.BlockSpec((1, d2), resident),
            pl.BlockSpec((d2, d3), resident), pl.BlockSpec((1, d3), resident),
            pl.BlockSpec((d3, dout), resident), pl.BlockSpec((1, dout), resident),
            pl.BlockSpec((1, dout), resident), pl.BlockSpec((1, dout), resident),
        ],
        out_specs=pl.BlockSpec((tb, dout), row),
        compiler_params=pltpu.CompilerParams(
            dimension_semantics=("parallel",),
            vmem_limit_bytes=32 * 1024 * 1024),   # explicit budget, safe on v7x's 64 MiB
    )(x_flat, w1, params["b1"], w2, params["b2"],
      w3, params["b3"], wp, params["bp"], params["ln_g"], params["ln_b"])


@functools.partial(jax.jit, static_argnames=("detach",))
def single_view_encoder_forward(params, x, detach=False):
    """x: (B, C, H, W) NCHW f32, exactly like the PyTorch module."""
    # TODO(synk): `detach` only stops gradients between head_cnn and projection;
    # the forward pass is identical and this fused kernel defines no custom VJP,
    # so it is a forward no-op here.
    del detach
    B = x.shape[0]
    x_flat = x.reshape(B, -1)     # free reshape; CHW order matches the folded weights
    return encoder_forward_pallas(params, x_flat.astype(jnp.float32))


# ----------------------------------------------------------------------------
# One-time parameter preparation: fold each conv into an equivalent dense GEMM
# ----------------------------------------------------------------------------
def _conv_as_dense(w, b, h_in, w_in, stride):
    """Fold a PyTorch-style Conv2d (OIHW weight, VALID padding, given stride)
    into an equivalent dense matrix acting on CHW-flattened rows:
        y_flat = x_flat @ mat + b_row     (identical numerics to the conv)."""
    w = np.asarray(w, np.float32)
    b = np.asarray(b, np.float32)
    c_out, c_in, kh, kw = w.shape
    h_out = (h_in - kh) // stride + 1
    w_out = (w_in - kw) // stride + 1
    mat = np.zeros((c_in * h_in * w_in, c_out * h_out * w_out), np.float32)
    ci = np.arange(c_in)
    co = np.arange(c_out)
    for di in range(kh):
        for dj in range(kw):
            tap = w[:, :, di, dj].T                         # (c_in, c_out)
            for oi in range(h_out):
                ii = oi * stride + di
                for oj in range(w_out):
                    jj = oj * stride + dj
                    rows = ci * (h_in * w_in) + ii * w_in + jj
                    cols = co * (h_out * w_out) + oi * w_out + oj
                    mat[np.ix_(rows, cols)] += tap
    b_row = np.repeat(b, h_out * w_out)[None, :].astype(np.float32)
    return mat, b_row, h_out, w_out


def init_raw_params(key, in_ch=4, hid_ch=16, out_dim=32, img_hw=16):
    """Synthetic, deterministic parameters for the concrete encoder instance."""
    ks = jax.random.split(key, 8)

    def conv_w(k, co, ci, kh, kw):
        scale = 1.0 / np.sqrt(ci * kh * kw)
        return scale * jax.random.normal(k, (co, ci, kh, kw), jnp.float32)

    raw = {
        "w1": conv_w(ks[0], hid_ch, in_ch, 3, 3),
        "b1": 0.01 * jax.random.normal(ks[1], (hid_ch,), jnp.float32),
        "w2": conv_w(ks[2], hid_ch, hid_ch, 3, 3),
        "b2": 0.01 * jax.random.normal(ks[3], (hid_ch,), jnp.float32),
        "w3": conv_w(ks[4], hid_ch, hid_ch, 3, 3),
        "b3": 0.01 * jax.random.normal(ks[5], (hid_ch,), jnp.float32),
    }
    # Spatial trace: 16 --conv(3,s2)--> 7 --conv(3,s1)--> 5 --conv(3,s1)--> 3
    h = (img_hw - 3) // 2 + 1
    h = h - 2
    h = h - 2
    flat_dim = hid_ch * h * h
    scale = 1.0 / np.sqrt(flat_dim)
    raw["wp"] = scale * jax.random.normal(ks[6], (flat_dim, out_dim), jnp.float32)
    raw["bp"] = 0.01 * jax.random.normal(ks[7], (out_dim,), jnp.float32)
    raw["ln_g"] = jnp.ones((out_dim,), jnp.float32)
    raw["ln_b"] = jnp.zeros((out_dim,), jnp.float32)
    return raw, flat_dim, out_dim


def prepare_encoder_params(raw, img_hw=16, compute_dtype=jnp.bfloat16):
    """Fold the three convs into dense GEMM operands (done once per weight
    update).  MXU weight operands are stored in `compute_dtype` (bf16 default:
    full-rate MXU on v6e/v7x, half the resident VMEM); biases and LayerNorm
    params stay f32 so all VPU/EUP math is f32 (required on v5e)."""
    m1, bias1, hh, ww = _conv_as_dense(raw["w1"], raw["b1"], img_hw, img_hw, 2)
    m2, bias2, hh, ww = _conv_as_dense(raw["w2"], raw["b2"], hh, ww, 1)
    m3, bias3, hh, ww = _conv_as_dense(raw["w3"], raw["b3"], hh, ww, 1)
    wp = np.asarray(raw["wp"], np.float32)
    assert m3.shape[1] == wp.shape[0], (m3.shape, wp.shape)
    return {
        "w1": jnp.asarray(m1, compute_dtype), "b1": jnp.asarray(bias1, jnp.float32),
        "w2": jnp.asarray(m2, compute_dtype), "b2": jnp.asarray(bias2, jnp.float32),
        "w3": jnp.asarray(m3, compute_dtype), "b3": jnp.asarray(bias3, jnp.float32),
        "wp": jnp.asarray(wp, compute_dtype),
        "bp": jnp.asarray(np.asarray(raw["bp"], np.float32))[None, :],
        "ln_g": jnp.asarray(np.asarray(raw["ln_g"], np.float32))[None, :],
        "ln_b": jnp.asarray(np.asarray(raw["ln_b"], np.float32))[None, :],
    }


# ----------------------------------------------------------------------------
# Pure-JAX reference of the original PyTorch forward (for correctness check)
# ----------------------------------------------------------------------------
def reference_forward(raw, x):
    h = x
    for w, b, s in ((raw["w1"], raw["b1"], 2),
                    (raw["w2"], raw["b2"], 1),
                    (raw["w3"], raw["b3"], 1)):
        h = jax.lax.conv_general_dilated(
            h, w, window_strides=(s, s), padding="VALID",
            dimension_numbers=("NCHW", "OIHW", "NCHW"),
            precision=jax.lax.Precision.HIGHEST)
        h = jnp.maximum(h + b.reshape(1, -1, 1, 1), 0.0)
    h = h.reshape(h.shape[0], -1)
    y = jnp.dot(h, raw["wp"], precision=jax.lax.Precision.HIGHEST) + raw["bp"]
    mean = y.mean(-1, keepdims=True)
    var = ((y - mean) ** 2).mean(-1, keepdims=True)
    y = (y - mean) * jax.lax.rsqrt(var + 1e-5)
    return jnp.tanh(y * raw["ln_g"] + raw["ln_b"])


if __name__ == "__main__":
    key = jax.random.PRNGKey(0)
    k_param, k_x, k_x2 = jax.random.split(key, 3)

    B, C, HW = 2, 4, 16
    raw, flat_dim, out_dim = init_raw_params(k_param, in_ch=C, img_hw=HW)
    x = jax.random.normal(k_x, (B, C, HW, HW), jnp.float32)

    # 1) f32-MXU path, tiny batch (single grid step): verify vs pure-JAX reference.
    params_f32 = prepare_encoder_params(raw, img_hw=HW, compute_dtype=jnp.float32)
    out_f32 = jax.block_until_ready(single_view_encoder_forward(params_f32, x, detach=False))
    ref = jax.block_until_ready(reference_forward(raw, x))
    assert out_f32.shape == (B, out_dim), out_f32.shape
    max_err = float(jnp.max(jnp.abs(out_f32 - ref)))
    assert max_err < 5e-2, f"fused kernel mismatch vs reference (B=2): {max_err}"

    # 2) f32-MXU path, medium batch (>=2 grid steps, partial last block): verify.
    B2 = 24
    x2 = jax.random.normal(k_x2, (B2, C, HW, HW), jnp.float32)
    out2 = jax.block_until_ready(single_view_encoder_forward(params_f32, x2, detach=False))
    ref2 = jax.block_until_ready(reference_forward(raw, x2))
    assert out2.shape == (B2, out_dim), out2.shape
    max_err2 = float(jnp.max(jnp.abs(out2 - ref2)))
    assert max_err2 < 5e-2, f"fused kernel mismatch vs reference (B=24): {max_err2}"

    # 3) Default fast path: bf16 MXU weights, in-kernel x cast, f32 accumulation.
    params = prepare_encoder_params(raw, img_hw=HW, compute_dtype=jnp.bfloat16)
    out = jax.block_until_ready(single_view_encoder_forward(params, x, detach=False))
    assert out.shape == (B, out_dim), out.shape
    assert bool(jnp.all(jnp.isfinite(out)))
    print("KERNEL_OK")
</pallas_src>

<mosaic_0001>
module attributes {stable_mosaic.version = 11 : i64} {
  func.func @_encoder_fused_kernel(%arg0: i32, %arg1: memref<2x1024xf32, #tpu.memory_space<vmem>>, %arg2: memref<1024x784xf32, #tpu.memory_space<vmem>>, %arg3: memref<1x784xf32, #tpu.memory_space<vmem>>, %arg4: memref<784x400xf32, #tpu.memory_space<vmem>>, %arg5: memref<1x400xf32, #tpu.memory_space<vmem>>, %arg6: memref<400x144xf32, #tpu.memory_space<vmem>>, %arg7: memref<1x144xf32, #tpu.memory_space<vmem>>, %arg8: memref<144x32xf32, #tpu.memory_space<vmem>>, %arg9: memref<1x32xf32, #tpu.memory_space<vmem>>, %arg10: memref<1x32xf32, #tpu.memory_space<vmem>>, %arg11: memref<1x32xf32, #tpu.memory_space<vmem>>, %arg12: memref<2x32xf32, #tpu.memory_space<vmem>>) attributes {dimension_semantics = [#tpu.dimension_semantics<parallel>], iteration_bounds = array<i64: 1>, scalar_prefetch = 0 : i64, scratch_operands = 0 : i64, tpu.core_type = #tpu.core_type<tc>, window_params = [{transform_indices = @transform_0, window_bounds = array<i64: 2, 1024>}, {pipeline_mode = #tpu.pipeline_mode<synchronous>, transform_indices = @transform_1, window_bounds = array<i64: 1024, 784>}, {pipeline_mode = #tpu.pipeline_mode<synchronous>, transform_indices = @transform_2, window_bounds = array<i64: 1, 784>}, {pipeline_mode = #tpu.pipeline_mode<synchronous>, transform_indices = @transform_3, window_bounds = array<i64: 784, 400>}, {pipeline_mode = #tpu.pipeline_mode<synchronous>, transform_indices = @transform_4, window_bounds = array<i64: 1, 400>}, {pipeline_mode = #tpu.pipeline_mode<synchronous>, transform_indices = @transform_5, window_bounds = array<i64: 400, 144>}, {pipeline_mode = #tpu.pipeline_mode<synchronous>, transform_indices = @transform_6, window_bounds = array<i64: 1, 144>}, {pipeline_mode = #tpu.pipeline_mode<synchronous>, transform_indices = @transform_7, window_bounds = array<i64: 144, 32>}, {pipeline_mode = #tpu.pipeline_mode<synchronous>, transform_indices = @transform_8, window_bounds = array<i64: 1, 32>}, {pipeline_mode = #tpu.pipeline_mode<synchronous>, transform_indices = @transform_9, window_bounds = array<i64: 1, 32>}, {pipeline_mode = #tpu.pipeline_mode<synchronous>, transform_indices = @transform_10, window_bounds = array<i64: 1, 32>}, {transform_indices = @transform_11, window_bounds = array<i64: 2, 32>}]} {
    %c0 = arith.constant 0 : index
    %c0_0 = arith.constant 0 : index
    %0 = vector.load %arg1[%c0, %c0_0] : memref<2x1024xf32, #tpu.memory_space<vmem>>, vector<2x1024xf32>
    %c0_1 = arith.constant 0 : index
    %c0_2 = arith.constant 0 : index
    %1 = vector.load %arg2[%c0_1, %c0_2] : memref<1024x784xf32, #tpu.memory_space<vmem>>, vector<1024x784xf32>
    %cst = arith.constant dense<0.000000e+00> : vector<2x784xf32>
    %2 = tpu.matmul %0, %1, %cst {dimension_numbers = #tpu.dot_dimension_numbers<[1], [0], [0], [1], [0, 0, 1, 1], [], []>} : vector<2x1024xf32>, vector<1024x784xf32>, vector<2x784xf32> -> vector<2x784xf32>
    %c0_3 = arith.constant 0 : index
    %c0_4 = arith.constant 0 : index
    %3 = vector.load %arg3[%c0_3, %c0_4] : memref<1x784xf32, #tpu.memory_space<vmem>>, vector<1x784xf32>
    %4 = vector.broadcast %3 : vector<1x784xf32> to vector<2x784xf32>
    %5 = arith.addf %2, %4 : vector<2x784xf32>
    %cst_5 = arith.constant 0.000000e+00 : f32
    %6 = vector.broadcast %cst_5 : f32 to vector<2x784xf32>
    %7 = arith.maximumf %5, %6 : vector<2x784xf32>
    %c0_6 = arith.constant 0 : index
    %c0_7 = arith.constant 0 : index
    %8 = vector.load %arg4[%c0_6, %c0_7] : memref<784x400xf32, #tpu.memory_space<vmem>>, vector<784x400xf32>
    %cst_8 = arith.constant dense<0.000000e+00> : vector<2x400xf32>
    %9 = tpu.matmul %7, %8, %cst_8 {dimension_numbers = #tpu.dot_dimension_numbers<[1], [0], [0], [1], [0, 0, 1, 1], [], []>} : vector<2x784xf32>, vector<784x400xf32>, vector<2x400xf32> -> vector<2x400xf32>
    %c0_9 = arith.constant 0 : index
    %c0_10 = arith.constant 0 : index
    %10 = vector.load %arg5[%c0_9, %c0_10] : memref<1x400xf32, #tpu.memory_space<vmem>>, vector<1x400xf32>
    %11 = vector.broadcast %10 : vector<1x400xf32> to vector<2x400xf32>
    %12 = arith.addf %9, %11 : vector<2x400xf32>
    %cst_11 = arith.constant 0.000000e+00 : f32
    %13 = vector.broadcast %cst_11 : f32 to vector<2x400xf32>
    %14 = arith.maximumf %12, %13 : vector<2x400xf32>
    %c0_12 = arith.constant 0 : index
    %c0_13 = arith.constant 0 : index
    %15 = vector.load %arg6[%c0_12, %c0_13] : memref<400x144xf32, #tpu.memory_space<vmem>>, vector<400x144xf32>
    %cst_14 = arith.constant dense<0.000000e+00> : vector<2x144xf32>
    %16 = tpu.matmul %14, %15, %cst_14 {dimension_numbers = #tpu.dot_dimension_numbers<[1], [0], [0], [1], [0, 0, 1, 1], [], []>} : vector<2x400xf32>, vector<400x144xf32>, vector<2x144xf32> -> vector<2x144xf32>
    %c0_15 = arith.constant 0 : index
    %c0_16 = arith.constant 0 : index
    %17 = vector.load %arg7[%c0_15, %c0_16] : memref<1x144xf32, #tpu.memory_space<vmem>>, vector<1x144xf32>
    %18 = vector.broadcast %17 : vector<1x144xf32> to vector<2x144xf32>
    %19 = arith.addf %16, %18 : vector<2x144xf32>
    %cst_17 = arith.constant 0.000000e+00 : f32
    %20 = vector.broadcast %cst_17 : f32 to vector<2x144xf32>
    %21 = arith.maximumf %19, %20 : vector<2x144xf32>
    %c0_18 = arith.constant 0 : index
    %c0_19 = arith.constant 0 : index
    %22 = vector.load %arg8[%c0_18, %c0_19] : memref<144x32xf32, #tpu.memory_space<vmem>>, vector<144x32xf32>
    %cst_20 = arith.constant dense<0.000000e+00> : vector<2x32xf32>
    %23 = tpu.matmul %21, %22, %cst_20 {dimension_numbers = #tpu.dot_dimension_numbers<[1], [0], [0], [1], [0, 0, 1, 1], [], []>} : vector<2x144xf32>, vector<144x32xf32>, vector<2x32xf32> -> vector<2x32xf32>
    %c0_21 = arith.constant 0 : index
    %c0_22 = arith.constant 0 : index
    %24 = vector.load %arg9[%c0_21, %c0_22] : memref<1x32xf32, #tpu.memory_space<vmem>>, vector<1x32xf32>
    %25 = vector.broadcast %24 : vector<1x32xf32> to vector<2x32xf32>
    %26 = arith.addf %23, %25 : vector<2x32xf32>
    %cst_23 = arith.constant dense<0.000000e+00> : vector<2xf32>
    %27 = vector.multi_reduction <add>, %26, %cst_23 [1] : vector<2x32xf32> to vector<2xf32>
    %28 = vector.shape_cast %27 : vector<2xf32> to vector<2x1xf32>
    %cst_24 = arith.constant 3.200000e+01 : f32
    %29 = vector.broadcast %cst_24 : f32 to vector<2x1xf32>
    %30 = arith.divf %28, %29 : vector<2x1xf32>
    %31 = vector.broadcast %30 : vector<2x1xf32> to vector<2x32xf32>
    %32 = arith.subf %26, %31 : vector<2x32xf32>
    %33 = arith.mulf %32, %32 : vector<2x32xf32>
    %cst_25 = arith.constant dense<0.000000e+00> : vector<2xf32>
    %34 = vector.multi_reduction <add>, %33, %cst_25 [1] : vector<2x32xf32> to vector<2xf32>
    %35 = vector.shape_cast %34 : vector<2xf32> to vector<2x1xf32>
    %cst_26 = arith.constant 3.200000e+01 : f32
    %36 = vector.broadcast %cst_26 : f32 to vector<2x1xf32>
    %37 = arith.divf %35, %36 : vector<2x1xf32>
    %38 = vector.broadcast %30 : vector<2x1xf32> to vector<2x32xf32>
    %39 = arith.subf %26, %38 : vector<2x32xf32>
    %cst_27 = arith.constant 9.99999974E-6 : f32
    %40 = vector.broadcast %cst_27 : f32 to vector<2x1xf32>
    %41 = arith.addf %37, %40 : vector<2x1xf32>
    %42 = math.rsqrt %41 : vector<2x1xf32>
    %43 = vector.broadcast %42 : vector<2x1xf32> to vector<2x32xf32>
    %44 = arith.mulf %39, %43 : vector<2x32xf32>
    %c0_28 = arith.constant 0 : index
    %c0_29 = arith.constant 0 : index
    %45 = vector.load %arg10[%c0_28, %c0_29] : memref<1x32xf32, #tpu.memory_space<vmem>>, vector<1x32xf32>
    %46 = vector.broadcast %45 : vector<1x32xf32> to vector<2x32xf32>
    %47 = arith.mulf %44, %46 : vector<2x32xf32>
    %c0_30 = arith.constant 0 : index
    %c0_31 = arith.constant 0 : index
    %48 = vector.load %arg11[%c0_30, %c0_31] : memref<1x32xf32, #tpu.memory_space<vmem>>, vector<1x32xf32>
    %49 = vector.broadcast %48 : vector<1x32xf32> to vector<2x32xf32>
    %50 = arith.addf %47, %49 : vector<2x32xf32>
    %51 = math.tanh %50 : vector<2x32xf32>
    %c0_32 = arith.constant 0 : index
    %c0_33 = arith.constant 0 : index
    %52 = vector.load %arg12[%c0_32, %c0_33] : memref<2x32xf32, #tpu.memory_space<vmem>>, vector<2x32xf32>
    tpu.vector_store %arg12[%c0_32, %c0_33], %51 {strides = array<i32>} : memref<2x32xf32, #tpu.memory_space<vmem>>, vector<2x32xf32>,
    return
  }
  func.func @transform_0(%arg0: i32) -> (i32, i32) {
    %c0_i32 = arith.constant 0 : i32
    %c0_i32_0 = arith.constant 0 : i32
    return %arg0, %c0_i32 : i32, i32
  }
  func.func @transform_1(%arg0: i32) -> (i32, i32) {
    %c0_i32 = arith.constant 0 : i32
    %c0_i32_0 = arith.constant 0 : i32
    %c0_i32_1 = arith.constant 0 : i32
    return %c0_i32, %c0_i32_0 : i32, i32
  }
  func.func @transform_2(%arg0: i32) -> (i32, i32) {
    %c0_i32 = arith.constant 0 : i32
    %c0_i32_0 = arith.constant 0 : i32
    %c0_i32_1 = arith.constant 0 : i32
    return %c0_i32, %c0_i32_0 : i32, i32
  }
  func.func @transform_3(%arg0: i32) -> (i32, i32) {
    %c0_i32 = arith.constant 0 : i32
    %c0_i32_0 = arith.constant 0 : i32
    %c0_i32_1 = arith.constant 0 : i32
    return %c0_i32, %c0_i32_0 : i32, i32
  }
  func.func @transform_4(%arg0: i32) -> (i32, i32) {
    %c0_i32 = arith.constant 0 : i32
    %c0_i32_0 = arith.constant 0 : i32
    %c0_i32_1 = arith.constant 0 : i32
    return %c0_i32, %c0_i32_0 : i32, i32
  }
  func.func @transform_5(%arg0: i32) -> (i32, i32) {
    %c0_i32 = arith.constant 0 : i32
    %c0_i32_0 = arith.constant 0 : i32
    %c0_i32_1 = arith.constant 0 : i32
    return %c0_i32, %c0_i32_0 : i32, i32
  }
  func.func @transform_6(%arg0: i32) -> (i32, i32) {
    %c0_i32 = arith.constant 0 : i32
    %c0_i32_0 = arith.constant 0 : i32
    %c0_i32_1 = arith.constant 0 : i32
    return %c0_i32, %c0_i32_0 : i32, i32
  }
  func.func @transform_7(%arg0: i32) -> (i32, i32) {
    %c0_i32 = arith.constant 0 : i32
    %c0_i32_0 = arith.constant 0 : i32
    %c0_i32_1 = arith.constant 0 : i32
    return %c0_i32, %c0_i32_0 : i32, i32
  }
  func.func @transform_8(%arg0: i32) -> (i32, i32) {
    %c0_i32 = arith.constant 0 : i32
    %c0_i32_0 = arith.constant 0 : i32
    %c0_i32_1 = arith.constant 0 : i32
    return %c0_i32, %c0_i32_0 : i32, i32
  }
  func.func @transform_9(%arg0: i32) -> (i32, i32) {
    %c0_i32 = arith.constant 0 : i32
    %c0_i32_0 = arith.constant 0 : i32
    %c0_i32_1 = arith.constant 0 : i32
    return %c0_i32, %c0_i32_0 : i32, i32
  }
  func.func @transform_10(%arg0: i32) -> (i32, i32) {
    %c0_i32 = arith.constant 0 : i32
    %c0_i32_0 = arith.constant 0 : i32
    %c0_i32_1 = arith.constant 0 : i32
    return %c0_i32, %c0_i32_0 : i32, i32
  }
  func.func @transform_11(%arg0: i32) -> (i32, i32) {
    %c0_i32 = arith.constant 0 : i32
    %c0_i32_0 = arith.constant 0 : i32
    return %arg0, %c0_i32 : i32, i32
  }
}

</mosaic_0001>

<llo_original>
// kernel: single_view_encoder_forward.1
$region0: #{single_view_encoder_forward.1}
  #allocation0 [shape = 'u32[]', space=smem, size = 0x4, offset = 0x4, fixed_abs, tag = 'smem constant byte address 0x4 - core index']
  #allocation1 [shape = 'u32[144,128]{1,0:T(1,128)}', space=vmem, size = 0x12000, scoped, tag = 'internal scratch']
  %s0 = inlined_call_operand.vmem [shape: f32[2,1024], index: 0, kind: input, shape index: {}]
  %s1 = inlined_call_operand.vmem [shape: f32[1024,784], index: 1, kind: input, shape index: {}]
  %s2 = inlined_call_operand.vmem [shape: f32[1,784], index: 2, kind: input, shape index: {}]
  %s3 = inlined_call_operand.vmem [shape: f32[784,400], index: 3, kind: input, shape index: {}]
  %s4 = inlined_call_operand.vmem [shape: f32[1,400], index: 4, kind: input, shape index: {}]
  %s5 = inlined_call_operand.vmem [shape: f32[400,144], index: 5, kind: input, shape index: {}]
  %s6 = inlined_call_operand.vmem [shape: f32[1,144], index: 6, kind: input, shape index: {}]
  %s7 = inlined_call_operand.vmem [shape: f32[144,32], index: 7, kind: input, shape index: {}]
  %s8 = inlined_call_operand.vmem [shape: f32[1,32], index: 8, kind: input, shape index: {}]
  %s9 = inlined_call_operand.vmem [shape: f32[1,32], index: 9, kind: input, shape index: {}]
  %s10 = inlined_call_operand.vmem [shape: f32[1,32], index: 10, kind: input, shape index: {}]
  %s11 = inlined_call_operand.hbm [shape: f32[2,32], index: 11, kind: output, shape index: {}]
  %s12 = sld [smem:[#allocation0]]
  $region54: #{single_view_encoder_forward.1} parent=0
    _
  %s14 = ssub.s32 1, %s12
  %s15 = scalar_select 0, %s14, %s12
  $region1: #{single_view_encoder_forward.1} parent=0
    #allocation2 [shape = 'u8[1024]{0}', space=vmem, size = 0x400, scoped, tag = 'output window, operand 0, single buffered']
    #allocation3 [shape = 's32[1]{0}', space=sflag, size = 0x4, scoped, tag = 'scoped memory for single_view_encoder_forward.1']
    %16 = vsyncpa [#allocation3], 0
    // Predicated region
    $region2: #{single_view_encoder_forward.1} parent=1 // pred_check
      _
    $region3: #{single_view_encoder_forward.1} parent=1 // pred_check_branch
      %18 = sbr.rel (0) target = $region5
    $region4: #{single_view_encoder_forward.1} parent=1 // pred_region
      _
    $region5: #{single_view_encoder_forward.1} parent=1 // pred_fallthru
      _
    // Predicated region
    $region6: #{single_view_encoder_forward.1} parent=1 // pred_check
      _
    $region7: #{single_view_encoder_forward.1} parent=1 // pred_check_branch
      %20 = sbr.rel (0) target = $region9
    $region8: #{single_view_encoder_forward.1} parent=1 // pred_region
      _
    $region9: #{single_view_encoder_forward.1} parent=1 // pred_fallthru
      _
    // Predicated region
    $region10: #{single_view_encoder_forward.1} parent=1 // pred_check
      _
    $region11: #{single_view_encoder_forward.1} parent=1 // pred_check_branch
      %22 = sbr.rel (0) target = $region13
    $region12: #{single_view_encoder_forward.1} parent=1 // pred_region
      _
    $region13: #{single_view_encoder_forward.1} parent=1 // pred_fallthru
      _
    // Predicated region
    $region14: #{single_view_encoder_forward.1} parent=1 // pred_check
      _
    $region15: #{single_view_encoder_forward.1} parent=1 // pred_check_branch
      %24 = sbr.rel (0) target = $region17
    $region16: #{single_view_encoder_forward.1} parent=1 // pred_region
      _
    $region17: #{single_view_encoder_forward.1} parent=1 // pred_fallthru
      _
    // Predicated region
    $region18: #{single_view_encoder_forward.1} parent=1 // pred_check
      _
    $region19: #{single_view_encoder_forward.1} parent=1 // pred_check_branch
      %26 = sbr.rel (0) target = $region21
    $region20: #{single_view_encoder_forward.1} parent=1 // pred_region
      _
    $region21: #{single_view_encoder_forward.1} parent=1 // pred_fallthru
      _
    // Predicated region
    $region22: #{single_view_encoder_forward.1} parent=1 // pred_check
      _
    $region23: #{single_view_encoder_forward.1} parent=1 // pred_check_branch
      %28 = sbr.rel (0) target = $region25
    $region24: #{single_view_encoder_forward.1} parent=1 // pred_region
      _
    $region25: #{single_view_encoder_forward.1} parent=1 // pred_fallthru
      _
    // Predicated region
    $region26: #{single_view_encoder_forward.1} parent=1 // pred_check
      _
    $region27: #{single_view_encoder_forward.1} parent=1 // pred_check_branch
      %30 = sbr.rel (0) target = $region29
    $region28: #{single_view_encoder_forward.1} parent=1 // pred_region
      _
    $region29: #{single_view_encoder_forward.1} parent=1 // pred_fallthru
      _
    // Predicated region
    $region30: #{single_view_encoder_forward.1} parent=1 // pred_check
      _
    $region31: #{single_view_encoder_forward.1} parent=1 // pred_check_branch
      %32 = sbr.rel (0) target = $region33
    $region32: #{single_view_encoder_forward.1} parent=1 // pred_region
      _
    $region33: #{single_view_encoder_forward.1} parent=1 // pred_fallthru
      _
    // Predicated region
    $region34: #{single_view_encoder_forward.1} parent=1 // pred_check
      _
    $region35: #{single_view_encoder_forward.1} parent=1 // pred_check_branch
      %34 = sbr.rel (0) target = $region37
    $region36: #{single_view_encoder_forward.1} parent=1 // pred_region
      _
    $region37: #{single_view_encoder_forward.1} parent=1 // pred_fallthru
      _
    // Predicated region
    $region38: #{single_view_encoder_forward.1} parent=1 // pred_check
      _
    $region39: #{single_view_encoder_forward.1} parent=1 // pred_check_branch
      %36 = sbr.rel (0) target = $region41
    $region40: #{single_view_encoder_forward.1} parent=1 // pred_region
      _
    $region41: #{single_view_encoder_forward.1} parent=1 // pred_fallthru
      _
    // Predicated region
    $region42: #{single_view_encoder_forward.1} parent=1 // pred_check
      _
    $region43: #{single_view_encoder_forward.1} parent=1 // pred_check_branch
      %38 = sbr.rel (0) target = $region45
    $region44: #{single_view_encoder_forward.1} parent=1 // pred_region
      _
    $region45: #{single_view_encoder_forward.1} parent=1 // pred_fallthru
      _
    %v39 = vld [vmem:[%s0] sm:$0xff]
    %v40 = vld [vmem:[%s0 + $0x8] sm:$0xff]
    %v41 = vld [vmem:[%s1] sm:$0xff]
    %v42 = vld [vmem:[%s1 + $0x8] sm:$0xff]
    %v43 = vld [vmem:[%s1 + $0x10] sm:$0xff]
    %v44 = vld [vmem:[%s1 + $0x18] sm:$0xff]
    %v45 = vld [vmem:[%s1 + $0x20] sm:$0xff]
    %v46 = vld [vmem:[%s1 + $0x28] sm:$0xff]
    %v47 = vld [vmem:[%s1 + $0x30] sm:$0xff]
    %v48 = vld [vmem:[%s1 + $0x38] sm:$0xff]
    %v49 = vld [vmem:[%s1 + $0x40] sm:$0xff]
    %v50 = vld [vmem:[%s1 + $0x48] sm:$0xff]
    %v51 = vld [vmem:[%s1 + $0x50] sm:$0xff]
    %v52 = vld [vmem:[%s1 + $0x58] sm:$0xff]
    %v53 = vld [vmem:[%s1 + $0x60] sm:$0xff]
    %v54 = vld [vmem:[%s1 + $0x68] sm:$0xff]
    %v55 = vld [vmem:[%s1 + $0x70] sm:$0xff]
    %v56 = vld [vmem:[%s1 + $0x78] sm:$0xff]
    %v57 = vld [vmem:[%s1 + $0x80] sm:$0xff]
    %v58 = vld [vmem:[%s1 + $0x88] sm:$0xff]
    %v59 = vld [vmem:[%s1 + $0x90] sm:$0xff]
    %v60 = vld [vmem:[%s1 + $0x98] sm:$0xff]
    %v61 = vld [vmem:[%s1 + $0xa0] sm:$0xff]
    %v62 = vld [vmem:[%s1 + $0xa8] sm:$0xff]
    %v63 = vld [vmem:[%s1 + $0xb0] sm:$0xff]
    %v64 = vld [vmem:[%s1 + $0xb8] sm:$0xff]
    %v65 = vld [vmem:[%s1 + $0xc0] sm:$0xff]
    %v66 = vld [vmem:[%s1 + $0xc8] sm:$0xff]
    %v67 = vld [vmem:[%s1 + $0xd0] sm:$0xff]
    %v68 = vld [vmem:[%s1 + $0xd8] sm:$0xff]
    %v69 = vld [vmem:[%s1 + $0xe0] sm:$0xff]
    %v70 = vld [vmem:[%s1 + $0xe8] sm:$0xff]
    %v71 = vld [vmem:[%s1 + $0xf0] sm:$0xff]
    %v72 = vld [vmem:[%s1 + $0xf8] sm:$0xff]
    %v73 = vld [vmem:[%s1 + $0x100] sm:$0xff]
    %v74 = vld [vmem:[%s1 + $0x108] sm:$0xff]
    %v75 = vld [vmem:[%s1 + $0x110] sm:$0xff]
    %v76 = vld [vmem:[%s1 + $0x118] sm:$0xff]
    %v77 = vld [vmem:[%s1 + $0x120] sm:$0xff]
    %v78 = vld [vmem:[%s1 + $0x128] sm:$0xff]
    %v79 = vld [vmem:[%s1 + $0x130] sm:$0xff]
    %v80 = vld [vmem:[%s1 + $0x138] sm:$0xff]
    %v81 = vld [vmem:[%s1 + $0x140] sm:$0xff]
    %v82 = vld [vmem:[%s1 + $0x148] sm:$0xff]
    %v83 = vld [vmem:[%s1 + $0x150] sm:$0xff]
    %v84 = vld [vmem:[%s1 + $0x158] sm:$0xff]
    %v85 = vld [vmem:[%s1 + $0x160] sm:$0xff]
    %v86 = vld [vmem:[%s1 + $0x168] sm:$0xff]
    %v87 = vld [vmem:[%s1 + $0x170] sm:$0xff]
    %v88 = vld [vmem:[%s1 + $0x178] sm:$0xff]
    %v89 = vld [vmem:[%s1 + $0x180] sm:$0xff]
    %v90 = vld [vmem:[%s1 + $0x188] sm:$0xff]
    %v91 = vld [vmem:[%s1 + $0x190] sm:$0xff]
    %v92 = vld [vmem:[%s1 + $0x198] sm:$0xff]
    %v93 = vld [vmem:[%s1 + $0x1a0] sm:$0xff]
    %v94 = vld [vmem:[%s1 + $0x1a8] sm:$0xff]
    %v95 = vld [vmem:[%s1 + $0x1b0] sm:$0xff]
    %v96 = vld [vmem:[%s1 + $0x1b8] sm:$0xff]
    %v97 = vld [vmem:[%s1 + $0x1c0] sm:$0xff]
    %v98 = vld [vmem:[%s1 + $0x1c8] sm:$0xff]
    %v99 = vld [vmem:[%s1 + $0x1d0] sm:$0xff]
    %v100 = vld [vmem:[%s1 + $0x1d8] sm:$0xff]
    %v101 = vld [vmem:[%s1 + $0x1e0] sm:$0xff]
    %v102 = vld [vmem:[%s1 + $0x1e8] sm:$0xff]
    %v103 = vld [vmem:[%s1 + $0x1f0] sm:$0xff]
    %v104 = vld [vmem:[%s1 + $0x1f8] sm:$0xff]
    %v105 = vld [vmem:[%s1 + $0x200] sm:$0xff]
    %v106 = vld [vmem:[%s1 + $0x208] sm:$0xff]
    %v107 = vld [vmem:[%s1 + $0x210] sm:$0xff]
    %v108 = vld [vmem:[%s1 + $0x218] sm:$0xff]
    %v109 = vld [vmem:[%s1 + $0x220] sm:$0xff]
    %v110 = vld [vmem:[%s1 + $0x228] sm:$0xff]
    %v111 = vld [vmem:[%s1 + $0x230] sm:$0xff]
    %v112 = vld [vmem:[%s1 + $0x238] sm:$0xff]
    %v113 = vld [vmem:[%s1 + $0x240] sm:$0xff]
    %v114 = vld [vmem:[%s1 + $0x248] sm:$0xff]
    %v115 = vld [vmem:[%s1 + $0x250] sm:$0xff]
    %v116 = vld [vmem:[%s1 + $0x258] sm:$0xff]
    %v117 = vld [vmem:[%s1 + $0x260] sm:$0xff]
    %v118 = vld [vmem:[%s1 + $0x268] sm:$0xff]
    %v119 = vld [vmem:[%s1 + $0x270] sm:$0xff]
    %v120 = vld [vmem:[%s1 + $0x278] sm:$0xff]
    %v121 = vld [vmem:[%s1 + $0x280] sm:$0xff]
    %v122 = vld [vmem:[%s1 + $0x288] sm:$0xff]
    %v123 = vld [vmem:[%s1 + $0x290] sm:$0xff]
    %v124 = vld [vmem:[%s1 + $0x298] sm:$0xff]
    %v125 = vld [vmem:[%s1 + $0x2a0] sm:$0xff]
    %v126 = vld [vmem:[%s1 + $0x2a8] sm:$0xff]
    %v127 = vld [vmem:[%s1 + $0x2b0] sm:$0xff]
    %v128 = vld [vmem:[%s1 + $0x2b8] sm:$0xff]
    %v129 = vld [vmem:[%s1 + $0x2c0] sm:$0xff]
    %v130 = vld [vmem:[%s1 + $0x2c8] sm:$0xff]
    %v131 = vld [vmem:[%s1 + $0x2d0] sm:$0xff]
    %v132 = vld [vmem:[%s1 + $0x2d8] sm:$0xff]
    %v133 = vld [vmem:[%s1 + $0x2e0] sm:$0xff]
    %v134 = vld [vmem:[%s1 + $0x2e8] sm:$0xff]
    %v135 = vld [vmem:[%s1 + $0x2f0] sm:$0xff]
    %v136 = vld [vmem:[%s1 + $0x2f8] sm:$0xff]
    %v137 = vld [vmem:[%s1 + $0x300] sm:$0xff]
    %v138 = vld [vmem:[%s1 + $0x308] sm:$0xff]
    %v139 = vld [vmem:[%s1 + $0x310] sm:$0xff]
    %v140 = vld [vmem:[%s1 + $0x318] sm:$0xff]
    %v141 = vld [vmem:[%s1 + $0x320] sm:$0xff]
    %v142 = vld [vmem:[%s1 + $0x328] sm:$0xff]
    %v143 = vld [vmem:[%s1 + $0x330] sm:$0xff]
    %v144 = vld [vmem:[%s1 + $0x338] sm:$0xff]
    %v145 = vld [vmem:[%s1 + $0x340] sm:$0xff]
    %v146 = vld [vmem:[%s1 + $0x348] sm:$0xff]
    %v147 = vld [vmem:[%s1 + $0x350] sm:$0xff]
    %v148 = vld [vmem:[%s1 + $0x358] sm:$0xff]
    %v149 = vld [vmem:[%s1 + $0x360] sm:$0xff]
    %v150 = vld [vmem:[%s1 + $0x368] sm:$0xff]
    %v151 = vld [vmem:[%s1 + $0x370] sm:$0xff]
    %v152 = vld [vmem:[%s1 + $0x378] sm:$0xff]
    %v153 = vld [vmem:[%s1 + $0x380] sm:$0xff]
    %v154 = vld [vmem:[%s1 + $0x388] sm:$0xff]
    %v155 = vld [vmem:[%s1 + $0x390] sm:$0xff]
    %v156 = vld [vmem:[%s1 + $0x398] sm:$0xff]
    %v157 = vld [vmem:[%s1 + $0x3a0] sm:$0xff]
    %v158 = vld [vmem:[%s1 + $0x3a8] sm:$0xff]
    %v159 = vld [vmem:[%s1 + $0x3b0] sm:$0xff]
    %v160 = vld [vmem:[%s1 + $0x3b8] sm:$0xff]
    %v161 = vld [vmem:[%s1 + $0x3c0] sm:$0xff]
    %v162 = vld [vmem:[%s1 + $0x3c8] sm:$0xff]
    %v163 = vld [vmem:[%s1 + $0x3d0] sm:$0xff]
    %v164 = vld [vmem:[%s1 + $0x3d8] sm:$0xff]
    %v165 = vld [vmem:[%s1 + $0x3e0] sm:$0xff]
    %v166 = vld [vmem:[%s1 + $0x3e8] sm:$0xff]
    %v167 = vld [vmem:[%s1 + $0x3f0] sm:$0xff]
    %v168 = vld [vmem:[%s1 + $0x3f8] sm:$0xff]
    %v169 = vld [vmem:[%s1 + $0x400] sm:$0xff]
    %v170 = vld [vmem:[%s1 + $0x408] sm:$0xff]
    %v171 = vld [vmem:[%s1 + $0x410] sm:$0xff]
    %v172 = vld [vmem:[%s1 + $0x418] sm:$0xff]
    %v173 = vld [vmem:[%s1 + $0x420] sm:$0xff]
    %v174 = vld [vmem:[%s1 + $0x428] sm:$0xff]
    %v175 = vld [vmem:[%s1 + $0x430] sm:$0xff]
    %v176 = vld [vmem:[%s1 + $0x438] sm:$0xff]
    %v177 = vld [vmem:[%s1 + $0x440] sm:$0xff]
    %v178 = vld [vmem:[%s1 + $0x448] sm:$0xff]
    %v179 = vld [vmem:[%s1 + $0x450] sm:$0xff]
    %v180 = vld [vmem:[%s1 + $0x458] sm:$0xff]
    %v181 = vld [vmem:[%s1 + $0x460] sm:$0xff]
    %v182 = vld [vmem:[%s1 + $0x468] sm:$0xff]
    %v183 = vld [vmem:[%s1 + $0x470] sm:$0xff]
    %v184 = vld [vmem:[%s1 + $0x478] sm:$0xff]
    %v185 = vld [vmem:[%s1 + $0x480] sm:$0xff]
    %v186 = vld [vmem:[%s1 + $0x488] sm:$0xff]
    %v187 = vld [vmem:[%s1 + $0x490] sm:$0xff]
    %v188 = vld [vmem:[%s1 + $0x498] sm:$0xff]
    %v189 = vld [vmem:[%s1 + $0x4a0] sm:$0xff]
    %v190 = vld [vmem:[%s1 + $0x4a8] sm:$0xff]
    %v191 = vld [vmem:[%s1 + $0x4b0] sm:$0xff]
    %v192 = vld [vmem:[%s1 + $0x4b8] sm:$0xff]
    %v193 = vld [vmem:[%s1 + $0x4c0] sm:$0xff]
    %v194 = vld [vmem:[%s1 + $0x4c8] sm:$0xff]
    %v195 = vld [vmem:[%s1 + $0x4d0] sm:$0xff]
    %v196 = vld [vmem:[%s1 + $0x4d8] sm:$0xff]
    %v197 = vld [vmem:[%s1 + $0x4e0] sm:$0xff]
    %v198 = vld [vmem:[%s1 + $0x4e8] sm:$0xff]
    %v199 = vld [vmem:[%s1 + $0x4f0] sm:$0xff]
    %v200 = vld [vmem:[%s1 + $0x4f8] sm:$0xff]
    %v201 = vld [vmem:[%s1 + $0x500] sm:$0xff]
    %v202 = vld [vmem:[%s1 + $0x508] sm:$0xff]
    %v203 = vld [vmem:[%s1 + $0x510] sm:$0xff]
    %v204 = vld [vmem:[%s1 + $0x518] sm:$0xff]
    %v205 = vld [vmem:[%s1 + $0x520] sm:$0xff]
    %v206 = vld [vmem:[%s1 + $0x528] sm:$0xff]
    %v207 = vld [vmem:[%s1 + $0x530] sm:$0xff]
    %v208 = vld [vmem:[%s1 + $0x538] sm:$0xff]
    %v209 = vld [vmem:[%s1 + $0x540] sm:$0xff]
    %v210 = vld [vmem:[%s1 + $0x548] sm:$0xff]
    %v211 = vld [vmem:[%s1 + $0x550] sm:$0xff]
    %v212 = vld [vmem:[%s1 + $0x558] sm:$0xff]
    %v213 = vld [vmem:[%s1 + $0x560] sm:$0xff]
    %v214 = vld [vmem:[%s1 + $0x568] sm:$0xff]
    %v215 = vld [vmem:[%s1 + $0x570] sm:$0xff]
    %v216 = vld [vmem:[%s1 + $0x578] sm:$0xff]
    %v217 = vld [vmem:[%s1 + $0x580] sm:$0xff]
    %v218 = vld [vmem:[%s1 + $0x588] sm:$0xff]
    %v219 = vld [vmem:[%s1 + $0x590] sm:$0xff]
    %v220 = vld [vmem:[%s1 + $0x598] sm:$0xff]
    %v221 = vld [vmem:[%s1 + $0x5a0] sm:$0xff]
    %v222 = vld [vmem:[%s1 + $0x5a8] sm:$0xff]
    %v223 = vld [vmem:[%s1 + $0x5b0] sm:$0xff]
    %v224 = vld [vmem:[%s1 + $0x5b8] sm:$0xff]
    %v225 = vld [vmem:[%s1 + $0x5c0] sm:$0xff]
    %v226 = vld [vmem:[%s1 + $0x5c8] sm:$0xff]
    %v227 = vld [vmem:[%s1 + $0x5d0] sm:$0xff]
    %v228 = vld [vmem:[%s1 + $0x5d8] sm:$0xff]
    %v229 = vld [vmem:[%s1 + $0x5e0] sm:$0xff]
    %v230 = vld [vmem:[%s1 + $0x5e8] sm:$0xff]
    %v231 = vld [vmem:[%s1 + $0x5f0] sm:$0xff]
    %v232 = vld [vmem:[%s1 + $0x5f8] sm:$0xff]
    %v233 = vld [vmem:[%s1 + $0x600] sm:$0xff]
    %v234 = vld [vmem:[%s1 + $0x608] sm:$0xff]
    %v235 = vld [vmem:[%s1 + $0x610] sm:$0xff]
    %v236 = vld [vmem:[%s1 + $0x618] sm:$0xff]
    %v237 = vld [vmem:[%s1 + $0x620] sm:$0xff]
    %v238 = vld [vmem:[%s1 + $0x628] sm:$0xff]
    %v239 = vld [vmem:[%s1 + $0x630] sm:$0xff]
    %v240 = vld [vmem:[%s1 + $0x638] sm:$0xff]
    %v241 = vld [vmem:[%s1 + $0x640] sm:$0xff]
    %v242 = vld [vmem:[%s1 + $0x648] sm:$0xff]
    %v243 = vld [vmem:[%s1 + $0x650] sm:$0xff]
    %v244 = vld [vmem:[%s1 + $0x658] sm:$0xff]
    %v245 = vld [vmem:[%s1 + $0x660] sm:$0xff]
    %v246 = vld [vmem:[%s1 + $0x668] sm:$0xff]
    %v247 = vld [vmem:[%s1 + $0x670] sm:$0xff]
    %v248 = vld [vmem:[%s1 + $0x678] sm:$0xff]
    %v249 = vld [vmem:[%s1 + $0x680] sm:$0xff]
    %v250 = vld [vmem:[%s1 + $0x688] sm:$0xff]
    %v251 = vld [vmem:[%s1 + $0x690] sm:$0xff]
    %v252 = vld [vmem:[%s1 + $0x698] sm:$0xff]
    %v253 = vld [vmem:[%s1 + $0x6a0] sm:$0xff]
    %v254 = vld [vmem:[%s1 + $0x6a8] sm:$0xff]
    %v255 = vld [vmem:[%s1 + $0x6b0] sm:$0xff]
    %v256 = vld [vmem:[%s1 + $0x6b8] sm:$0xff]
    %v257 = vld [vmem:[%s1 + $0x6c0] sm:$0xff]
    %v258 = vld [vmem:[%s1 + $0x6c8] sm:$0xff]
    %v259 = vld [vmem:[%s1 + $0x6d0] sm:$0xff]
    %v260 = vld [vmem:[%s1 + $0x6d8] sm:$0xff]
    %v261 = vld [vmem:[%s1 + $0x6e0] sm:$0xff]
    %v262 = vld [vmem:[%s1 + $0x6e8] sm:$0xff]
    %v263 = vld [vmem:[%s1 + $0x6f0] sm:$0xff]
    %v264 = vld [vmem:[%s1 + $0x6f8] sm:$0xff]
    %v265 = vld [vmem:[%s1 + $0x700] sm:$0xff]
    %v266 = vld [vmem:[%s1 + $0x708] sm:$0xff]
    %v267 = vld [vmem:[%s1 + $0x710] sm:$0xff]
    %v268 = vld [vmem:[%s1 + $0x718] sm:$0xff]
    %v269 = vld [vmem:[%s1 + $0x720] sm:$0xff]
    %v270 = vld [vmem:[%s1 + $0x728] sm:$0xff]
    %v271 = vld [vmem:[%s1 + $0x730] sm:$0xff]
    %v272 = vld [vmem:[%s1 + $0x738] sm:$0xff]
    %v273 = vld [vmem:[%s1 + $0x740] sm:$0xff]
    %v274 = vld [vmem:[%s1 + $0x748] sm:$0xff]
    %v275 = vld [vmem:[%s1 + $0x750] sm:$0xff]
    %v276 = vld [vmem:[%s1 + $0x758] sm:$0xff]
    %v277 = vld [vmem:[%s1 + $0x760] sm:$0xff]
    %v278 = vld [vmem:[%s1 + $0x768] sm:$0xff]
    %v279 = vld [vmem:[%s1 + $0x770] sm:$0xff]
    %v280 = vld [vmem:[%s1 + $0x778] sm:$0xff]
    %v281 = vld [vmem:[%s1 + $0x780] sm:$0xff]
    %v282 = vld [vmem:[%s1 + $0x788] sm:$0xff]
    %v283 = vld [vmem:[%s1 + $0x790] sm:$0xff]
    %v284 = vld [vmem:[%s1 + $0x798] sm:$0xff]
    %v285 = vld [vmem:[%s1 + $0x7a0] sm:$0xff]
    %v286 = vld [vmem:[%s1 + $0x7a8] sm:$0xff]
    %v287 = vld [vmem:[%s1 + $0x7b0] sm:$0xff]
    %v288 = vld [vmem:[%s1 + $0x7b8] sm:$0xff]
    %v289 = vld [vmem:[%s1 + $0x7c0] sm:$0xff]
    %v290 = vld [vmem:[%s1 + $0x7c8] sm:$0xff]
    %v291 = vld [vmem:[%s1 + $0x7d0] sm:$0xff]
    %v292 = vld [vmem:[%s1 + $0x7d8] sm:$0xff]
    %v293 = vld [vmem:[%s1 + $0x7e0] sm:$0xff]
    %v294 = vld [vmem:[%s1 + $0x7e8] sm:$0xff]
    %v295 = vld [vmem:[%s1 + $0x7f0] sm:$0xff]
    %v296 = vld [vmem:[%s1 + $0x7f8] sm:$0xff]
    %v297 = vld [vmem:[%s1 + $0x800] sm:$0xff]
    %v298 = vld [vmem:[%s1 + $0x808] sm:$0xff]
    %v299 = vld [vmem:[%s1 + $0x810] sm:$0xff]
    %v300 = vld [vmem:[%s1 + $0x818] sm:$0xff]
    %v301 = vld [vmem:[%s1 + $0x820] sm:$0xff]
    %v302 = vld [vmem:[%s1 + $0x828] sm:$0xff]
    %v303 = vld [vmem:[%s1 + $0x830] sm:$0xff]
    %v304 = vld [vmem:[%s1 + $0x838] sm:$0xff]
    %v305 = vld [vmem:[%s1 + $0x840] sm:$0xff]
    %v306 = vld [vmem:[%s1 + $0x848] sm:$0xff]
    %v307 = vld [vmem:[%s1 + $0x850] sm:$0xff]
    %v308 = vld [vmem:[%s1 + $0x858] sm:$0xff]
    %v309 = vld [vmem:[%s1 + $0x860] sm:$0xff]
    %v310 = vld [vmem:[%s1 + $0x868] sm:$0xff]
    %v311 = vld [vmem:[%s1 + $0x870] sm:$0xff]
    %v312 = vld [vmem:[%s1 + $0x878] sm:$0xff]
    %v313 = vld [vmem:[%s1 + $0x880] sm:$0xff]
    %v314 = vld [vmem:[%s1 + $0x888] sm:$0xff]
    %v315 = vld [vmem:[%s1 + $0x890] sm:$0xff]
    %v316 = vld [vmem:[%s1 + $0x898] sm:$0xff]
    %v317 = vld [vmem:[%s1 + $0x8a0] sm:$0xff]
    %v318 = vld [vmem:[%s1 + $0x8a8] sm:$0xff]
    %v319 = vld [vmem:[%s1 + $0x8b0] sm:$0xff]
    %v320 = vld [vmem:[%s1 + $0x8b8] sm:$0xff]
    %v321 = vld [vmem:[%s1 + $0x8c0] sm:$0xff]
    %v322 = vld [vmem:[%s1 + $0x8c8] sm:$0xff]
    %v323 = vld [vmem:[%s1 + $0x8d0] sm:$0xff]
    %v324 = vld [vmem:[%s1 + $0x8d8] sm:$0xff]
    %v325 = vld [vmem:[%s1 + $0x8e0] sm:$0xff]
    %v326 = vld [vmem:[%s1 + $0x8e8] sm:$0xff]
    %v327 = vld [vmem:[%s1 + $0x8f0] sm:$0xff]
    %v328 = vld [vmem:[%s1 + $0x8f8] sm:$0xff]
    %v329 = vld [vmem:[%s1 + $0x900] sm:$0xff]
    %v330 = vld [vmem:[%s1 + $0x908] sm:$0xff]
    %v331 = vld [vmem:[%s1 + $0x910] sm:$0xff]
    %v332 = vld [vmem:[%s1 + $0x918] sm:$0xff]
    %v333 = vld [vmem:[%s1 + $0x920] sm:$0xff]
    %v334 = vld [vmem:[%s1 + $0x928] sm:$0xff]
    %v335 = vld [vmem:[%s1 + $0x930] sm:$0xff]
    %v336 = vld [vmem:[%s1 + $0x938] sm:$0xff]
    %v337 = vld [vmem:[%s1 + $0x940] sm:$0xff]
    %v338 = vld [vmem:[%s1 + $0x948] sm:$0xff]
    %v339 = vld [vmem:[%s1 + $0x950] sm:$0xff]
    %v340 = vld [vmem:[%s1 + $0x958] sm:$0xff]
    %v341 = vld [vmem:[%s1 + $0x960] sm:$0xff]
    %v342 = vld [vmem:[%s1 + $0x968] sm:$0xff]
    %v343 = vld [vmem:[%s1 + $0x970] sm:$0xff]
    %v344 = vld [vmem:[%s1 + $0x978] sm:$0xff]
    %v345 = vld [vmem:[%s1 + $0x980] sm:$0xff]
    %v346 = vld [vmem:[%s1 + $0x988] sm:$0xff]
    %v347 = vld [vmem:[%s1 + $0x990] sm:$0xff]
    %v348 = vld [vmem:[%s1 + $0x998] sm:$0xff]
    %v349 = vld [vmem:[%s1 + $0x9a0] sm:$0xff]
    %v350 = vld [vmem:[%s1 + $0x9a8] sm:$0xff]
    %v351 = vld [vmem:[%s1 + $0x9b0] sm:$0xff]
    %v352 = vld [vmem:[%s1 + $0x9b8] sm:$0xff]
    %v353 = vld [vmem:[%s1 + $0x9c0] sm:$0xff]
    %v354 = vld [vmem:[%s1 + $0x9c8] sm:$0xff]
    %v355 = vld [vmem:[%s1 + $0x9d0] sm:$0xff]
    %v356 = vld [vmem:[%s1 + $0x9d8] sm:$0xff]
    %v357 = vld [vmem:[%s1 + $0x9e0] sm:$0xff]
    %v358 = vld [vmem:[%s1 + $0x9e8] sm:$0xff]
    %v359 = vld [vmem:[%s1 + $0x9f0] sm:$0xff]
    %v360 = vld [vmem:[%s1 + $0x9f8] sm:$0xff]
    %v361 = vld [vmem:[%s1 + $0xa00] sm:$0xff]
    %v362 = vld [vmem:[%s1 + $0xa08] sm:$0xff]
    %v363 = vld [vmem:[%s1 + $0xa10] sm:$0xff]
    %v364 = vld [vmem:[%s1 + $0xa18] sm:$0xff]
    %v365 = vld [vmem:[%s1 + $0xa20] sm:$0xff]
    %v366 = vld [vmem:[%s1 + $0xa28] sm:$0xff]
    %v367 = vld [vmem:[%s1 + $0xa30] sm:$0xff]
    %v368 = vld [vmem:[%s1 + $0xa38] sm:$0xff]
    %v369 = vld [vmem:[%s1 + $0xa40] sm:$0xff]
    %v370 = vld [vmem:[%s1 + $0xa48] sm:$0xff]
    %v371 = vld [vmem:[%s1 + $0xa50] sm:$0xff]
    %v372 = vld [vmem:[%s1 + $0xa58] sm:$0xff]
    %v373 = vld [vmem:[%s1 + $0xa60] sm:$0xff]
    %v374 = vld [vmem:[%s1 + $0xa68] sm:$0xff]
    %v375 = vld [vmem:[%s1 + $0xa70] sm:$0xff]
    %v376 = vld [vmem:[%s1 + $0xa78] sm:$0xff]
    %v377 = vld [vmem:[%s1 + $0xa80] sm:$0xff]
    %v378 = vld [vmem:[%s1 + $0xa88] sm:$0xff]
    %v379 = vld [vmem:[%s1 + $0xa90] sm:$0xff]
    %v380 = vld [vmem:[%s1 + $0xa98] sm:$0xff]
    %v381 = vld [vmem:[%s1 + $0xaa0] sm:$0xff]
    %v382 = vld [vmem:[%s1 + $0xaa8] sm:$0xff]
    %v383 = vld [vmem:[%s1 + $0xab0] sm:$0xff]
    %v384 = vld [vmem:[%s1 + $0xab8] sm:$0xff]
    %v385 = vld [vmem:[%s1 + $0xac0] sm:$0xff]
    %v386 = vld [vmem:[%s1 + $0xac8] sm:$0xff]
    %v387 = vld [vmem:[%s1 + $0xad0] sm:$0xff]
    %v388 = vld [vmem:[%s1 + $0xad8] sm:$0xff]
    %v389 = vld [vmem:[%s1 + $0xae0] sm:$0xff]
    %v390 = vld [vmem:[%s1 + $0xae8] sm:$0xff]
    %v391 = vld [vmem:[%s1 + $0xaf0] sm:$0xff]
    %v392 = vld [vmem:[%s1 + $0xaf8] sm:$0xff]
    %v393 = vld [vmem:[%s1 + $0xb00] sm:$0xff]
    %v394 = vld [vmem:[%s1 + $0xb08] sm:$0xff]
    %v395 = vld [vmem:[%s1 + $0xb10] sm:$0xff]
    %v396 = vld [vmem:[%s1 + $0xb18] sm:$0xff]
    %v397 = vld [vmem:[%s1 + $0xb20] sm:$0xff]
    %v398 = vld [vmem:[%s1 + $0xb28] sm:$0xff]
    %v399 = vld [vmem:[%s1 + $0xb30] sm:$0xff]
    %v400 = vld [vmem:[%s1 + $0xb38] sm:$0xff]
    %v401 = vld [vmem:[%s1 + $0xb40] sm:$0xff]
    %v402 = vld [vmem:[%s1 + $0xb48] sm:$0xff]
    %v403 = vld [vmem:[%s1 + $0xb50] sm:$0xff]
    %v404 = vld [vmem:[%s1 + $0xb58] sm:$0xff]
    %v405 = vld [vmem:[%s1 + $0xb60] sm:$0xff]
    %v406 = vld [vmem:[%s1 + $0xb68] sm:$0xff]
    %v407 = vld [vmem:[%s1 + $0xb70] sm:$0xff]
    %v408 = vld [vmem:[%s1 + $0xb78] sm:$0xff]
    %v409 = vld [vmem:[%s1 + $0xb80] sm:$0xff]
    %v410 = vld [vmem:[%s1 + $0xb88] sm:$0xff]
    %v411 = vld [vmem:[%s1 + $0xb90] sm:$0xff]
    %v412 = vld [vmem:[%s1 + $0xb98] sm:$0xff]
    %v413 = vld [vmem:[%s1 + $0xba0] sm:$0xff]
    %v414 = vld [vmem:[%s1 + $0xba8] sm:$0xff]
    %v415 = vld [vmem:[%s1 + $0xbb0] sm:$0xff]
    %v416 = vld [vmem:[%s1 + $0xbb8] sm:$0xff]
    %v417 = vld [vmem:[%s1 + $0xbc0] sm:$0xff]
    %v418 = vld [vmem:[%s1 + $0xbc8] sm:$0xff]
    %v419 = vld [vmem:[%s1 + $0xbd0] sm:$0xff]
    %v420 = vld [vmem:[%s1 + $0xbd8] sm:$0xff]
    %v421 = vld [vmem:[%s1 + $0xbe0] sm:$0xff]
    %v422 = vld [vmem:[%s1 + $0xbe8] sm:$0xff]
    %v423 = vld [vmem:[%s1 + $0xbf0] sm:$0xff]
    %v424 = vld [vmem:[%s1 + $0xbf8] sm:$0xff]
    %v425 = vld [vmem:[%s1 + $0xc00] sm:$0xff]
    %v426 = vld [vmem:[%s1 + $0xc08] sm:$0xff]
    %v427 = vld [vmem:[%s1 + $0xc10] sm:$0xff]
    %v428 = vld [vmem:[%s1 + $0xc18] sm:$0xff]
    %v429 = vld [vmem:[%s1 + $0xc20] sm:$0xff]
    %v430 = vld [vmem:[%s1 + $0xc28] sm:$0xff]
    %v431 = vld [vmem:[%s1 + $0xc30] sm:$0xff]
    %v432 = vld [vmem:[%s1 + $0xc38] sm:$0xff]
    %v433 = vld [vmem:[%s1 + $0xc40] sm:$0xff]
    %v434 = vld [vmem:[%s1 + $0xc48] sm:$0xff]
    %v435 = vld [vmem:[%s1 + $0xc50] sm:$0xff]
    %v436 = vld [vmem:[%s1 + $0xc58] sm:$0xff]
    %v437 = vld [vmem:[%s1 + $0xc60] sm:$0xff]
    %v438 = vld [vmem:[%s1 + $0xc68] sm:$0xff]
    %v439 = vld [vmem:[%s1 + $0xc70] sm:$0xff]
    %v440 = vld [vmem:[%s1 + $0xc78] sm:$0xff]
    %v441 = vld [vmem:[%s1 + $0xc80] sm:$0xff]
    %v442 = vld [vmem:[%s1 + $0xc88] sm:$0xff]
    %v443 = vld [vmem:[%s1 + $0xc90] sm:$0xff]
    %v444 = vld [vmem:[%s1 + $0xc98] sm:$0xff]
    %v445 = vld [vmem:[%s1 + $0xca0] sm:$0xff]
    %v446 = vld [vmem:[%s1 + $0xca8] sm:$0xff]
    %v447 = vld [vmem:[%s1 + $0xcb0] sm:$0xff]
    %v448 = vld [vmem:[%s1 + $0xcb8] sm:$0xff]
    %v449 = vld [vmem:[%s1 + $0xcc0] sm:$0xff]
    %v450 = vld [vmem:[%s1 + $0xcc8] sm:$0xff]
    %v451 = vld [vmem:[%s1 + $0xcd0] sm:$0xff]
    %v452 = vld [vmem:[%s1 + $0xcd8] sm:$0xff]
    %v453 = vld [vmem:[%s1 + $0xce0] sm:$0xff]
    %v454 = vld [vmem:[%s1 + $0xce8] sm:$0xff]
    %v455 = vld [vmem:[%s1 + $0xcf0] sm:$0xff]
    %v456 = vld [vmem:[%s1 + $0xcf8] sm:$0xff]
    %v457 = vld [vmem:[%s1 + $0xd00] sm:$0xff]
    %v458 = vld [vmem:[%s1 + $0xd08] sm:$0xff]
    %v459 = vld [vmem:[%s1 + $0xd10] sm:$0xff]
    %v460 = vld [vmem:[%s1 + $0xd18] sm:$0xff]
    %v461 = vld [vmem:[%s1 + $0xd20] sm:$0xff]
    %v462 = vld [vmem:[%s1 + $0xd28] sm:$0xff]
    %v463 = vld [vmem:[%s1 + $0xd30] sm:$0xff]
    %v464 = vld [vmem:[%s1 + $0xd38] sm:$0xff]
    %v465 = vld [vmem:[%s1 + $0xd40] sm:$0xff]
    %v466 = vld [vmem:[%s1 + $0xd48] sm:$0xff]
    %v467 = vld [vmem:[%s1 + $0xd50] sm:$0xff]
    %v468 = vld [vmem:[%s1 + $0xd58] sm:$0xff]
    %v469 = vld [vmem:[%s1 + $0xd60] sm:$0xff]
    %v470 = vld [vmem:[%s1 + $0xd68] sm:$0xff]
    %v471 = vld [vmem:[%s1 + $0xd70] sm:$0xff]
    %v472 = vld [vmem:[%s1 + $0xd78] sm:$0xff]
    %v473 = vld [vmem:[%s1 + $0xd80] sm:$0xff]
    %v474 = vld [vmem:[%s1 + $0xd88] sm:$0xff]
    %v475 = vld [vmem:[%s1 + $0xd90] sm:$0xff]
    %v476 = vld [vmem:[%s1 + $0xd98] sm:$0xff]
    %v477 = vld [vmem:[%s1 + $0xda0] sm:$0xff]
    %v478 = vld [vmem:[%s1 + $0xda8] sm:$0xff]
    %v479 = vld [vmem:[%s1 + $0xdb0] sm:$0xff]
    %v480 = vld [vmem:[%s1 + $0xdb8] sm:$0xff]
    %v481 = vld [vmem:[%s1 + $0xdc0] sm:$0xff]
    %v482 = vld [vmem:[%s1 + $0xdc8] sm:$0xff]
    %v483 = vld [vmem:[%s1 + $0xdd0] sm:$0xff]
    %v484 = vld [vmem:[%s1 + $0xdd8] sm:$0xff]
    %v485 = vld [vmem:[%s1 + $0xde0] sm:$0xff]
    %v486 = vld [vmem:[%s1 + $0xde8] sm:$0xff]
    %v487 = vld [vmem:[%s1 + $0xdf0] sm:$0xff]
    %v488 = vld [vmem:[%s1 + $0xdf8] sm:$0xff]
    %v489 = vld [vmem:[%s1 + $0xe00] sm:$0xff]
    %v490 = vld [vmem:[%s1 + $0xe08] sm:$0xff]
    %v491 = vld [vmem:[%s1 + $0xe10] sm:$0xff]
    %v492 = vld [vmem:[%s1 + $0xe18] sm:$0xff]
    %v493 = vld [vmem:[%s1 + $0xe20] sm:$0xff]
    %v494 = vld [vmem:[%s1 + $0xe28] sm:$0xff]
    %v495 = vld [vmem:[%s1 + $0xe30] sm:$0xff]
    %v496 = vld [vmem:[%s1 + $0xe38] sm:$0xff]
    %v497 = vld [vmem:[%s1 + $0xe40] sm:$0xff]
    %v498 = vld [vmem:[%s1 + $0xe48] sm:$0xff]
    %v499 = vld [vmem:[%s1 + $0xe50] sm:$0xff]
    %v500 = vld [vmem:[%s1 + $0xe58] sm:$0xff]
    %v501 = vld [vmem:[%s1 + $0xe60] sm:$0xff]
    %v502 = vld [vmem:[%s1 + $0xe68] sm:$0xff]
    %v503 = vld [vmem:[%s1 + $0xe70] sm:$0xff]
    %v504 = vld [vmem:[%s1 + $0xe78] sm:$0xff]
    %v505 = vld [vmem:[%s1 + $0xe80] sm:$0xff]
    %v506 = vld [vmem:[%s1 + $0xe88] sm:$0xff]
    %v507 = vld [vmem:[%s1 + $0xe90] sm:$0xff]
    %v508 = vld [vmem:[%s1 + $0xe98] sm:$0xff]
    %v509 = vld [vmem:[%s1 + $0xea0] sm:$0xff]
    %v510 = vld [vmem:[%s1 + $0xea8] sm:$0xff]
    %v511 = vld [vmem:[%s1 + $0xeb0] sm:$0xff]
    %v512 = vld [vmem:[%s1 + $0xeb8] sm:$0xff]
    %v513 = vld [vmem:[%s1 + $0xec0] sm:$0xff]
    %v514 = vld [vmem:[%s1 + $0xec8] sm:$0xff]
    %v515 = vld [vmem:[%s1 + $0xed0] sm:$0xff]
    %v516 = vld [vmem:[%s1 + $0xed8] sm:$0xff]
    %v517 = vld [vmem:[%s1 + $0xee0] sm:$0xff]
    %v518 = vld [vmem:[%s1 + $0xee8] sm:$0xff]
    %v519 = vld [vmem:[%s1 + $0xef0] sm:$0xff]
    %v520 = vld [vmem:[%s1 + $0xef8] sm:$0xff]
    %v521 = vld [vmem:[%s1 + $0xf00] sm:$0xff]
    %v522 = vld [vmem:[%s1 + $0xf08] sm:$0xff]
    %v523 = vld [vmem:[%s1 + $0xf10] sm:$0xff]
    %v524 = vld [vmem:[%s1 + $0xf18] sm:$0xff]
    %v525 = vld [vmem:[%s1 + $0xf20] sm:$0xff]
    %v526 = vld [vmem:[%s1 + $0xf28] sm:$0xff]
    %v527 = vld [vmem:[%s1 + $0xf30] sm:$0xff]
    %v528 = vld [vmem:[%s1 + $0xf38] sm:$0xff]
    %v529 = vld [vmem:[%s1 + $0xf40] sm:$0xff]
    %v530 = vld [vmem:[%s1 + $0xf48] sm:$0xff]
    %v531 = vld [vmem:[%s1 + $0xf50] sm:$0xff]
    %v532 = vld [vmem:[%s1 + $0xf58] sm:$0xff]
    %v533 = vld [vmem:[%s1 + $0xf60] sm:$0xff]
    %v534 = vld [vmem:[%s1 + $0xf68] sm:$0xff]
    %v535 = vld [vmem:[%s1 + $0xf70] sm:$0xff]
    %v536 = vld [vmem:[%s1 + $0xf78] sm:$0xff]
    %v537 = vld [vmem:[%s1 + $0xf80] sm:$0xff]
    %v538 = vld [vmem:[%s1 + $0xf88] sm:$0xff]
    %v539 = vld [vmem:[%s1 + $0xf90] sm:$0xff]
    %v540 = vld [vmem:[%s1 + $0xf98] sm:$0xff]
    %v541 = vld [vmem:[%s1 + $0xfa0] sm:$0xff]
    %v542 = vld [vmem:[%s1 + $0xfa8] sm:$0xff]
    %v543 = vld [vmem:[%s1 + $0xfb0] sm:$0xff]
    %v544 = vld [vmem:[%s1 + $0xfb8] sm:$0xff]
    %v545 = vld [vmem:[%s1 + $0xfc0] sm:$0xff]
    %v546 = vld [vmem:[%s1 + $0xfc8] sm:$0xff]
    %v547 = vld [vmem:[%s1 + $0xfd0] sm:$0xff]
    %v548 = vld [vmem:[%s1 + $0xfd8] sm:$0xff]
    %v549 = vld [vmem:[%s1 + $0xfe0] sm:$0xff]
    %v550 = vld [vmem:[%s1 + $0xfe8] sm:$0xff]
    %v551 = vld [vmem:[%s1 + $0xff0] sm:$0xff]
    %v552 = vld [vmem:[%s1 + $0xff8] sm:$0xff]
    %v553 = vld [vmem:[%s1 + $0x1000] sm:$0xff]
    %v554 = vld [vmem:[%s1 + $0x1008] sm:$0xff]
    %v555 = vld [vmem:[%s1 + $0x1010] sm:$0xff]
    %v556 = vld [vmem:[%s1 + $0x1018] sm:$0xff]
    %v557 = vld [vmem:[%s1 + $0x1020] sm:$0xff]
    %v558 = vld [vmem:[%s1 + $0x1028] sm:$0xff]
    %v559 = vld [vmem:[%s1 + $0x1030] sm:$0xff]
    %v560 = vld [vmem:[%s1 + $0x1038] sm:$0xff]
    %v561 = vld [vmem:[%s1 + $0x1040] sm:$0xff]
    %v562 = vld [vmem:[%s1 + $0x1048] sm:$0xff]
    %v563 = vld [vmem:[%s1 + $0x1050] sm:$0xff]
    %v564 = vld [vmem:[%s1 + $0x1058] sm:$0xff]
    %v565 = vld [vmem:[%s1 + $0x1060] sm:$0xff]
    %v566 = vld [vmem:[%s1 + $0x1068] sm:$0xff]
    %v567 = vld [vmem:[%s1 + $0x1070] sm:$0xff]
    %v568 = vld [vmem:[%s1 + $0x1078] sm:$0xff]
    %v569 = vld [vmem:[%s1 + $0x1080] sm:$0xff]
    %v570 = vld [vmem:[%s1 + $0x1088] sm:$0xff]
    %v571 = vld [vmem:[%s1 + $0x1090] sm:$0xff]
    %v572 = vld [vmem:[%s1 + $0x1098] sm:$0xff]
    %v573 = vld [vmem:[%s1 + $0x10a0] sm:$0xff]
    %v574 = vld [vmem:[%s1 + $0x10a8] sm:$0xff]
    %v575 = vld [vmem:[%s1 + $0x10b0] sm:$0xff]
    %v576 = vld [vmem:[%s1 + $0x10b8] sm:$0xff]
    %v577 = vld [vmem:[%s1 + $0x10c0] sm:$0xff]
    %v578 = vld [vmem:[%s1 + $0x10c8] sm:$0xff]
    %v579 = vld [vmem:[%s1 + $0x10d0] sm:$0xff]
    %v580 = vld [vmem:[%s1 + $0x10d8] sm:$0xff]
    %v581 = vld [vmem:[%s1 + $0x10e0] sm:$0xff]
    %v582 = vld [vmem:[%s1 + $0x10e8] sm:$0xff]
    %v583 = vld [vmem:[%s1 + $0x10f0] sm:$0xff]
    %v584 = vld [vmem:[%s1 + $0x10f8] sm:$0xff]
    %v585 = vld [vmem:[%s1 + $0x1100] sm:$0xff]
    %v586 = vld [vmem:[%s1 + $0x1108] sm:$0xff]
    %v587 = vld [vmem:[%s1 + $0x1110] sm:$0xff]
    %v588 = vld [vmem:[%s1 + $0x1118] sm:$0xff]
    %v589 = vld [vmem:[%s1 + $0x1120] sm:$0xff]
    %v590 = vld [vmem:[%s1 + $0x1128] sm:$0xff]
    %v591 = vld [vmem:[%s1 + $0x1130] sm:$0xff]
    %v592 = vld [vmem:[%s1 + $0x1138] sm:$0xff]
    %v593 = vld [vmem:[%s1 + $0x1140] sm:$0xff]
    %v594 = vld [vmem:[%s1 + $0x1148] sm:$0xff]
    %v595 = vld [vmem:[%s1 + $0x1150] sm:$0xff]
    %v596 = vld [vmem:[%s1 + $0x1158] sm:$0xff]
    %v597 = vld [vmem:[%s1 + $0x1160] sm:$0xff]
    %v598 = vld [vmem:[%s1 + $0x1168] sm:$0xff]
    %v599 = vld [vmem:[%s1 + $0x1170] sm:$0xff]
    %v600 = vld [vmem:[%s1 + $0x1178] sm:$0xff]
    %v601 = vld [vmem:[%s1 + $0x1180] sm:$0xff]
    %v602 = vld [vmem:[%s1 + $0x1188] sm:$0xff]
    %v603 = vld [vmem:[%s1 + $0x1190] sm:$0xff]
    %v604 = vld [vmem:[%s1 + $0x1198] sm:$0xff]
    %v605 = vld [vmem:[%s1 + $0x11a0] sm:$0xff]
    %v606 = vld [vmem:[%s1 + $0x11a8] sm:$0xff]
    %v607 = vld [vmem:[%s1 + $0x11b0] sm:$0xff]
    %v608 = vld [vmem:[%s1 + $0x11b8] sm:$0xff]
    %v609 = vld [vmem:[%s1 + $0x11c0] sm:$0xff]
    %v610 = vld [vmem:[%s1 + $0x11c8] sm:$0xff]
    %v611 = vld [vmem:[%s1 + $0x11d0] sm:$0xff]
    %v612 = vld [vmem:[%s1 + $0x11d8] sm:$0xff]
    %v613 = vld [vmem:[%s1 + $0x11e0] sm:$0xff]
    %v614 = vld [vmem:[%s1 + $0x11e8] sm:$0xff]
    %v615 = vld [vmem:[%s1 + $0x11f0] sm:$0xff]
    %v616 = vld [vmem:[%s1 + $0x11f8] sm:$0xff]
    %v617 = vld [vmem:[%s1 + $0x1200] sm:$0xff]
    %v618 = vld [vmem:[%s1 + $0x1208] sm:$0xff]
    %v619 = vld [vmem:[%s1 + $0x1210] sm:$0xff]
    %v620 = vld [vmem:[%s1 + $0x1218] sm:$0xff]
    %v621 = vld [vmem:[%s1 + $0x1220] sm:$0xff]
    %v622 = vld [vmem:[%s1 + $0x1228] sm:$0xff]
    %v623 = vld [vmem:[%s1 + $0x1230] sm:$0xff]
    %v624 = vld [vmem:[%s1 + $0x1238] sm:$0xff]
    %v625 = vld [vmem:[%s1 + $0x1240] sm:$0xff]
    %v626 = vld [vmem:[%s1 + $0x1248] sm:$0xff]
    %v627 = vld [vmem:[%s1 + $0x1250] sm:$0xff]
    %v628 = vld [vmem:[%s1 + $0x1258] sm:$0xff]
    %v629 = vld [vmem:[%s1 + $0x1260] sm:$0xff]
    %v630 = vld [vmem:[%s1 + $0x1268] sm:$0xff]
    %v631 = vld [vmem:[%s1 + $0x1270] sm:$0xff]
    %v632 = vld [vmem:[%s1 + $0x1278] sm:$0xff]
    %v633 = vld [vmem:[%s1 + $0x1280] sm:$0xff]
    %v634 = vld [vmem:[%s1 + $0x1288] sm:$0xff]
    %v635 = vld [vmem:[%s1 + $0x1290] sm:$0xff]
    %v636 = vld [vmem:[%s1 + $0x1298] sm:$0xff]
    %v637 = vld [vmem:[%s1 + $0x12a0] sm:$0xff]
    %v638 = vld [vmem:[%s1 + $0x12a8] sm:$0xff]
    %v639 = vld [vmem:[%s1 + $0x12b0] sm:$0xff]
    %v640 = vld [vmem:[%s1 + $0x12b8] sm:$0xff]
    %v641 = vld [vmem:[%s1 + $0x12c0] sm:$0xff]
    %v642 = vld [vmem:[%s1 + $0x12c8] sm:$0xff]
    %v643 = vld [vmem:[%s1 + $0x12d0] sm:$0xff]
    %v644 = vld [vmem:[%s1 + $0x12d8] sm:$0xff]
    %v645 = vld [vmem:[%s1 + $0x12e0] sm:$0xff]
    %v646 = vld [vmem:[%s1 + $0x12e8] sm:$0xff]
    %v647 = vld [vmem:[%s1 + $0x12f0] sm:$0xff]
    %v648 = vld [vmem:[%s1 + $0x12f8] sm:$0xff]
    %v649 = vld [vmem:[%s1 + $0x1300] sm:$0xff]
    %v650 = vld [vmem:[%s1 + $0x1308] sm:$0xff]
    %v651 = vld [vmem:[%s1 + $0x1310] sm:$0xff]
    %v652 = vld [vmem:[%s1 + $0x1318] sm:$0xff]
    %v653 = vld [vmem:[%s1 + $0x1320] sm:$0xff]
    %v654 = vld [vmem:[%s1 + $0x1328] sm:$0xff]
    %v655 = vld [vmem:[%s1 + $0x1330] sm:$0xff]
    %v656 = vld [vmem:[%s1 + $0x1338] sm:$0xff]
    %v657 = vld [vmem:[%s1 + $0x1340] sm:$0xff]
    %v658 = vld [vmem:[%s1 + $0x1348] sm:$0xff]
    %v659 = vld [vmem:[%s1 + $0x1350] sm:$0xff]
    %v660 = vld [vmem:[%s1 + $0x1358] sm:$0xff]
    %v661 = vld [vmem:[%s1 + $0x1360] sm:$0xff]
    %v662 = vld [vmem:[%s1 + $0x1368] sm:$0xff]
    %v663 = vld [vmem:[%s1 + $0x1370] sm:$0xff]
    %v664 = vld [vmem:[%s1 + $0x1378] sm:$0xff]
    %v665 = vld [vmem:[%s1 + $0x1380] sm:$0xff]
    %v666 = vld [vmem:[%s1 + $0x1388] sm:$0xff]
    %v667 = vld [vmem:[%s1 + $0x1390] sm:$0xff]
    %v668 = vld [vmem:[%s1 + $0x1398] sm:$0xff]
    %v669 = vld [vmem:[%s1 + $0x13a0] sm:$0xff]
    %v670 = vld [vmem:[%s1 + $0x13a8] sm:$0xff]
    %v671 = vld [vmem:[%s1 + $0x13b0] sm:$0xff]
    %v672 = vld [vmem:[%s1 + $0x13b8] sm:$0xff]
    %v673 = vld [vmem:[%s1 + $0x13c0] sm:$0xff]
    %v674 = vld [vmem:[%s1 + $0x13c8] sm:$0xff]
    %v675 = vld [vmem:[%s1 + $0x13d0] sm:$0xff]
    %v676 = vld [vmem:[%s1 + $0x13d8] sm:$0xff]
    %v677 = vld [vmem:[%s1 + $0x13e0] sm:$0xff]
    %v678 = vld [vmem:[%s1 + $0x13e8] sm:$0xff]
    %v679 = vld [vmem:[%s1 + $0x13f0] sm:$0xff]
    %v680 = vld [vmem:[%s1 + $0x13f8] sm:$0xff]
    %v681 = vld [vmem:[%s1 + $0x1400] sm:$0xff]
    %v682 = vld [vmem:[%s1 + $0x1408] sm:$0xff]
    %v683 = vld [vmem:[%s1 + $0x1410] sm:$0xff]
    %v684 = vld [vmem:[%s1 + $0x1418] sm:$0xff]
    %v685 = vld [vmem:[%s1 + $0x1420] sm:$0xff]
    %v686 = vld [vmem:[%s1 + $0x1428] sm:$0xff]
    %v687 = vld [vmem:[%s1 + $0x1430] sm:$0xff]
    %v688 = vld [vmem:[%s1 + $0x1438] sm:$0xff]
    %v689 = vld [vmem:[%s1 + $0x1440] sm:$0xff]
    %v690 = vld [vmem:[%s1 + $0x1448] sm:$0xff]
    %v691 = vld [vmem:[%s1 + $0x1450] sm:$0xff]
    %v692 = vld [vmem:[%s1 + $0x1458] sm:$0xff]
    %v693 = vld [vmem:[%s1 + $0x1460] sm:$0xff]
    %v694 = vld [vmem:[%s1 + $0x1468] sm:$0xff]
    %v695 = vld [vmem:[%s1 + $0x1470] sm:$0xff]
    %v696 = vld [vmem:[%s1 + $0x1478] sm:$0xff]
    %v697 = vld [vmem:[%s1 + $0x1480] sm:$0xff]
    %v698 = vld [vmem:[%s1 + $0x1488] sm:$0xff]
    %v699 = vld [vmem:[%s1 + $0x1490] sm:$0xff]
    %v700 = vld [vmem:[%s1 + $0x1498] sm:$0xff]
    %v701 = vld [vmem:[%s1 + $0x14a0] sm:$0xff]
    %v702 = vld [vmem:[%s1 + $0x14a8] sm:$0xff]
    %v703 = vld [vmem:[%s1 + $0x14b0] sm:$0xff]
    %v704 = vld [vmem:[%s1 + $0x14b8] sm:$0xff]
    %v705 = vld [vmem:[%s1 + $0x14c0] sm:$0xff]
    %v706 = vld [vmem:[%s1 + $0x14c8] sm:$0xff]
    %v707 = vld [vmem:[%s1 + $0x14d0] sm:$0xff]
    %v708 = vld [vmem:[%s1 + $0x14d8] sm:$0xff]
    %v709 = vld [vmem:[%s1 + $0x14e0] sm:$0xff]
    %v710 = vld [vmem:[%s1 + $0x14e8] sm:$0xff]
    %v711 = vld [vmem:[%s1 + $0x14f0] sm:$0xff]
    %v712 = vld [vmem:[%s1 + $0x14f8] sm:$0xff]
    %v713 = vld [vmem:[%s1 + $0x1500] sm:$0xff]
    %v714 = vld [vmem:[%s1 + $0x1508] sm:$0xff]
    %v715 = vld [vmem:[%s1 + $0x1510] sm:$0xff]
    %v716 = vld [vmem:[%s1 + $0x1518] sm:$0xff]
    %v717 = vld [vmem:[%s1 + $0x1520] sm:$0xff]
    %v718 = vld [vmem:[%s1 + $0x1528] sm:$0xff]
    %v719 = vld [vmem:[%s1 + $0x1530] sm:$0xff]
    %v720 = vld [vmem:[%s1 + $0x1538] sm:$0xff]
    %v721 = vld [vmem:[%s1 + $0x1540] sm:$0xff]
    %v722 = vld [vmem:[%s1 + $0x1548] sm:$0xff]
    %v723 = vld [vmem:[%s1 + $0x1550] sm:$0xff]
    %v724 = vld [vmem:[%s1 + $0x1558] sm:$0xff]
    %v725 = vld [vmem:[%s1 + $0x1560] sm:$0xff]
    %v726 = vld [vmem:[%s1 + $0x1568] sm:$0xff]
    %v727 = vld [vmem:[%s1 + $0x1570] sm:$0xff]
    %v728 = vld [vmem:[%s1 + $0x1578] sm:$0xff]
    %v729 = vld [vmem:[%s1 + $0x1580] sm:$0xff]
    %v730 = vld [vmem:[%s1 + $0x1588] sm:$0xff]
    %v731 = vld [vmem:[%s1 + $0x1590] sm:$0xff]
    %v732 = vld [vmem:[%s1 + $0x1598] sm:$0xff]
    %v733 = vld [vmem:[%s1 + $0x15a0] sm:$0xff]
    %v734 = vld [vmem:[%s1 + $0x15a8] sm:$0xff]
    %v735 = vld [vmem:[%s1 + $0x15b0] sm:$0xff]
    %v736 = vld [vmem:[%s1 + $0x15b8] sm:$0xff]
    %v737 = vld [vmem:[%s1 + $0x15c0] sm:$0xff]
    %v738 = vld [vmem:[%s1 + $0x15c8] sm:$0xff]
    %v739 = vld [vmem:[%s1 + $0x15d0] sm:$0xff]
    %v740 = vld [vmem:[%s1 + $0x15d8] sm:$0xff]
    %v741 = vld [vmem:[%s1 + $0x15e0] sm:$0xff]
    %v742 = vld [vmem:[%s1 + $0x15e8] sm:$0xff]
    %v743 = vld [vmem:[%s1 + $0x15f0] sm:$0xff]
    %v744 = vld [vmem:[%s1 + $0x15f8] sm:$0xff]
    %v745 = vld [vmem:[%s1 + $0x1600] sm:$0xff]
    %v746 = vld [vmem:[%s1 + $0x1608] sm:$0xff]
    %v747 = vld [vmem:[%s1 + $0x1610] sm:$0xff]
    %v748 = vld [vmem:[%s1 + $0x1618] sm:$0xff]
    %v749 = vld [vmem:[%s1 + $0x1620] sm:$0xff]
    %v750 = vld [vmem:[%s1 + $0x1628] sm:$0xff]
    %v751 = vld [vmem:[%s1 + $0x1630] sm:$0xff]
    %v752 = vld [vmem:[%s1 + $0x1638] sm:$0xff]
    %v753 = vld [vmem:[%s1 + $0x1640] sm:$0xff]
    %v754 = vld [vmem:[%s1 + $0x1648] sm:$0xff]
    %v755 = vld [vmem:[%s1 + $0x1650] sm:$0xff]
    %v756 = vld [vmem:[%s1 + $0x1658] sm:$0xff]
    %v757 = vld [vmem:[%s1 + $0x1660] sm:$0xff]
    %v758 = vld [vmem:[%s1 + $0x1668] sm:$0xff]
    %v759 = vld [vmem:[%s1 + $0x1670] sm:$0xff]
    %v760 = vld [vmem:[%s1 + $0x1678] sm:$0xff]
    %v761 = vld [vmem:[%s1 + $0x1680] sm:$0xff]
    %v762 = vld [vmem:[%s1 + $0x1688] sm:$0xff]
    %v763 = vld [vmem:[%s1 + $0x1690] sm:$0xff]
    %v764 = vld [vmem:[%s1 + $0x1698] sm:$0xff]
    %v765 = vld [vmem:[%s1 + $0x16a0] sm:$0xff]
    %v766 = vld [vmem:[%s1 + $0x16a8] sm:$0xff]
    %v767 = vld [vmem:[%s1 + $0x16b0] sm:$0xff]
    %v768 = vld [vmem:[%s1 + $0x16b8] sm:$0xff]
    %v769 = vld [vmem:[%s1 + $0x16c0] sm:$0xff]
    %v770 = vld [vmem:[%s1 + $0x16c8] sm:$0xff]
    %v771 = vld [vmem:[%s1 + $0x16d0] sm:$0xff]
    %v772 = vld [vmem:[%s1 + $0x16d8] sm:$0xff]
    %v773 = vld [vmem:[%s1 + $0x16e0] sm:$0xff]
    %v774 = vld [vmem:[%s1 + $0x16e8] sm:$0xff]
    %v775 = vld [vmem:[%s1 + $0x16f0] sm:$0xff]
    %v776 = vld [vmem:[%s1 + $0x16f8] sm:$0xff]
    %v777 = vld [vmem:[%s1 + $0x1700] sm:$0xff]
    %v778 = vld [vmem:[%s1 + $0x1708] sm:$0xff]
    %v779 = vld [vmem:[%s1 + $0x1710] sm:$0xff]
    %v780 = vld [vmem:[%s1 + $0x1718] sm:$0xff]
    %v781 = vld [vmem:[%s1 + $0x1720] sm:$0xff]
    %v782 = vld [vmem:[%s1 + $0x1728] sm:$0xff]
    %v783 = vld [vmem:[%s1 + $0x1730] sm:$0xff]
    %v784 = vld [vmem:[%s1 + $0x1738] sm:$0xff]
    %v785 = vld [vmem:[%s1 + $0x1740] sm:$0xff]
    %v786 = vld [vmem:[%s1 + $0x1748] sm:$0xff]
    %v787 = vld [vmem:[%s1 + $0x1750] sm:$0xff]
    %v788 = vld [vmem:[%s1 + $0x1758] sm:$0xff]
    %v789 = vld [vmem:[%s1 + $0x1760] sm:$0xff]
    %v790 = vld [vmem:[%s1 + $0x1768] sm:$0xff]
    %v791 = vld [vmem:[%s1 + $0x1770] sm:$0xff]
    %v792 = vld [vmem:[%s1 + $0x1778] sm:$0xff]
    %v793 = vld [vmem:[%s1 + $0x1780] sm:$0xff]
    %v794 = vld [vmem:[%s1 + $0x1788] sm:$0xff]
    %v795 = vld [vmem:[%s1 + $0x1790] sm:$0xff]
    %v796 = vld [vmem:[%s1 + $0x1798] sm:$0xff]
    %v797 = vld [vmem:[%s1 + $0x17a0] sm:$0xff]
    %v798 = vld [vmem:[%s1 + $0x17a8] sm:$0xff]
    %v799 = vld [vmem:[%s1 + $0x17b0] sm:$0xff]
    %v800 = vld [vmem:[%s1 + $0x17b8] sm:$0xff]
    %v801 = vld [vmem:[%s1 + $0x17c0] sm:$0xff]
    %v802 = vld [vmem:[%s1 + $0x17c8] sm:$0xff]
    %v803 = vld [vmem:[%s1 + $0x17d0] sm:$0xff]
    %v804 = vld [vmem:[%s1 + $0x17d8] sm:$0xff]
    %v805 = vld [vmem:[%s1 + $0x17e0] sm:$0xff]
    %v806 = vld [vmem:[%s1 + $0x17e8] sm:$0xff]
    %v807 = vld [vmem:[%s1 + $0x17f0] sm:$0xff]
    %v808 = vld [vmem:[%s1 + $0x17f8] sm:$0xff]
    %v809 = vld [vmem:[%s1 + $0x1800] sm:$0xff]
    %v810 = vld [vmem:[%s1 + $0x1808] sm:$0xff]
    %v811 = vld [vmem:[%s1 + $0x1810] sm:$0xff]
    %v812 = vld [vmem:[%s1 + $0x1818] sm:$0xff]
    %v813 = vld [vmem:[%s1 + $0x1820] sm:$0xff]
    %v814 = vld [vmem:[%s1 + $0x1828] sm:$0xff]
    %v815 = vld [vmem:[%s1 + $0x1830] sm:$0xff]
    %v816 = vld [vmem:[%s1 + $0x1838] sm:$0xff]
    %v817 = vld [vmem:[%s1 + $0x1840] sm:$0xff]
    %v818 = vld [vmem:[%s1 + $0x1848] sm:$0xff]
    %v819 = vld [vmem:[%s1 + $0x1850] sm:$0xff]
    %v820 = vld [vmem:[%s1 + $0x1858] sm:$0xff]
    %v821 = vld [vmem:[%s1 + $0x1860] sm:$0xff]
    %v822 = vld [vmem:[%s1 + $0x1868] sm:$0xff]
    %v823 = vld [vmem:[%s1 + $0x1870] sm:$0xff]
    %v824 = vld [vmem:[%s1 + $0x1878] sm:$0xff]
    %v825 = vld [vmem:[%s1 + $0x1880] sm:$0xff]
    %v826 = vld [vmem:[%s1 + $0x1888] sm:$0xff]
    %v827 = vld [vmem:[%s1 + $0x1890] sm:$0xff]
    %v828 = vld [vmem:[%s1 + $0x1898] sm:$0xff]
    %v829 = vld [vmem:[%s1 + $0x18a0] sm:$0xff]
    %v830 = vld [vmem:[%s1 + $0x18a8] sm:$0xff]
    %v831 = vld [vmem:[%s1 + $0x18b0] sm:$0xff]
    %v832 = vld [vmem:[%s1 + $0x18b8] sm:$0xff]
    %v833 = vld [vmem:[%s1 + $0x18c0] sm:$0xff]
    %v834 = vld [vmem:[%s1 + $0x18c8] sm:$0xff]
    %v835 = vld [vmem:[%s1 + $0x18d0] sm:$0xff]
    %v836 = vld [vmem:[%s1 + $0x18d8] sm:$0xff]
    %v837 = vld [vmem:[%s1 + $0x18e0] sm:$0xff]
    %v838 = vld [vmem:[%s1 + $0x18e8] sm:$0xff]
    %v839 = vld [vmem:[%s1 + $0x18f0] sm:$0xff]
    %v840 = vld [vmem:[%s1 + $0x18f8] sm:$0xff]
    %v841 = vld [vmem:[%s1 + $0x1900] sm:$0xff]
    %v842 = vld [vmem:[%s1 + $0x1908] sm:$0xff]
    %v843 = vld [vmem:[%s1 + $0x1910] sm:$0xff]
    %v844 = vld [vmem:[%s1 + $0x1918] sm:$0xff]
    %v845 = vld [vmem:[%s1 + $0x1920] sm:$0xff]
    %v846 = vld [vmem:[%s1 + $0x1928] sm:$0xff]
    %v847 = vld [vmem:[%s1 + $0x1930] sm:$0xff]
    %v848 = vld [vmem:[%s1 + $0x1938] sm:$0xff]
    %v849 = vld [vmem:[%s1 + $0x1940] sm:$0xff]
    %v850 = vld [vmem:[%s1 + $0x1948] sm:$0xff]
    %v851 = vld [vmem:[%s1 + $0x1950] sm:$0xff]
    %v852 = vld [vmem:[%s1 + $0x1958] sm:$0xff]
    %v853 = vld [vmem:[%s1 + $0x1960] sm:$0xff]
    %v854 = vld [vmem:[%s1 + $0x1968] sm:$0xff]
    %v855 = vld [vmem:[%s1 + $0x1970] sm:$0xff]
    %v856 = vld [vmem:[%s1 + $0x1978] sm:$0xff]
    %v857 = vld [vmem:[%s1 + $0x1980] sm:$0xff]
    %v858 = vld [vmem:[%s1 + $0x1988] sm:$0xff]
    %v859 = vld [vmem:[%s1 + $0x1990] sm:$0xff]
    %v860 = vld [vmem:[%s1 + $0x1998] sm:$0xff]
    %v861 = vld [vmem:[%s1 + $0x19a0] sm:$0xff]
    %v862 = vld [vmem:[%s1 + $0x19a8] sm:$0xff]
    %v863 = vld [vmem:[%s1 + $0x19b0] sm:$0xff]
    %v864 = vld [vmem:[%s1 + $0x19b8] sm:$0xff]
    %v865 = vld [vmem:[%s1 + $0x19c0] sm:$0xff]
    %v866 = vld [vmem:[%s1 + $0x19c8] sm:$0xff]
    %v867 = vld [vmem:[%s1 + $0x19d0] sm:$0xff]
    %v868 = vld [vmem:[%s1 + $0x19d8] sm:$0xff]
    %v869 = vld [vmem:[%s1 + $0x19e0] sm:$0xff]
    %v870 = vld [vmem:[%s1 + $0x19e8] sm:$0xff]
    %v871 = vld [vmem:[%s1 + $0x19f0] sm:$0xff]
    %v872 = vld [vmem:[%s1 + $0x19f8] sm:$0xff]
    %v873 = vld [vmem:[%s1 + $0x1a00] sm:$0xff]
    %v874 = vld [vmem:[%s1 + $0x1a08] sm:$0xff]
    %v875 = vld [vmem:[%s1 + $0x1a10] sm:$0xff]
    %v876 = vld [vmem:[%s1 + $0x1a18] sm:$0xff]
    %v877 = vld [vmem:[%s1 + $0x1a20] sm:$0xff]
    %v878 = vld [vmem:[%s1 + $0x1a28] sm:$0xff]
    %v879 = vld [vmem:[%s1 + $0x1a30] sm:$0xff]
    %v880 = vld [vmem:[%s1 + $0x1a38] sm:$0xff]
    %v881 = vld [vmem:[%s1 + $0x1a40] sm:$0xff]
    %v882 = vld [vmem:[%s1 + $0x1a48] sm:$0xff]
    %v883 = vld [vmem:[%s1 + $0x1a50] sm:$0xff]
    %v884 = vld [vmem:[%s1 + $0x1a58] sm:$0xff]
    %v885 = vld [vmem:[%s1 + $0x1a60] sm:$0xff]
    %v886 = vld [vmem:[%s1 + $0x1a68] sm:$0xff]
    %v887 = vld [vmem:[%s1 + $0x1a70] sm:$0xff]
    %v888 = vld [vmem:[%s1 + $0x1a78] sm:$0xff]
    %v889 = vld [vmem:[%s1 + $0x1a80] sm:$0xff]
    %v890 = vld [vmem:[%s1 + $0x1a88] sm:$0xff]
    %v891 = vld [vmem:[%s1 + $0x1a90] sm:$0xff]
    %v892 = vld [vmem:[%s1 + $0x1a98] sm:$0xff]
    %v893 = vld [vmem:[%s1 + $0x1aa0] sm:$0xff]
    %v894 = vld [vmem:[%s1 + $0x1aa8] sm:$0xff]
    %v895 = vld [vmem:[%s1 + $0x1ab0] sm:$0xff]
    %v896 = vld [vmem:[%s1 + $0x1ab8] sm:$0xff]
    %v897 = vld [vmem:[%s1 + $0x1ac0] sm:$0xff]
    %v898 = vld [vmem:[%s1 + $0x1ac8] sm:$0xff]
    %v899 = vld [vmem:[%s1 + $0x1ad0] sm:$0xff]
    %v900 = vld [vmem:[%s1 + $0x1ad8] sm:$0xff]
    %v901 = vld [vmem:[%s1 + $0x1ae0] sm:$0xff]
    %v902 = vld [vmem:[%s1 + $0x1ae8] sm:$0xff]
    %v903 = vld [vmem:[%s1 + $0x1af0] sm:$0xff]
    %v904 = vld [vmem:[%s1 + $0x1af8] sm:$0xff]
    %v905 = vld [vmem:[%s1 + $0x1b00] sm:$0xff]
    %v906 = vld [vmem:[%s1 + $0x1b08] sm:$0xff]
    %v907 = vld [vmem:[%s1 + $0x1b10] sm:$0xff]
    %v908 = vld [vmem:[%s1 + $0x1b18] sm:$0xff]
    %v909 = vld [vmem:[%s1 + $0x1b20] sm:$0xff]
    %v910 = vld [vmem:[%s1 + $0x1b28] sm:$0xff]
    %v911 = vld [vmem:[%s1 + $0x1b30] sm:$0xff]
    %v912 = vld [vmem:[%s1 + $0x1b38] sm:$0xff]
    %v913 = vld [vmem:[%s1 + $0x1b40] sm:$0xff]
    %v914 = vld [vmem:[%s1 + $0x1b48] sm:$0xff]
    %v915 = vld [vmem:[%s1 + $0x1b50] sm:$0xff]
    %v916 = vld [vmem:[%s1 + $0x1b58] sm:$0xff]
    %v917 = vld [vmem:[%s1 + $0x1b60] sm:$0xff]
    %v918 = vld [vmem:[%s1 + $0x1b68] sm:$0xff]
    %v919 = vld [vmem:[%s1 + $0x1b70] sm:$0xff]
    %v920 = vld [vmem:[%s1 + $0x1b78] sm:$0xff]
    %v921 = vld [vmem:[%s1 + $0x1b80] sm:$0xff]
    %v922 = vld [vmem:[%s1 + $0x1b88] sm:$0xff]
    %v923 = vld [vmem:[%s1 + $0x1b90] sm:$0xff]
    %v924 = vld [vmem:[%s1 + $0x1b98] sm:$0xff]
    %v925 = vld [vmem:[%s1 + $0x1ba0] sm:$0xff]
    %v926 = vld [vmem:[%s1 + $0x1ba8] sm:$0xff]
    %v927 = vld [vmem:[%s1 + $0x1bb0] sm:$0xff]
    %v928 = vld [vmem:[%s1 + $0x1bb8] sm:$0xff]
    %v929 = vld [vmem:[%s1 + $0x1bc0] sm:$0xff]
    %v930 = vld [vmem:[%s1 + $0x1bc8] sm:$0xff]
    %v931 = vld [vmem:[%s1 + $0x1bd0] sm:$0xff]
    %v932 = vld [vmem:[%s1 + $0x1bd8] sm:$0xff]
    %v933 = vld [vmem:[%s1 + $0x1be0] sm:$0xff]
    %v934 = vld [vmem:[%s1 + $0x1be8] sm:$0xff]
    %v935 = vld [vmem:[%s1 + $0x1bf0] sm:$0xff]
    %v936 = vld [vmem:[%s1 + $0x1bf8] sm:$0xff]
    %v937 = vld [vmem:[%s2] sm:$0x7f]
    %v939 = vlaneseq
    %v940 = vshrl.u32 %v939, 7
    %v941 = vsub.s32 0, %v940
    %v942 = vrot.slane %v937, %v941
    %v943 = vlaneseq
    %v944 = vshrl.u32 %v943, 7
    %v945 = vsub.s32 1, %v944
    %v946 = vrot.slane %v937, %v945
    %v947 = vlaneseq
    %v948 = vshrl.u32 %v947, 7
    %v949 = vsub.s32 2, %v948
    %v950 = vrot.slane %v937, %v949
    %v951 = vlaneseq
    %v952 = vshrl.u32 %v951, 7
    %v953 = vsub.s32 3, %v952
    %v954 = vrot.slane %v937, %v953
    %v955 = vlaneseq
    %v956 = vshrl.u32 %v955, 7
    %v957 = vsub.s32 4, %v956
    %v958 = vrot.slane %v937, %v957
    %v959 = vlaneseq
    %v960 = vshrl.u32 %v959, 7
    %v961 = vsub.s32 5, %v960
    %v962 = vrot.slane %v937, %v961
    %v963 = vlaneseq
    %v964 = vshrl.u32 %v963, 7
    %v965 = vsub.s32 6, %v964
    %v966 = vrot.slane %v937, %v965
    %v976 = vcombine.high %v39, %v39
    %v978 = vunpack.c.l.s4 1983009808
    %v979 = vunpack.c.0.s8 %v978
    %v980 = vlaneseq
    %v981 = vshrl.u32 %v980, 7
    %v982 = vsub.s32 %v979, %v981
    %v983 = vrot.slane %v39, %v982
    %v985 = vunpack.c.l.s4 1983009808
    %v986 = vunpack.c.0.s8 %v985
    %v987 = vlaneseq
    %v988 = vshrl.u32 %v987, 7
    %v989 = vsub.s32 %v986, %v988
    %v990 = vrot.slane %v976, %v989
    %v991 = vcombine.high %v983, %v983
    %v992 = vcombine.high %v990, %v990
    %v993 = vcombine.high %v40, %v40
    %v995 = vunpack.c.l.s4 1983009808
    %v996 = vunpack.c.0.s8 %v995
    %v997 = vlaneseq
    %v998 = vshrl.u32 %v997, 7
    %v999 = vsub.s32 %v996, %v998
    %v1000 = vrot.slane %v40, %v999
    %v1002 = vunpack.c.l.s4 1983009808
    %v1003 = vunpack.c.0.s8 %v1002
    %v1004 = vlaneseq
    %v1005 = vshrl.u32 %v1004, 7
    %v1006 = vsub.s32 %v1003, %v1005
    %v1007 = vrot.slane %v993, %v1006
    %v1008 = vcombine.high %v1000, %v1000
    %v1009 = vcombine.high %v1007, %v1007
    %1018 = vmatprep.subr.mxu0 %v42
    %1019 = vmatpush1.msra.mxu0 %v41
    %1020 = vmatprep.subr.mxu0 %v49
    %1021 = vmatpush1.msra.mxu0 %v48
    %1022 = vmatprep.subr.mxu0 %v56
    %1023 = vmatpush1.msra.mxu0 %v55
    %1024 = vmatprep.subr.mxu0 %v63
    %1025 = vmatpush1.msra.mxu0 %v62
    %1026 = vmatprep.subr.mxu0 %v70
    %1027 = vmatpush1.msra.mxu0 %v69
    %1028 = vmatprep.subr.mxu0 %v77
    %1029 = vmatpush1.msra.mxu0 %v76
    %1030 = vmatprep.subr.mxu0 %v84
    %1031 = vmatpush1.msra.mxu0 %v83
    %1032 = vmatprep.subr.mxu0 %v91
    %1033 = vmatpush1.msra.mxu0 %v90
    %1034 = vmatprep.subr.mxu0 %v98
    %1035 = vmatpush1.msra.mxu0 %v97
    %1036 = vmatprep.subr.mxu0 %v105
    %1037 = vmatpush1.msra.mxu0 %v104
    %1038 = vmatprep.subr.mxu0 %v112
    %1039 = vmatpush1.msra.mxu0 %v111
    %1040 = vmatprep.subr.mxu0 %v119
    %1041 = vmatpush1.msra.mxu0 %v118
    %1042 = vmatprep.subr.mxu0 %v126
    %1043 = vmatpush1.msra.mxu0 %v125
    %1044 = vmatprep.subr.mxu0 %v133
    %1045 = vmatpush1.msra.mxu0 %v132
    %1046 = vmatprep.subr.mxu0 %v140
    %1047 = vmatpush1.msra.mxu0 %v139
    %1048 = vmatprep.subr.mxu0 %v147
    %1049 = vmatpush1.msra.mxu0 %v146
    %1050 = vmatprep.subr.mxu0 %v154
    %1051 = vmatpush1.msra.mxu0 %v153
    %1052 = vmatprep.subr.mxu0 %v161
    %1053 = vmatpush1.msra.mxu0 %v160
    %1054 = vmatprep.subr.mxu0 %v168
    %1055 = vmatpush1.msra.mxu0 %v167
    %1056 = vmatprep.subr.mxu0 %v175
    %1057 = vmatpush1.msra.mxu0 %v174
    %1058 = vmatprep.subr.mxu0 %v182
    %1059 = vmatpush1.msra.mxu0 %v181
    %1060 = vmatprep.subr.mxu0 %v189
    %1061 = vmatpush1.msra.mxu0 %v188
    %1062 = vmatprep.subr.mxu0 %v196
    %1063 = vmatpush1.msra.mxu0 %v195
    %1064 = vmatprep.subr.mxu0 %v203
    %1065 = vmatpush1.msra.mxu0 %v202
    %1066 = vmatprep.subr.mxu0 %v210
    %1067 = vmatpush1.msra.mxu0 %v209
    %1068 = vmatprep.subr.mxu0 %v217
    %1069 = vmatpush1.msra.mxu0 %v216
    %1070 = vmatprep.subr.mxu0 %v224
    %1071 = vmatpush1.msra.mxu0 %v223
    %1072 = vmatprep.subr.mxu0 %v231
    %1073 = vmatpush1.msra.mxu0 %v230
    %1074 = vmatprep.subr.mxu0 %v238
    %1075 = vmatpush1.msra.mxu0 %v237
    %1076 = vmatprep.subr.mxu0 %v245
    %1077 = vmatpush1.msra.mxu0 %v244
    %1078 = vmatprep.subr.mxu0 %v252
    %1079 = vmatpush1.msra.mxu0 %v251
    %1080 = vmatprep.subr.mxu0 %v259
    %1081 = vmatpush1.msra.mxu0 %v258
    %1082 = vmatprep.mubr.f32.mxu0 %v991
    %1083 = vmatmul.mubr.f32.gmra.mrb[0].mxu0 %v983
    %v1084 = vpop.f32.mrb[0].mxu0
    %v1085 = vadd.f32 %v942, %v1084
    %v1086 = vpop.f32.mrb[0].mxu0
    %v1087 = vadd.f32 %v946, %v1086
    %1088 = vdwg.mxu0
    %1089 = vmatprep.subr.mxu0 %v266
    %1090 = vmatpush1.msra.mxu0 %v265
    %1091 = vmatprep.subr.mxu0 %v273
    %1092 = vmatpush1.msra.mxu0 %v272
    %1093 = vmatprep.subr.mxu0 %v280
    %1094 = vmatpush1.msra.mxu0 %v279
    %1095 = vmatprep.subr.mxu0 %v287
    %1096 = vmatpush1.msra.mxu0 %v286
    %1097 = vmatprep.subr.mxu0 %v294
    %1098 = vmatpush1.msra.mxu0 %v293
    %1099 = vmatprep.subr.mxu0 %v301
    %1100 = vmatpush1.msra.mxu0 %v300
    %1101 = vmatprep.subr.mxu0 %v308
    %1102 = vmatpush1.msra.mxu0 %v307
    %1103 = vmatprep.subr.mxu0 %v315
    %1104 = vmatpush1.msra.mxu0 %v314
    %1105 = vmatprep.subr.mxu0 %v322
    %1106 = vmatpush1.msra.mxu0 %v321
    %1107 = vmatprep.subr.mxu0 %v329
    %1108 = vmatpush1.msra.mxu0 %v328
    %1109 = vmatprep.subr.mxu0 %v336
    %1110 = vmatpush1.msra.mxu0 %v335
    %1111 = vmatprep.subr.mxu0 %v343
    %1112 = vmatpush1.msra.mxu0 %v342
    %1113 = vmatprep.subr.mxu0 %v350
    %1114 = vmatpush1.msra.mxu0 %v349
    %1115 = vmatprep.subr.mxu0 %v357
    %1116 = vmatpush1.msra.mxu0 %v356
    %1117 = vmatprep.subr.mxu0 %v364
    %1118 = vmatpush1.msra.mxu0 %v363
    %1119 = vmatprep.subr.mxu0 %v371
    %1120 = vmatpush1.msra.mxu0 %v370
    %1121 = vmatprep.subr.mxu0 %v378
    %1122 = vmatpush1.msra.mxu0 %v377
    %1123 = vmatprep.subr.mxu0 %v385
    %1124 = vmatpush1.msra.mxu0 %v384
    %1125 = vmatprep.subr.mxu0 %v392
    %1126 = vmatpush1.msra.mxu0 %v391
    %1127 = vmatprep.subr.mxu0 %v399
    %1128 = vmatpush1.msra.mxu0 %v398
    %1129 = vmatprep.subr.mxu0 %v406
    %1130 = vmatpush1.msra.mxu0 %v405
    %1131 = vmatprep.subr.mxu0 %v413
    %1132 = vmatpush1.msra.mxu0 %v412
    %1133 = vmatprep.subr.mxu0 %v420
    %1134 = vmatpush1.msra.mxu0 %v419
    %1135 = vmatprep.subr.mxu0 %v427
    %1136 = vmatpush1.msra.mxu0 %v426
    %1137 = vmatprep.subr.mxu0 %v434
    %1138 = vmatpush1.msra.mxu0 %v433
    %1139 = vmatprep.subr.mxu0 %v441
    %1140 = vmatpush1.msra.mxu0 %v440
    %1141 = vmatprep.subr.mxu0 %v448
    %1142 = vmatpush1.msra.mxu0 %v447
    %1143 = vmatprep.subr.mxu0 %v455
    %1144 = vmatpush1.msra.mxu0 %v454
    %1145 = vmatprep.subr.mxu0 %v462
    %1146 = vmatpush1.msra.mxu0 %v461
    %1147 = vmatprep.subr.mxu0 %v469
    %1148 = vmatpush1.msra.mxu0 %v468
    %1149 = vmatprep.subr.mxu0 %v476
    %1150 = vmatpush1.msra.mxu0 %v475
    %1151 = vmatprep.subr.mxu0 %v483
    %1152 = vmatpush1.msra.mxu0 %v482
    %1153 = vmatprep.mubr.f32.mxu0 %v992
    %1154 = vmatmul.mubr.f32.gmra.mrb[0].mxu0 %v990
    %v1155 = vpop.f32.mrb[0].mxu0
    %v1156 = vadd.f32 %v1085, %v1155
    %v1157 = vpop.f32.mrb[0].mxu0
    %v1158 = vadd.f32 %v1087, %v1157
    %1159 = vdwg.mxu0
    %1160 = vmatprep.subr.mxu0 %v490
    %1161 = vmatpush1.msra.mxu0 %v489
    %1162 = vmatprep.subr.mxu0 %v497
    %1163 = vmatpush1.msra.mxu0 %v496
    %1164 = vmatprep.subr.mxu0 %v504
    %1165 = vmatpush1.msra.mxu0 %v503
    %1166 = vmatprep.subr.mxu0 %v511
    %1167 = vmatpush1.msra.mxu0 %v510
    %1168 = vmatprep.subr.mxu0 %v518
    %1169 = vmatpush1.msra.mxu0 %v517
    %1170 = vmatprep.subr.mxu0 %v525
    %1171 = vmatpush1.msra.mxu0 %v524
    %1172 = vmatprep.subr.mxu0 %v532
    %1173 = vmatpush1.msra.mxu0 %v531
    %1174 = vmatprep.subr.mxu0 %v539
    %1175 = vmatpush1.msra.mxu0 %v538
    %1176 = vmatprep.subr.mxu0 %v546
    %1177 = vmatpush1.msra.mxu0 %v545
    %1178 = vmatprep.subr.mxu0 %v553
    %1179 = vmatpush1.msra.mxu0 %v552
    %1180 = vmatprep.subr.mxu0 %v560
    %1181 = vmatpush1.msra.mxu0 %v559
    %1182 = vmatprep.subr.mxu0 %v567
    %1183 = vmatpush1.msra.mxu0 %v566
    %1184 = vmatprep.subr.mxu0 %v574
    %1185 = vmatpush1.msra.mxu0 %v573
    %1186 = vmatprep.subr.mxu0 %v581
    %1187 = vmatpush1.msra.mxu0 %v580
    %1188 = vmatprep.subr.mxu0 %v588
    %1189 = vmatpush1.msra.mxu0 %v587
    %1190 = vmatprep.subr.mxu0 %v595
    %1191 = vmatpush1.msra.mxu0 %v594
    %1192 = vmatprep.subr.mxu0 %v602
    %1193 = vmatpush1.msra.mxu0 %v601
    %1194 = vmatprep.subr.mxu0 %v609
    %1195 = vmatpush1.msra.mxu0 %v608
    %1196 = vmatprep.subr.mxu0 %v616
    %1197 = vmatpush1.msra.mxu0 %v615
    %1198 = vmatprep.subr.mxu0 %v623
    %1199 = vmatpush1.msra.mxu0 %v622
    %1200 = vmatprep.subr.mxu0 %v630
    %1201 = vmatpush1.msra.mxu0 %v629
    %1202 = vmatprep.subr.mxu0 %v637
    %1203 = vmatpush1.msra.mxu0 %v636
    %1204 = vmatprep.subr.mxu0 %v644
    %1205 = vmatpush1.msra.mxu0 %v643
    %1206 = vmatprep.subr.mxu0 %v651
    %1207 = vmatpush1.msra.mxu0 %v650
    %1208 = vmatprep.subr.mxu0 %v658
    %1209 = vmatpush1.msra.mxu0 %v657
    %1210 = vmatprep.subr.mxu0 %v665
    %1211 = vmatpush1.msra.mxu0 %v664
    %1212 = vmatprep.subr.mxu0 %v672
    %1213 = vmatpush1.msra.mxu0 %v671
    %1214 = vmatprep.subr.mxu0 %v679
    %1215 = vmatpush1.msra.mxu0 %v678
    %1216 = vmatprep.subr.mxu0 %v686
    %1217 = vmatpush1.msra.mxu0 %v685
    %1218 = vmatprep.subr.mxu0 %v693
    %1219 = vmatpush1.msra.mxu0 %v692
    %1220 = vmatprep.subr.mxu0 %v700
    %1221 = vmatpush1.msra.mxu0 %v699
    %1222 = vmatprep.subr.mxu0 %v707
    %1223 = vmatpush1.msra.mxu0 %v706
    %1224 = vmatprep.mubr.f32.mxu0 %v1008
    %1225 = vmatmul.mubr.f32.gmra.mrb[0].mxu0 %v1000
    %v1226 = vpop.f32.mrb[0].mxu0
    %v1227 = vadd.f32 %v1156, %v1226
    %v1228 = vpop.f32.mrb[0].mxu0
    %v1229 = vadd.f32 %v1158, %v1228
    %1230 = vdwg.mxu0
    %1231 = vmatprep.subr.mxu0 %v714
    %1232 = vmatpush1.msra.mxu0 %v713
    %1233 = vmatprep.subr.mxu0 %v721
    %1234 = vmatpush1.msra.mxu0 %v720
    %1235 = vmatprep.subr.mxu0 %v728
    %1236 = vmatpush1.msra.mxu0 %v727
    %1237 = vmatprep.subr.mxu0 %v735
    %1238 = vmatpush1.msra.mxu0 %v734
    %1239 = vmatprep.subr.mxu0 %v742
    %1240 = vmatpush1.msra.mxu0 %v741
    %1241 = vmatprep.subr.mxu0 %v749
    %1242 = vmatpush1.msra.mxu0 %v748
    %1243 = vmatprep.subr.mxu0 %v756
    %1244 = vmatpush1.msra.mxu0 %v755
    %1245 = vmatprep.subr.mxu0 %v763
    %1246 = vmatpush1.msra.mxu0 %v762
    %1247 = vmatprep.subr.mxu0 %v770
    %1248 = vmatpush1.msra.mxu0 %v769
    %1249 = vmatprep.subr.mxu0 %v777
    %1250 = vmatpush1.msra.mxu0 %v776
    %1251 = vmatprep.subr.mxu0 %v784
    %1252 = vmatpush1.msra.mxu0 %v783
    %1253 = vmatprep.subr.mxu0 %v791
    %1254 = vmatpush1.msra.mxu0 %v790
    %1255 = vmatprep.subr.mxu0 %v798
    %1256 = vmatpush1.msra.mxu0 %v797
    %1257 = vmatprep.subr.mxu0 %v805
    %1258 = vmatpush1.msra.mxu0 %v804
    %1259 = vmatprep.subr.mxu0 %v812
    %1260 = vmatpush1.msra.mxu0 %v811
    %1261 = vmatprep.subr.mxu0 %v819
    %1262 = vmatpush1.msra.mxu0 %v818
    %1263 = vmatprep.subr.mxu0 %v826
    %1264 = vmatpush1.msra.mxu0 %v825
    %1265 = vmatprep.subr.mxu0 %v833
    %1266 = vmatpush1.msra.mxu0 %v832
    %1267 = vmatprep.subr.mxu0 %v840
    %1268 = vmatpush1.msra.mxu0 %v839
    %1269 = vmatprep.subr.mxu0 %v847
    %1270 = vmatpush1.msra.mxu0 %v846
    %1271 = vmatprep.subr.mxu0 %v854
    %1272 = vmatpush1.msra.mxu0 %v853
    %1273 = vmatprep.subr.mxu0 %v861
    %1274 = vmatpush1.msra.mxu0 %v860
    %1275 = vmatprep.subr.mxu0 %v868
    %1276 = vmatpush1.msra.mxu0 %v867
    %1277 = vmatprep.subr.mxu0 %v875
    %1278 = vmatpush1.msra.mxu0 %v874
    %1279 = vmatprep.subr.mxu0 %v882
    %1280 = vmatpush1.msra.mxu0 %v881
    %1281 = vmatprep.subr.mxu0 %v889
    %1282 = vmatpush1.msra.mxu0 %v888
    %1283 = vmatprep.subr.mxu0 %v896
    %1284 = vmatpush1.msra.mxu0 %v895
    %1285 = vmatprep.subr.mxu0 %v903
    %1286 = vmatpush1.msra.mxu0 %v902
    %1287 = vmatprep.subr.mxu0 %v910
    %1288 = vmatpush1.msra.mxu0 %v909
    %1289 = vmatprep.subr.mxu0 %v917
    %1290 = vmatpush1.msra.mxu0 %v916
    %1291 = vmatprep.subr.mxu0 %v924
    %1292 = vmatpush1.msra.mxu0 %v923
    %1293 = vmatprep.subr.mxu0 %v931
    %1294 = vmatpush1.msra.mxu0 %v930
    %1295 = vmatprep.mubr.f32.mxu0 %v1009
    %1296 = vmatmul.mubr.f32.gmra.mrb[0].mxu0 %v1007
    %v1297 = vpop.f32.mrb[0].mxu0
    %v1298 = vadd.f32 %v1227, %v1297
    %v1299 = vpop.f32.mrb[0].mxu0
    %v1300 = vadd.f32 %v1229, %v1299
    %1301 = vdwg.mxu0
    %1302 = vmatprep.subr.mxu0 %v44
    %1303 = vmatpush1.msra.mxu0 %v43
    %1304 = vmatprep.subr.mxu0 %v51
    %1305 = vmatpush1.msra.mxu0 %v50
    %1306 = vmatprep.subr.mxu0 %v58
    %1307 = vmatpush1.msra.mxu0 %v57
    %1308 = vmatprep.subr.mxu0 %v65
    %1309 = vmatpush1.msra.mxu0 %v64
    %1310 = vmatprep.subr.mxu0 %v72
    %1311 = vmatpush1.msra.mxu0 %v71
    %1312 = vmatprep.subr.mxu0 %v79
    %1313 = vmatpush1.msra.mxu0 %v78
    %1314 = vmatprep.subr.mxu0 %v86
    %1315 = vmatpush1.msra.mxu0 %v85
    %1316 = vmatprep.subr.mxu0 %v93
    %1317 = vmatpush1.msra.mxu0 %v92
    %1318 = vmatprep.subr.mxu0 %v100
    %1319 = vmatpush1.msra.mxu0 %v99
    %1320 = vmatprep.subr.mxu0 %v107
    %1321 = vmatpush1.msra.mxu0 %v106
    %1322 = vmatprep.subr.mxu0 %v114
    %1323 = vmatpush1.msra.mxu0 %v113
    %1324 = vmatprep.subr.mxu0 %v121
    %1325 = vmatpush1.msra.mxu0 %v120
    %1326 = vmatprep.subr.mxu0 %v128
    %1327 = vmatpush1.msra.mxu0 %v127
    %1328 = vmatprep.subr.mxu0 %v135
    %1329 = vmatpush1.msra.mxu0 %v134
    %1330 = vmatprep.subr.mxu0 %v142
    %1331 = vmatpush1.msra.mxu0 %v141
    %1332 = vmatprep.subr.mxu0 %v149
    %1333 = vmatpush1.msra.mxu0 %v148
    %1334 = vmatprep.subr.mxu0 %v156
    %1335 = vmatpush1.msra.mxu0 %v155
    %1336 = vmatprep.subr.mxu0 %v163
    %1337 = vmatpush1.msra.mxu0 %v162
    %1338 = vmatprep.subr.mxu0 %v170
    %1339 = vmatpush1.msra.mxu0 %v169
    %1340 = vmatprep.subr.mxu0 %v177
    %1341 = vmatpush1.msra.mxu0 %v176
    %1342 = vmatprep.subr.mxu0 %v184
    %1343 = vmatpush1.msra.mxu0 %v183
    %1344 = vmatprep.subr.mxu0 %v191
    %1345 = vmatpush1.msra.mxu0 %v190
    %1346 = vmatprep.subr.mxu0 %v198
    %1347 = vmatpush1.msra.mxu0 %v197
    %1348 = vmatprep.subr.mxu0 %v205
    %1349 = vmatpush1.msra.mxu0 %v204
    %1350 = vmatprep.subr.mxu0 %v212
    %1351 = vmatpush1.msra.mxu0 %v211
    %1352 = vmatprep.subr.mxu0 %v219
    %1353 = vmatpush1.msra.mxu0 %v218
    %1354 = vmatprep.subr.mxu0 %v226
    %1355 = vmatpush1.msra.mxu0 %v225
    %1356 = vmatprep.subr.mxu0 %v233
    %1357 = vmatpush1.msra.mxu0 %v232
    %1358 = vmatprep.subr.mxu0 %v240
    %1359 = vmatpush1.msra.mxu0 %v239
    %1360 = vmatprep.subr.mxu0 %v247
    %1361 = vmatpush1.msra.mxu0 %v246
    %1362 = vmatprep.subr.mxu0 %v254
    %1363 = vmatpush1.msra.mxu0 %v253
    %1364 = vmatprep.subr.mxu0 %v261
    %1365 = vmatpush1.msra.mxu0 %v260
    %1366 = vmatprep.mubr.f32.mxu0 %v991
    %1367 = vmatmul.mubr.f32.gmra.mrb[0].mxu0 %v983
    %v1368 = vpop.f32.mrb[0].mxu0
    %v1369 = vadd.f32 %v950, %v1368
    %v1370 = vpop.f32.mrb[0].mxu0
    %v1371 = vadd.f32 %v954, %v1370
    %1372 = vdwg.mxu0
    %1373 = vmatprep.subr.mxu0 %v268
    %1374 = vmatpush1.msra.mxu0 %v267
    %1375 = vmatprep.subr.mxu0 %v275
    %1376 = vmatpush1.msra.mxu0 %v274
    %1377 = vmatprep.subr.mxu0 %v282
    %1378 = vmatpush1.msra.mxu0 %v281
    %1379 = vmatprep.subr.mxu0 %v289
    %1380 = vmatpush1.msra.mxu0 %v288
    %1381 = vmatprep.subr.mxu0 %v296
    %1382 = vmatpush1.msra.mxu0 %v295
    %1383 = vmatprep.subr.mxu0 %v303
    %1384 = vmatpush1.msra.mxu0 %v302
    %1385 = vmatprep.subr.mxu0 %v310
    %1386 = vmatpush1.msra.mxu0 %v309
    %1387 = vmatprep.subr.mxu0 %v317
    %1388 = vmatpush1.msra.mxu0 %v316
    %1389 = vmatprep.subr.mxu0 %v324
    %1390 = vmatpush1.msra.mxu0 %v323
    %1391 = vmatprep.subr.mxu0 %v331
    %1392 = vmatpush1.msra.mxu0 %v330
    %1393 = vmatprep.subr.mxu0 %v338
    %1394 = vmatpush1.msra.mxu0 %v337
    %1395 = vmatprep.subr.mxu0 %v345
    %1396 = vmatpush1.msra.mxu0 %v344
    %1397 = vmatprep.subr.mxu0 %v352
    %1398 = vmatpush1.msra.mxu0 %v351
    %1399 = vmatprep.subr.mxu0 %v359
    %1400 = vmatpush1.msra.mxu0 %v358
    %1401 = vmatprep.subr.mxu0 %v366
    %1402 = vmatpush1.msra.mxu0 %v365
    %1403 = vmatprep.subr.mxu0 %v373
    %1404 = vmatpush1.msra.mxu0 %v372
    %1405 = vmatprep.subr.mxu0 %v380
    %1406 = vmatpush1.msra.mxu0 %v379
    %1407 = vmatprep.subr.mxu0 %v387
    %1408 = vmatpush1.msra.mxu0 %v386
    %1409 = vmatprep.subr.mxu0 %v394
    %1410 = vmatpush1.msra.mxu0 %v393
    %1411 = vmatprep.subr.mxu0 %v401
    %1412 = vmatpush1.msra.mxu0 %v400
    %1413 = vmatprep.subr.mxu0 %v408
    %1414 = vmatpush1.msra.mxu0 %v407
    %1415 = vmatprep.subr.mxu0 %v415
    %1416 = vmatpush1.msra.mxu0 %v414
    %1417 = vmatprep.subr.mxu0 %v422
    %1418 = vmatpush1.msra.mxu0 %v421
    %1419 = vmatprep.subr.mxu0 %v429
    %1420 = vmatpush1.msra.mxu0 %v428
    %1421 = vmatprep.subr.mxu0 %v436
    %1422 = vmatpush1.msra.mxu0 %v435
    %1423 = vmatprep.subr.mxu0 %v443
    %1424 = vmatpush1.msra.mxu0 %v442
    %1425 = vmatprep.subr.mxu0 %v450
    %1426 = vmatpush1.msra.mxu0 %v449
    %1427 = vmatprep.subr.mxu0 %v457
    %1428 = vmatpush1.msra.mxu0 %v456
    %1429 = vmatprep.subr.mxu0 %v464
    %1430 = vmatpush1.msra.mxu0 %v463
    %1431 = vmatprep.subr.mxu0 %v471
    %1432 = vmatpush1.msra.mxu0 %v470
    %1433 = vmatprep.subr.mxu0 %v478
    %1434 = vmatpush1.msra.mxu0 %v477
    %1435 = vmatprep.subr.mxu0 %v485
    %1436 = vmatpush1.msra.mxu0 %v484
    %1437 = vmatprep.mubr.f32.mxu0 %v992
    %1438 = vmatmul.mubr.f32.gmra.mrb[0].mxu0 %v990
    %v1439 = vpop.f32.mrb[0].mxu0
    %v1440 = vadd.f32 %v1369, %v1439
    %v1441 = vpop.f32.mrb[0].mxu0
    %v1442 = vadd.f32 %v1371, %v1441
    %1443 = vdwg.mxu0
    %1444 = vmatprep.subr.mxu0 %v492
    %1445 = vmatpush1.msra.mxu0 %v491
    %1446 = vmatprep.subr.mxu0 %v499
    %1447 = vmatpush1.msra.mxu0 %v498
    %1448 = vmatprep.subr.mxu0 %v506
    %1449 = vmatpush1.msra.mxu0 %v505
    %1450 = vmatprep.subr.mxu0 %v513
    %1451 = vmatpush1.msra.mxu0 %v512
    %1452 = vmatprep.subr.mxu0 %v520
    %1453 = vmatpush1.msra.mxu0 %v519
    %1454 = vmatprep.subr.mxu0 %v527
    %1455 = vmatpush1.msra.mxu0 %v526
    %1456 = vmatprep.subr.mxu0 %v534
    %1457 = vmatpush1.msra.mxu0 %v533
    %1458 = vmatprep.subr.mxu0 %v541
    %1459 = vmatpush1.msra.mxu0 %v540
    %1460 = vmatprep.subr.mxu0 %v548
    %1461 = vmatpush1.msra.mxu0 %v547
    %1462 = vmatprep.subr.mxu0 %v555
    %1463 = vmatpush1.msra.mxu0 %v554
    %1464 = vmatprep.subr.mxu0 %v562
    %1465 = vmatpush1.msra.mxu0 %v561
    %1466 = vmatprep.subr.mxu0 %v569
    %1467 = vmatpush1.msra.mxu0 %v568
    %1468 = vmatprep.subr.mxu0 %v576
    %1469 = vmatpush1.msra.mxu0 %v575
    %1470 = vmatprep.subr.mxu0 %v583
    %1471 = vmatpush1.msra.mxu0 %v582
    %1472 = vmatprep.subr.mxu0 %v590
    %1473 = vmatpush1.msra.mxu0 %v589
    %1474 = vmatprep.subr.mxu0 %v597
    %1475 = vmatpush1.msra.mxu0 %v596
    %1476 = vmatprep.subr.mxu0 %v604
    %1477 = vmatpush1.msra.mxu0 %v603
    %1478 = vmatprep.subr.mxu0 %v611
    %1479 = vmatpush1.msra.mxu0 %v610
    %1480 = vmatprep.subr.mxu0 %v618
    %1481 = vmatpush1.msra.mxu0 %v617
    %1482 = vmatprep.subr.mxu0 %v625
    %1483 = vmatpush1.msra.mxu0 %v624
    %1484 = vmatprep.subr.mxu0 %v632
    %1485 = vmatpush1.msra.mxu0 %v631
    %1486 = vmatprep.subr.mxu0 %v639
    %1487 = vmatpush1.msra.mxu0 %v638
    %1488 = vmatprep.subr.mxu0 %v646
    %1489 = vmatpush1.msra.mxu0 %v645
    %1490 = vmatprep.subr.mxu0 %v653
    %1491 = vmatpush1.msra.mxu0 %v652
    %1492 = vmatprep.subr.mxu0 %v660
    %1493 = vmatpush1.msra.mxu0 %v659
    %1494 = vmatprep.subr.mxu0 %v667
    %1495 = vmatpush1.msra.mxu0 %v666
    %1496 = vmatprep.subr.mxu0 %v674
    %1497 = vmatpush1.msra.mxu0 %v673
    %1498 = vmatprep.subr.mxu0 %v681
    %1499 = vmatpush1.msra.mxu0 %v680
    %1500 = vmatprep.subr.mxu0 %v688
    %1501 = vmatpush1.msra.mxu0 %v687
    %1502 = vmatprep.subr.mxu0 %v695
    %1503 = vmatpush1.msra.mxu0 %v694
    %1504 = vmatprep.subr.mxu0 %v702
    %1505 = vmatpush1.msra.mxu0 %v701
    %1506 = vmatprep.subr.mxu0 %v709
    %1507 = vmatpush1.msra.mxu0 %v708
    %1508 = vmatprep.mubr.f32.mxu0 %v1008
    %1509 = vmatmul.mubr.f32.gmra.mrb[0].mxu0 %v1000
    %v1510 = vpop.f32.mrb[0].mxu0
    %v1511 = vadd.f32 %v1440, %v1510
    %v1512 = vpop.f32.mrb[0].mxu0
    %v1513 = vadd.f32 %v1442, %v1512
    %1514 = vdwg.mxu0
    %1515 = vmatprep.subr.mxu0 %v716
    %1516 = vmatpush1.msra.mxu0 %v715
    %1517 = vmatprep.subr.mxu0 %v723
    %1518 = vmatpush1.msra.mxu0 %v722
    %1519 = vmatprep.subr.mxu0 %v730
    %1520 = vmatpush1.msra.mxu0 %v729
    %1521 = vmatprep.subr.mxu0 %v737
    %1522 = vmatpush1.msra.mxu0 %v736
    %1523 = vmatprep.subr.mxu0 %v744
    %1524 = vmatpush1.msra.mxu0 %v743
    %1525 = vmatprep.subr.mxu0 %v751
    %1526 = vmatpush1.msra.mxu0 %v750
    %1527 = vmatprep.subr.mxu0 %v758
    %1528 = vmatpush1.msra.mxu0 %v757
    %1529 = vmatprep.subr.mxu0 %v765
    %1530 = vmatpush1.msra.mxu0 %v764
    %1531 = vmatprep.subr.mxu0 %v772
    %1532 = vmatpush1.msra.mxu0 %v771
    %1533 = vmatprep.subr.mxu0 %v779
    %1534 = vmatpush1.msra.mxu0 %v778
    %1535 = vmatprep.subr.mxu0 %v786
    %1536 = vmatpush1.msra.mxu0 %v785
    %1537 = vmatprep.subr.mxu0 %v793
    %1538 = vmatpush1.msra.mxu0 %v792
    %1539 = vmatprep.subr.mxu0 %v800
    %1540 = vmatpush1.msra.mxu0 %v799
    %1541 = vmatprep.subr.mxu0 %v807
    %1542 = vmatpush1.msra.mxu0 %v806
    %1543 = vmatprep.subr.mxu0 %v814
    %1544 = vmatpush1.msra.mxu0 %v813
    %1545 = vmatprep.subr.mxu0 %v821
    %1546 = vmatpush1.msra.mxu0 %v820
    %1547 = vmatprep.subr.mxu0 %v828
    %1548 = vmatpush1.msra.mxu0 %v827
    %1549 = vmatprep.subr.mxu0 %v835
    %1550 = vmatpush1.msra.mxu0 %v834
    %1551 = vmatprep.subr.mxu0 %v842
    %1552 = vmatpush1.msra.mxu0 %v841
    %1553 = vmatprep.subr.mxu0 %v849
    %1554 = vmatpush1.msra.mxu0 %v848
    %1555 = vmatprep.subr.mxu0 %v856
    %1556 = vmatpush1.msra.mxu0 %v855
    %1557 = vmatprep.subr.mxu0 %v863
    %1558 = vmatpush1.msra.mxu0 %v862
    %1559 = vmatprep.subr.mxu0 %v870
    %1560 = vmatpush1.msra.mxu0 %v869
    %1561 = vmatprep.subr.mxu0 %v877
    %1562 = vmatpush1.msra.mxu0 %v876
    %1563 = vmatprep.subr.mxu0 %v884
    %1564 = vmatpush1.msra.mxu0 %v883
    %1565 = vmatprep.subr.mxu0 %v891
    %1566 = vmatpush1.msra.mxu0 %v890
    %1567 = vmatprep.subr.mxu0 %v898
    %1568 = vmatpush1.msra.mxu0 %v897
    %1569 = vmatprep.subr.mxu0 %v905
    %1570 = vmatpush1.msra.mxu0 %v904
    %1571 = vmatprep.subr.mxu0 %v912
    %1572 = vmatpush1.msra.mxu0 %v911
    %1573 = vmatprep.subr.mxu0 %v919
    %1574 = vmatpush1.msra.mxu0 %v918
    %1575 = vmatprep.subr.mxu0 %v926
    %1576 = vmatpush1.msra.mxu0 %v925
    %1577 = vmatprep.subr.mxu0 %v933
    %1578 = vmatpush1.msra.mxu0 %v932
    %1579 = vmatprep.mubr.f32.mxu0 %v1009
    %1580 = vmatmul.mubr.f32.gmra.mrb[0].mxu0 %v1007
    %v1581 = vpop.f32.mrb[0].mxu0
    %v1582 = vadd.f32 %v1511, %v1581
    %v1583 = vpop.f32.mrb[0].mxu0
    %v1584 = vadd.f32 %v1513, %v1583
    %1585 = vdwg.mxu0
    %1586 = vmatprep.subr.mxu0 %v46
    %1587 = vmatpush1.msra.mxu0 %v45
    %1588 = vmatprep.subr.mxu0 %v53
    %1589 = vmatpush1.msra.mxu0 %v52
    %1590 = vmatprep.subr.mxu0 %v60
    %1591 = vmatpush1.msra.mxu0 %v59
    %1592 = vmatprep.subr.mxu0 %v67
    %1593 = vmatpush1.msra.mxu0 %v66
    %1594 = vmatprep.subr.mxu0 %v74
    %1595 = vmatpush1.msra.mxu0 %v73
    %1596 = vmatprep.subr.mxu0 %v81
    %1597 = vmatpush1.msra.mxu0 %v80
    %1598 = vmatprep.subr.mxu0 %v88
    %1599 = vmatpush1.msra.mxu0 %v87
    %1600 = vmatprep.subr.mxu0 %v95
    %1601 = vmatpush1.msra.mxu0 %v94
    %1602 = vmatprep.subr.mxu0 %v102
    %1603 = vmatpush1.msra.mxu0 %v101
    %1604 = vmatprep.subr.mxu0 %v109
    %1605 = vmatpush1.msra.mxu0 %v108
    %1606 = vmatprep.subr.mxu0 %v116
    %1607 = vmatpush1.msra.mxu0 %v115
    %1608 = vmatprep.subr.mxu0 %v123
    %1609 = vmatpush1.msra.mxu0 %v122
    %1610 = vmatprep.subr.mxu0 %v130
    %1611 = vmatpush1.msra.mxu0 %v129
    %1612 = vmatprep.subr.mxu0 %v137
    %1613 = vmatpush1.msra.mxu0 %v136
    %1614 = vmatprep.subr.mxu0 %v144
    %1615 = vmatpush1.msra.mxu0 %v143
    %1616 = vmatprep.subr.mxu0 %v151
    %1617 = vmatpush1.msra.mxu0 %v150
    %1618 = vmatprep.subr.mxu0 %v158
    %1619 = vmatpush1.msra.mxu0 %v157
    %1620 = vmatprep.subr.mxu0 %v165
    %1621 = vmatpush1.msra.mxu0 %v164
    %1622 = vmatprep.subr.mxu0 %v172
    %1623 = vmatpush1.msra.mxu0 %v171
    %1624 = vmatprep.subr.mxu0 %v179
    %1625 = vmatpush1.msra.mxu0 %v178
    %1626 = vmatprep.subr.mxu0 %v186
    %1627 = vmatpush1.msra.mxu0 %v185
    %1628 = vmatprep.subr.mxu0 %v193
    %1629 = vmatpush1.msra.mxu0 %v192
    %1630 = vmatprep.subr.mxu0 %v200
    %1631 = vmatpush1.msra.mxu0 %v199
    %1632 = vmatprep.subr.mxu0 %v207
    %1633 = vmatpush1.msra.mxu0 %v206
    %1634 = vmatprep.subr.mxu0 %v214
    %1635 = vmatpush1.msra.mxu0 %v213
    %1636 = vmatprep.subr.mxu0 %v221
    %1637 = vmatpush1.msra.mxu0 %v220
    %1638 = vmatprep.subr.mxu0 %v228
    %1639 = vmatpush1.msra.mxu0 %v227
    %1640 = vmatprep.subr.mxu0 %v235
    %1641 = vmatpush1.msra.mxu0 %v234
    %1642 = vmatprep.subr.mxu0 %v242
    %1643 = vmatpush1.msra.mxu0 %v241
    %1644 = vmatprep.subr.mxu0 %v249
    %1645 = vmatpush1.msra.mxu0 %v248
    %1646 = vmatprep.subr.mxu0 %v256
    %1647 = vmatpush1.msra.mxu0 %v255
    %1648 = vmatprep.subr.mxu0 %v263
    %1649 = vmatpush1.msra.mxu0 %v262
    %1650 = vmatprep.mubr.f32.mxu0 %v991
    %1651 = vmatmul.mubr.f32.gmra.mrb[0].mxu0 %v983
    %v1652 = vpop.f32.mrb[0].mxu0
    %v1653 = vadd.f32 %v958, %v1652
    %v1654 = vpop.f32.mrb[0].mxu0
    %v1655 = vadd.f32 %v962, %v1654
    %1656 = vdwg.mxu0
    %1657 = vmatprep.subr.mxu0 %v270
    %1658 = vmatpush1.msra.mxu0 %v269
    %1659 = vmatprep.subr.mxu0 %v277
    %1660 = vmatpush1.msra.mxu0 %v276
    %1661 = vmatprep.subr.mxu0 %v284
    %1662 = vmatpush1.msra.mxu0 %v283
    %1663 = vmatprep.subr.mxu0 %v291
    %1664 = vmatpush1.msra.mxu0 %v290
    %1665 = vmatprep.subr.mxu0 %v298
    %1666 = vmatpush1.msra.mxu0 %v297
    %1667 = vmatprep.subr.mxu0 %v305
    %1668 = vmatpush1.msra.mxu0 %v304
    %1669 = vmatprep.subr.mxu0 %v312
    %1670 = vmatpush1.msra.mxu0 %v311
    %1671 = vmatprep.subr.mxu0 %v319
    %1672 = vmatpush1.msra.mxu0 %v318
    %1673 = vmatprep.subr.mxu0 %v326
    %1674 = vmatpush1.msra.mxu0 %v325
    %1675 = vmatprep.subr.mxu0 %v333
    %1676 = vmatpush1.msra.mxu0 %v332
    %1677 = vmatprep.subr.mxu0 %v340
    %1678 = vmatpush1.msra.mxu0 %v339
    %1679 = vmatprep.subr.mxu0 %v347
    %1680 = vmatpush1.msra.mxu0 %v346
    %1681 = vmatprep.subr.mxu0 %v354
    %1682 = vmatpush1.msra.mxu0 %v353
    %1683 = vmatprep.subr.mxu0 %v361
    %1684 = vmatpush1.msra.mxu0 %v360
    %1685 = vmatprep.subr.mxu0 %v368
    %1686 = vmatpush1.msra.mxu0 %v367
    %1687 = vmatprep.subr.mxu0 %v375
    %1688 = vmatpush1.msra.mxu0 %v374
    %1689 = vmatprep.subr.mxu0 %v382
    %1690 = vmatpush1.msra.mxu0 %v381
    %1691 = vmatprep.subr.mxu0 %v389
    %1692 = vmatpush1.msra.mxu0 %v388
    %1693 = vmatprep.subr.mxu0 %v396
    %1694 = vmatpush1.msra.mxu0 %v395
    %1695 = vmatprep.subr.mxu0 %v403
    %1696 = vmatpush1.msra.mxu0 %v402
    %1697 = vmatprep.subr.mxu0 %v410
    %1698 = vmatpush1.msra.mxu0 %v409
    %1699 = vmatprep.subr.mxu0 %v417
    %1700 = vmatpush1.msra.mxu0 %v416
    %1701 = vmatprep.subr.mxu0 %v424
    %1702 = vmatpush1.msra.mxu0 %v423
    %1703 = vmatprep.subr.mxu0 %v431
    %1704 = vmatpush1.msra.mxu0 %v430
    %1705 = vmatprep.subr.mxu0 %v438
    %1706 = vmatpush1.msra.mxu0 %v437
    %1707 = vmatprep.subr.mxu0 %v445
    %1708 = vmatpush1.msra.mxu0 %v444
    %1709 = vmatprep.subr.mxu0 %v452
    %1710 = vmatpush1.msra.mxu0 %v451
    %1711 = vmatprep.subr.mxu0 %v459
    %1712 = vmatpush1.msra.mxu0 %v458
    %1713 = vmatprep.subr.mxu0 %v466
    %1714 = vmatpush1.msra.mxu0 %v465
    %1715 = vmatprep.subr.mxu0 %v473
    %1716 = vmatpush1.msra.mxu0 %v472
    %1717 = vmatprep.subr.mxu0 %v480
    %1718 = vmatpush1.msra.mxu0 %v479
    %1719 = vmatprep.subr.mxu0 %v487
    %1720 = vmatpush1.msra.mxu0 %v486
    %1721 = vmatprep.mubr.f32.mxu0 %v992
    %1722 = vmatmul.mubr.f32.gmra.mrb[0].mxu0 %v990
    %v1723 = vpop.f32.mrb[0].mxu0
    %v1724 = vadd.f32 %v1653, %v1723
    %v1725 = vpop.f32.mrb[0].mxu0
    %v1726 = vadd.f32 %v1655, %v1725
    %1727 = vdwg.mxu0
    %1728 = vmatprep.subr.mxu0 %v494
    %1729 = vmatpush1.msra.mxu0 %v493
    %1730 = vmatprep.subr.mxu0 %v501
    %1731 = vmatpush1.msra.mxu0 %v500
    %1732 = vmatprep.subr.mxu0 %v508
    %1733 = vmatpush1.msra.mxu0 %v507
    %1734 = vmatprep.subr.mxu0 %v515
    %1735 = vmatpush1.msra.mxu0 %v514
    %1736 = vmatprep.subr.mxu0 %v522
    %1737 = vmatpush1.msra.mxu0 %v521
    %1738 = vmatprep.subr.mxu0 %v529
    %1739 = vmatpush1.msra.mxu0 %v528
    %1740 = vmatprep.subr.mxu0 %v536
    %1741 = vmatpush1.msra.mxu0 %v535
    %1742 = vmatprep.subr.mxu0 %v543
    %1743 = vmatpush1.msra.mxu0 %v542
    %1744 = vmatprep.subr.mxu0 %v550
    %1745 = vmatpush1.msra.mxu0 %v549
    %1746 = vmatprep.subr.mxu0 %v557
    %1747 = vmatpush1.msra.mxu0 %v556
    %1748 = vmatprep.subr.mxu0 %v564
    %1749 = vmatpush1.msra.mxu0 %v563
    %1750 = vmatprep.subr.mxu0 %v571
    %1751 = vmatpush1.msra.mxu0 %v570
    %1752 = vmatprep.subr.mxu0 %v578
    %1753 = vmatpush1.msra.mxu0 %v577
    %1754 = vmatprep.subr.mxu0 %v585
    %1755 = vmatpush1.msra.mxu0 %v584
    %1756 = vmatprep.subr.mxu0 %v592
    %1757 = vmatpush1.msra.mxu0 %v591
    %1758 = vmatprep.subr.mxu0 %v599
    %1759 = vmatpush1.msra.mxu0 %v598
    %1760 = vmatprep.subr.mxu0 %v606
    %1761 = vmatpush1.msra.mxu0 %v605
    %1762 = vmatprep.subr.mxu0 %v613
    %1763 = vmatpush1.msra.mxu0 %v612
    %1764 = vmatprep.subr.mxu0 %v620
    %1765 = vmatpush1.msra.mxu0 %v619
    %1766 = vmatprep.subr.mxu0 %v627
    %1767 = vmatpush1.msra.mxu0 %v626
    %1768 = vmatprep.subr.mxu0 %v634
    %1769 = vmatpush1.msra.mxu0 %v633
    %1770 = vmatprep.subr.mxu0 %v641
    %1771 = vmatpush1.msra.mxu0 %v640
    %1772 = vmatprep.subr.mxu0 %v648
    %1773 = vmatpush1.msra.mxu0 %v647
    %1774 = vmatprep.subr.mxu0 %v655
    %1775 = vmatpush1.msra.mxu0 %v654
    %1776 = vmatprep.subr.mxu0 %v662
    %1777 = vmatpush1.msra.mxu0 %v661
    %1778 = vmatprep.subr.mxu0 %v669
    %1779 = vmatpush1.msra.mxu0 %v668
    %1780 = vmatprep.subr.mxu0 %v676
    %1781 = vmatpush1.msra.mxu0 %v675
    %1782 = vmatprep.subr.mxu0 %v683
    %1783 = vmatpush1.msra.mxu0 %v682
    %1784 = vmatprep.subr.mxu0 %v690
    %1785 = vmatpush1.msra.mxu0 %v689
    %1786 = vmatprep.subr.mxu0 %v697
    %1787 = vmatpush1.msra.mxu0 %v696
    %1788 = vmatprep.subr.mxu0 %v704
    %1789 = vmatpush1.msra.mxu0 %v703
    %1790 = vmatprep.subr.mxu0 %v711
    %1791 = vmatpush1.msra.mxu0 %v710
    %1792 = vmatprep.mubr.f32.mxu0 %v1008
    %1793 = vmatmul.mubr.f32.gmra.mrb[0].mxu0 %v1000
    %v1794 = vpop.f32.mrb[0].mxu0
    %v1795 = vadd.f32 %v1724, %v1794
    %v1796 = vpop.f32.mrb[0].mxu0
    %v1797 = vadd.f32 %v1726, %v1796
    %1798 = vdwg.mxu0
    %1799 = vmatprep.subr.mxu0 %v718
    %1800 = vmatpush1.msra.mxu0 %v717
    %1801 = vmatprep.subr.mxu0 %v725
    %1802 = vmatpush1.msra.mxu0 %v724
    %1803 = vmatprep.subr.mxu0 %v732
    %1804 = vmatpush1.msra.mxu0 %v731
    %1805 = vmatprep.subr.mxu0 %v739
    %1806 = vmatpush1.msra.mxu0 %v738
    %1807 = vmatprep.subr.mxu0 %v746
    %1808 = vmatpush1.msra.mxu0 %v745
    %1809 = vmatprep.subr.mxu0 %v753
    %1810 = vmatpush1.msra.mxu0 %v752
    %1811 = vmatprep.subr.mxu0 %v760
    %1812 = vmatpush1.msra.mxu0 %v759
    %1813 = vmatprep.subr.mxu0 %v767
    %1814 = vmatpush1.msra.mxu0 %v766
    %1815 = vmatprep.subr.mxu0 %v774
    %1816 = vmatpush1.msra.mxu0 %v773
    %1817 = vmatprep.subr.mxu0 %v781
    %1818 = vmatpush1.msra.mxu0 %v780
    %1819 = vmatprep.subr.mxu0 %v788
    %1820 = vmatpush1.msra.mxu0 %v787
    %1821 = vmatprep.subr.mxu0 %v795
    %1822 = vmatpush1.msra.mxu0 %v794
    %1823 = vmatprep.subr.mxu0 %v802
    %1824 = vmatpush1.msra.mxu0 %v801
    %1825 = vmatprep.subr.mxu0 %v809
    %1826 = vmatpush1.msra.mxu0 %v808
    %1827 = vmatprep.subr.mxu0 %v816
    %1828 = vmatpush1.msra.mxu0 %v815
    %1829 = vmatprep.subr.mxu0 %v823
    %1830 = vmatpush1.msra.mxu0 %v822
    %1831 = vmatprep.subr.mxu0 %v830
    %1832 = vmatpush1.msra.mxu0 %v829
    %1833 = vmatprep.subr.mxu0 %v837
    %1834 = vmatpush1.msra.mxu0 %v836
    %1835 = vmatprep.subr.mxu0 %v844
    %1836 = vmatpush1.msra.mxu0 %v843
    %1837 = vmatprep.subr.mxu0 %v851
    %1838 = vmatpush1.msra.mxu0 %v850
    %1839 = vmatprep.subr.mxu0 %v858
    %1840 = vmatpush1.msra.mxu0 %v857
    %1841 = vmatprep.subr.mxu0 %v865
    %1842 = vmatpush1.msra.mxu0 %v864
    %1843 = vmatprep.subr.mxu0 %v872
    %1844 = vmatpush1.msra.mxu0 %v871
    %1845 = vmatprep.subr.mxu0 %v879
    %1846 = vmatpush1.msra.mxu0 %v878
    %1847 = vmatprep.subr.mxu0 %v886
    %1848 = vmatpush1.msra.mxu0 %v885
    %1849 = vmatprep.subr.mxu0 %v893
    %1850 = vmatpush1.msra.mxu0 %v892
    %1851 = vmatprep.subr.mxu0 %v900
    %1852 = vmatpush1.msra.mxu0 %v899
    %1853 = vmatprep.subr.mxu0 %v907
    %1854 = vmatpush1.msra.mxu0 %v906
    %1855 = vmatprep.subr.mxu0 %v914
    %1856 = vmatpush1.msra.mxu0 %v913
    %1857 = vmatprep.subr.mxu0 %v921
    %1858 = vmatpush1.msra.mxu0 %v920
    %1859 = vmatprep.subr.mxu0 %v928
    %1860 = vmatpush1.msra.mxu0 %v927
    %1861 = vmatprep.subr.mxu0 %v935
    %1862 = vmatpush1.msra.mxu0 %v934
    %1863 = vmatprep.mubr.f32.mxu0 %v1009
    %1864 = vmatmul.mubr.f32.gmra.mrb[0].mxu0 %v1007
    %v1865 = vpop.f32.mrb[0].mxu0
    %v1866 = vadd.f32 %v1795, %v1865
    %v1867 = vpop.f32.mrb[0].mxu0
    %v1868 = vadd.f32 %v1797, %v1867
    %1869 = vdwg.mxu0
    %1870 = vmatprep.subr.mxu0 0.0
    %1871 = vmatpush1.msra.mxu0 %v47
    %1872 = vmatprep.subr.mxu0 0.0
    %1873 = vmatpush1.msra.mxu0 %v54
    %1874 = vmatprep.subr.mxu0 0.0
    %1875 = vmatpush1.msra.mxu0 %v61
    %1876 = vmatprep.subr.mxu0 0.0
    %1877 = vmatpush1.msra.mxu0 %v68
    %1878 = vmatprep.subr.mxu0 0.0
    %1879 = vmatpush1.msra.mxu0 %v75
    %1880 = vmatprep.subr.mxu0 0.0
    %1881 = vmatpush1.msra.mxu0 %v82
    %1882 = vmatprep.subr.mxu0 0.0
    %1883 = vmatpush1.msra.mxu0 %v89
    %1884 = vmatprep.subr.mxu0 0.0
    %1885 = vmatpush1.msra.mxu0 %v96
    %1886 = vmatprep.subr.mxu0 0.0
    %1887 = vmatpush1.msra.mxu0 %v103
    %1888 = vmatprep.subr.mxu0 0.0
    %1889 = vmatpush1.msra.mxu0 %v110
    %1890 = vmatprep.subr.mxu0 0.0
    %1891 = vmatpush1.msra.mxu0 %v117
    %1892 = vmatprep.subr.mxu0 0.0
    %1893 = vmatpush1.msra.mxu0 %v124
    %1894 = vmatprep.subr.mxu0 0.0
    %1895 = vmatpush1.msra.mxu0 %v131
    %1896 = vmatprep.subr.mxu0 0.0
    %1897 = vmatpush1.msra.mxu0 %v138
    %1898 = vmatprep.subr.mxu0 0.0
    %1899 = vmatpush1.msra.mxu0 %v145
    %1900 = vmatprep.subr.mxu0 0.0
    %1901 = vmatpush1.msra.mxu0 %v152
    %1902 = vmatprep.subr.mxu0 0.0
    %1903 = vmatpush1.msra.mxu0 %v159
    %1904 = vmatprep.subr.mxu0 0.0
    %1905 = vmatpush1.msra.mxu0 %v166
    %1906 = vmatprep.subr.mxu0 0.0
    %1907 = vmatpush1.msra.mxu0 %v173
    %1908 = vmatprep.subr.mxu0 0.0
    %1909 = vmatpush1.msra.mxu0 %v180
    %1910 = vmatprep.subr.mxu0 0.0
    %1911 = vmatpush1.msra.mxu0 %v187
    %1912 = vmatprep.subr.mxu0 0.0
    %1913 = vmatpush1.msra.mxu0 %v194
    %1914 = vmatprep.subr.mxu0 0.0
    %1915 = vmatpush1.msra.mxu0 %v201
    %1916 = vmatprep.subr.mxu0 0.0
    %1917 = vmatpush1.msra.mxu0 %v208
    %1918 = vmatprep.subr.mxu0 0.0
    %1919 = vmatpush1.msra.mxu0 %v215
    %1920 = vmatprep.subr.mxu0 0.0
    %1921 = vmatpush1.msra.mxu0 %v222
    %1922 = vmatprep.subr.mxu0 0.0
    %1923 = vmatpush1.msra.mxu0 %v229
    %1924 = vmatprep.subr.mxu0 0.0
    %1925 = vmatpush1.msra.mxu0 %v236
    %1926 = vmatprep.subr.mxu0 0.0
    %1927 = vmatpush1.msra.mxu0 %v243
    %1928 = vmatprep.subr.mxu0 0.0
    %1929 = vmatpush1.msra.mxu0 %v250
    %1930 = vmatprep.subr.mxu0 0.0
    %1931 = vmatpush1.msra.mxu0 %v257
    %1932 = vmatprep.subr.mxu0 0.0
    %1933 = vmatpush1.msra.mxu0 %v264
    %1934 = vmatprep.mubr.f32.mxu0 %v991
    %1935 = vmatmul.mubr.f32.gmra.mrb[0].mxu0 %v983
    %v1936 = vpop.f32.mrb[0].mxu0
    %v1937 = vadd.f32 %v966, %v1936
    %v1938 = vpop.f32.mrb[0].mxu0
    %1939 = vdwg.mxu0
    %1940 = vmatprep.subr.mxu0 0.0
    %1941 = vmatpush1.msra.mxu0 %v271
    %1942 = vmatprep.subr.mxu0 0.0
    %1943 = vmatpush1.msra.mxu0 %v278
    %1944 = vmatprep.subr.mxu0 0.0
    %1945 = vmatpush1.msra.mxu0 %v285
    %1946 = vmatprep.subr.mxu0 0.0
    %1947 = vmatpush1.msra.mxu0 %v292
    %1948 = vmatprep.subr.mxu0 0.0
    %1949 = vmatpush1.msra.mxu0 %v299
    %1950 = vmatprep.subr.mxu0 0.0
    %1951 = vmatpush1.msra.mxu0 %v306
    %1952 = vmatprep.subr.mxu0 0.0
    %1953 = vmatpush1.msra.mxu0 %v313
    %1954 = vmatprep.subr.mxu0 0.0
    %1955 = vmatpush1.msra.mxu0 %v320
    %1956 = vmatprep.subr.mxu0 0.0
    %1957 = vmatpush1.msra.mxu0 %v327
    %1958 = vmatprep.subr.mxu0 0.0
    %1959 = vmatpush1.msra.mxu0 %v334
    %1960 = vmatprep.subr.mxu0 0.0
    %1961 = vmatpush1.msra.mxu0 %v341
    %1962 = vmatprep.subr.mxu0 0.0
    %1963 = vmatpush1.msra.mxu0 %v348
    %1964 = vmatprep.subr.mxu0 0.0
    %1965 = vmatpush1.msra.mxu0 %v355
    %1966 = vmatprep.subr.mxu0 0.0
    %1967 = vmatpush1.msra.mxu0 %v362
    %1968 = vmatprep.subr.mxu0 0.0
    %1969 = vmatpush1.msra.mxu0 %v369
    %1970 = vmatprep.subr.mxu0 0.0
    %1971 = vmatpush1.msra.mxu0 %v376
    %1972 = vmatprep.subr.mxu0 0.0
    %1973 = vmatpush1.msra.mxu0 %v383
    %1974 = vmatprep.subr.mxu0 0.0
    %1975 = vmatpush1.msra.mxu0 %v390
    %1976 = vmatprep.subr.mxu0 0.0
    %1977 = vmatpush1.msra.mxu0 %v397
    %1978 = vmatprep.subr.mxu0 0.0
    %1979 = vmatpush1.msra.mxu0 %v404
    %1980 = vmatprep.subr.mxu0 0.0
    %1981 = vmatpush1.msra.mxu0 %v411
    %1982 = vmatprep.subr.mxu0 0.0
    %1983 = vmatpush1.msra.mxu0 %v418
    %1984 = vmatprep.subr.mxu0 0.0
    %1985 = vmatpush1.msra.mxu0 %v425
    %1986 = vmatprep.subr.mxu0 0.0
    %1987 = vmatpush1.msra.mxu0 %v432
    %1988 = vmatprep.subr.mxu0 0.0
    %1989 = vmatpush1.msra.mxu0 %v439
    %1990 = vmatprep.subr.mxu0 0.0
    %1991 = vmatpush1.msra.mxu0 %v446
    %1992 = vmatprep.subr.mxu0 0.0
    %1993 = vmatpush1.msra.mxu0 %v453
    %1994 = vmatprep.subr.mxu0 0.0
    %1995 = vmatpush1.msra.mxu0 %v460
    %1996 = vmatprep.subr.mxu0 0.0
    %1997 = vmatpush1.msra.mxu0 %v467
    %1998 = vmatprep.subr.mxu0 0.0
    %1999 = vmatpush1.msra.mxu0 %v474
    %2000 = vmatprep.subr.mxu0 0.0
    %2001 = vmatpush1.msra.mxu0 %v481
    %2002 = vmatprep.subr.mxu0 0.0
    %2003 = vmatpush1.msra.mxu0 %v488
    %2004 = vmatprep.mubr.f32.mxu0 %v992
    %2005 = vmatmul.mubr.f32.gmra.mrb[0].mxu0 %v990
    %v2006 = vpop.f32.mrb[0].mxu0
    %v2007 = vadd.f32 %v1937, %v2006
    %v2008 = vpop.f32.mrb[0].mxu0
    %2009 = vdwg.mxu0
    %2010 = vmatprep.subr.mxu0 0.0
    %2011 = vmatpush1.msra.mxu0 %v495
    %2012 = vmatprep.subr.mxu0 0.0
    %2013 = vmatpush1.msra.mxu0 %v502
    %2014 = vmatprep.subr.mxu0 0.0
    %2015 = vmatpush1.msra.mxu0 %v509
    %2016 = vmatprep.subr.mxu0 0.0
    %2017 = vmatpush1.msra.mxu0 %v516
    %2018 = vmatprep.subr.mxu0 0.0
    %2019 = vmatpush1.msra.mxu0 %v523
    %2020 = vmatprep.subr.mxu0 0.0
    %2021 = vmatpush1.msra.mxu0 %v530
    %2022 = vmatprep.subr.mxu0 0.0
    %2023 = vmatpush1.msra.mxu0 %v537
    %2024 = vmatprep.subr.mxu0 0.0
    %2025 = vmatpush1.msra.mxu0 %v544
    %2026 = vmatprep.subr.mxu0 0.0
    %2027 = vmatpush1.msra.mxu0 %v551
    %2028 = vmatprep.subr.mxu0 0.0
    %2029 = vmatpush1.msra.mxu0 %v558
    %2030 = vmatprep.subr.mxu0 0.0
    %2031 = vmatpush1.msra.mxu0 %v565
    %2032 = vmatprep.subr.mxu0 0.0
    %2033 = vmatpush1.msra.mxu0 %v572
    %2034 = vmatprep.subr.mxu0 0.0
    %2035 = vmatpush1.msra.mxu0 %v579
    %2036 = vmatprep.subr.mxu0 0.0
    %2037 = vmatpush1.msra.mxu0 %v586
    %2038 = vmatprep.subr.mxu0 0.0
    %2039 = vmatpush1.msra.mxu0 %v593
    %2040 = vmatprep.subr.mxu0 0.0
    %2041 = vmatpush1.msra.mxu0 %v600
    %2042 = vmatprep.subr.mxu0 0.0
    %2043 = vmatpush1.msra.mxu0 %v607
    %2044 = vmatprep.subr.mxu0 0.0
    %2045 = vmatpush1.msra.mxu0 %v614
    %2046 = vmatprep.subr.mxu0 0.0
    %2047 = vmatpush1.msra.mxu0 %v621
    %2048 = vmatprep.subr.mxu0 0.0
    %2049 = vmatpush1.msra.mxu0 %v628
    %2050 = vmatprep.subr.mxu0 0.0
    %2051 = vmatpush1.msra.mxu0 %v635
    %2052 = vmatprep.subr.mxu0 0.0
    %2053 = vmatpush1.msra.mxu0 %v642
    %2054 = vmatprep.subr.mxu0 0.0
    %2055 = vmatpush1.msra.mxu0 %v649
    %2056 = vmatprep.subr.mxu0 0.0
    %2057 = vmatpush1.msra.mxu0 %v656
    %2058 = vmatprep.subr.mxu0 0.0
    %2059 = vmatpush1.msra.mxu0 %v663
    %2060 = vmatprep.subr.mxu0 0.0
    %2061 = vmatpush1.msra.mxu0 %v670
    %2062 = vmatprep.subr.mxu0 0.0
    %2063 = vmatpush1.msra.mxu0 %v677
    %2064 = vmatprep.subr.mxu0 0.0
    %2065 = vmatpush1.msra.mxu0 %v684
    %2066 = vmatprep.subr.mxu0 0.0
    %2067 = vmatpush1.msra.mxu0 %v691
    %2068 = vmatprep.subr.mxu0 0.0
    %2069 = vmatpush1.msra.mxu0 %v698
    %2070 = vmatprep.subr.mxu0 0.0
    %2071 = vmatpush1.msra.mxu0 %v705
    %2072 = vmatprep.subr.mxu0 0.0
    %2073 = vmatpush1.msra.mxu0 %v712
    %2074 = vmatprep.mubr.f32.mxu0 %v1008
    %2075 = vmatmul.mubr.f32.gmra.mrb[0].mxu0 %v1000
    %v2076 = vpop.f32.mrb[0].mxu0
    %v2077 = vadd.f32 %v2007, %v2076
    %v2078 = vpop.f32.mrb[0].mxu0
    %2079 = vdwg.mxu0
    %2080 = vmatprep.subr.mxu0 0.0
    %2081 = vmatpush1.msra.mxu0 %v719
    %2082 = vmatprep.subr.mxu0 0.0
    %2083 = vmatpush1.msra.mxu0 %v726
    %2084 = vmatprep.subr.mxu0 0.0
    %2085 = vmatpush1.msra.mxu0 %v733
    %2086 = vmatprep.subr.mxu0 0.0
    %2087 = vmatpush1.msra.mxu0 %v740
    %2088 = vmatprep.subr.mxu0 0.0
    %2089 = vmatpush1.msra.mxu0 %v747
    %2090 = vmatprep.subr.mxu0 0.0
    %2091 = vmatpush1.msra.mxu0 %v754
    %2092 = vmatprep.subr.mxu0 0.0
    %2093 = vmatpush1.msra.mxu0 %v761
    %2094 = vmatprep.subr.mxu0 0.0
    %2095 = vmatpush1.msra.mxu0 %v768
    %2096 = vmatprep.subr.mxu0 0.0
    %2097 = vmatpush1.msra.mxu0 %v775
    %2098 = vmatprep.subr.mxu0 0.0
    %2099 = vmatpush1.msra.mxu0 %v782
    %2100 = vmatprep.subr.mxu0 0.0
    %2101 = vmatpush1.msra.mxu0 %v789
    %2102 = vmatprep.subr.mxu0 0.0
    %2103 = vmatpush1.msra.mxu0 %v796
    %2104 = vmatprep.subr.mxu0 0.0
    %2105 = vmatpush1.msra.mxu0 %v803
    %2106 = vmatprep.subr.mxu0 0.0
    %2107 = vmatpush1.msra.mxu0 %v810
    %2108 = vmatprep.subr.mxu0 0.0
    %2109 = vmatpush1.msra.mxu0 %v817
    %2110 = vmatprep.subr.mxu0 0.0
    %2111 = vmatpush1.msra.mxu0 %v824
    %2112 = vmatprep.subr.mxu0 0.0
    %2113 = vmatpush1.msra.mxu0 %v831
    %2114 = vmatprep.subr.mxu0 0.0
    %2115 = vmatpush1.msra.mxu0 %v838
    %2116 = vmatprep.subr.mxu0 0.0
    %2117 = vmatpush1.msra.mxu0 %v845
    %2118 = vmatprep.subr.mxu0 0.0
    %2119 = vmatpush1.msra.mxu0 %v852
    %2120 = vmatprep.subr.mxu0 0.0
    %2121 = vmatpush1.msra.mxu0 %v859
    %2122 = vmatprep.subr.mxu0 0.0
    %2123 = vmatpush1.msra.mxu0 %v866
    %2124 = vmatprep.subr.mxu0 0.0
    %2125 = vmatpush1.msra.mxu0 %v873
    %2126 = vmatprep.subr.mxu0 0.0
    %2127 = vmatpush1.msra.mxu0 %v880
    %2128 = vmatprep.subr.mxu0 0.0
    %2129 = vmatpush1.msra.mxu0 %v887
    %2130 = vmatprep.subr.mxu0 0.0
    %2131 = vmatpush1.msra.mxu0 %v894
    %2132 = vmatprep.subr.mxu0 0.0
    %2133 = vmatpush1.msra.mxu0 %v901
    %2134 = vmatprep.subr.mxu0 0.0
    %2135 = vmatpush1.msra.mxu0 %v908
    %2136 = vmatprep.subr.mxu0 0.0
    %2137 = vmatpush1.msra.mxu0 %v915
    %2138 = vmatprep.subr.mxu0 0.0
    %2139 = vmatpush1.msra.mxu0 %v922
    %2140 = vmatprep.subr.mxu0 0.0
    %2141 = vmatpush1.msra.mxu0 %v929
    %2142 = vmatprep.subr.mxu0 0.0
    %2143 = vmatpush1.msra.mxu0 %v936
    %2144 = vmatprep.mubr.f32.mxu0 %v1009
    %2145 = vmatmul.mubr.f32.gmra.mrb[0].mxu0 %v1007
    %v2146 = vpop.f32.mrb[0].mxu0
    %v2147 = vadd.f32 %v2077, %v2146
    %v2148 = vpop.f32.mrb[0].mxu0
    %2149 = vdwg.mxu0
    %v2150 = vmax.f32 %v1298, 0.0
    %v2151 = vmax.f32 %v1300, 0.0
    %v2152 = vmax.f32 %v1582, 0.0
    %v2153 = vmax.f32 %v1584, 0.0
    %v2154 = vmax.f32 %v1866, 0.0
    %v2155 = vmax.f32 %v1868, 0.0
    %v2156 = vmax.f32 %v2147, 0.0
    %v2157 = vld [vmem:[%s3] sm:$0xff]
    %v2158 = vld [vmem:[%s3 + $0x8] sm:$0xff]
    %v2159 = vld [vmem:[%s3 + $0x10] sm:$0xff]
    %v2160 = vld [vmem:[%s3 + $0x18] sm:$0xff]
    %v2161 = vld [vmem:[%s3 + $0x20] sm:$0xff]
    %v2162 = vld [vmem:[%s3 + $0x28] sm:$0xff]
    %v2163 = vld [vmem:[%s3 + $0x30] sm:$0xff]
    %v2164 = vld [vmem:[%s3 + $0x38] sm:$0xff]
    %v2165 = vld [vmem:[%s3 + $0x40] sm:$0xff]
    %v2166 = vld [vmem:[%s3 + $0x48] sm:$0xff]
    %v2167 = vld [vmem:[%s3 + $0x50] sm:$0xff]
    %v2168 = vld [vmem:[%s3 + $0x58] sm:$0xff]
    %v2169 = vld [vmem:[%s3 + $0x60] sm:$0xff]
    %v2170 = vld [vmem:[%s3 + $0x68] sm:$0xff]
    %v2171 = vld [vmem:[%s3 + $0x70] sm:$0xff]
    %v2172 = vld [vmem:[%s3 + $0x78] sm:$0xff]
    %v2173 = vld [vmem:[%s3 + $0x80] sm:$0xff]
    %v2174 = vld [vmem:[%s3 + $0x88] sm:$0xff]
    %v2175 = vld [vmem:[%s3 + $0x90] sm:$0xff]
    %v2176 = vld [vmem:[%s3 + $0x98] sm:$0xff]
    %v2177 = vld [vmem:[%s3 + $0xa0] sm:$0xff]
    %v2178 = vld [vmem:[%s3 + $0xa8] sm:$0xff]
    %v2179 = vld [vmem:[%s3 + $0xb0] sm:$0xff]
    %v2180 = vld [vmem:[%s3 + $0xb8] sm:$0xff]
    %v2181 = vld [vmem:[%s3 + $0xc0] sm:$0xff]
    %v2182 = vld [vmem:[%s3 + $0xc8] sm:$0xff]
    %v2183 = vld [vmem:[%s3 + $0xd0] sm:$0xff]
    %v2184 = vld [vmem:[%s3 + $0xd8] sm:$0xff]
    %v2185 = vld [vmem:[%s3 + $0xe0] sm:$0xff]
    %v2186 = vld [vmem:[%s3 + $0xe8] sm:$0xff]
    %v2187 = vld [vmem:[%s3 + $0xf0] sm:$0xff]
    %v2188 = vld [vmem:[%s3 + $0xf8] sm:$0xff]
    %v2189 = vld [vmem:[%s3 + $0x100] sm:$0xff]
    %v2190 = vld [vmem:[%s3 + $0x108] sm:$0xff]
    %v2191 = vld [vmem:[%s3 + $0x110] sm:$0xff]
    %v2192 = vld [vmem:[%s3 + $0x118] sm:$0xff]
    %v2193 = vld [vmem:[%s3 + $0x120] sm:$0xff]
    %v2194 = vld [vmem:[%s3 + $0x128] sm:$0xff]
    %v2195 = vld [vmem:[%s3 + $0x130] sm:$0xff]
    %v2196 = vld [vmem:[%s3 + $0x138] sm:$0xff]
    %v2197 = vld [vmem:[%s3 + $0x140] sm:$0xff]
    %v2198 = vld [vmem:[%s3 + $0x148] sm:$0xff]
    %v2199 = vld [vmem:[%s3 + $0x150] sm:$0xff]
    %v2200 = vld [vmem:[%s3 + $0x158] sm:$0xff]
    %v2201 = vld [vmem:[%s3 + $0x160] sm:$0xff]
    %v2202 = vld [vmem:[%s3 + $0x168] sm:$0xff]
    %v2203 = vld [vmem:[%s3 + $0x170] sm:$0xff]
    %v2204 = vld [vmem:[%s3 + $0x178] sm:$0xff]
    %v2205 = vld [vmem:[%s3 + $0x180] sm:$0xff]
    %v2206 = vld [vmem:[%s3 + $0x188] sm:$0xff]
    %v2207 = vld [vmem:[%s3 + $0x190] sm:$0xff]
    %v2208 = vld [vmem:[%s3 + $0x198] sm:$0xff]
    %v2209 = vld [vmem:[%s3 + $0x1a0] sm:$0xff]
    %v2210 = vld [vmem:[%s3 + $0x1a8] sm:$0xff]
    %v2211 = vld [vmem:[%s3 + $0x1b0] sm:$0xff]
    %v2212 = vld [vmem:[%s3 + $0x1b8] sm:$0xff]
    %v2213 = vld [vmem:[%s3 + $0x1c0] sm:$0xff]
    %v2214 = vld [vmem:[%s3 + $0x1c8] sm:$0xff]
    %v2215 = vld [vmem:[%s3 + $0x1d0] sm:$0xff]
    %v2216 = vld [vmem:[%s3 + $0x1d8] sm:$0xff]
    %v2217 = vld [vmem:[%s3 + $0x1e0] sm:$0xff]
    %v2218 = vld [vmem:[%s3 + $0x1e8] sm:$0xff]
    %v2219 = vld [vmem:[%s3 + $0x1f0] sm:$0xff]
    %v2220 = vld [vmem:[%s3 + $0x1f8] sm:$0xff]
    %v2221 = vld [vmem:[%s3 + $0x200] sm:$0xff]
    %v2222 = vld [vmem:[%s3 + $0x208] sm:$0xff]
    %v2223 = vld [vmem:[%s3 + $0x210] sm:$0xff]
    %v2224 = vld [vmem:[%s3 + $0x218] sm:$0xff]
    %v2225 = vld [vmem:[%s3 + $0x220] sm:$0xff]
    %v2226 = vld [vmem:[%s3 + $0x228] sm:$0xff]
    %v2227 = vld [vmem:[%s3 + $0x230] sm:$0xff]
    %v2228 = vld [vmem:[%s3 + $0x238] sm:$0xff]
    %v2229 = vld [vmem:[%s3 + $0x240] sm:$0xff]
    %v2230 = vld [vmem:[%s3 + $0x248] sm:$0xff]
    %v2231 = vld [vmem:[%s3 + $0x250] sm:$0xff]
    %v2232 = vld [vmem:[%s3 + $0x258] sm:$0xff]
    %v2233 = vld [vmem:[%s3 + $0x260] sm:$0xff]
    %v2234 = vld [vmem:[%s3 + $0x268] sm:$0xff]
    %v2235 = vld [vmem:[%s3 + $0x270] sm:$0xff]
    %v2236 = vld [vmem:[%s3 + $0x278] sm:$0xff]
    %v2237 = vld [vmem:[%s3 + $0x280] sm:$0xff]
    %v2238 = vld [vmem:[%s3 + $0x288] sm:$0xff]
    %v2239 = vld [vmem:[%s3 + $0x290] sm:$0xff]
    %v2240 = vld [vmem:[%s3 + $0x298] sm:$0xff]
    %v2241 = vld [vmem:[%s3 + $0x2a0] sm:$0xff]
    %v2242 = vld [vmem:[%s3 + $0x2a8] sm:$0xff]
    %v2243 = vld [vmem:[%s3 + $0x2b0] sm:$0xff]
    %v2244 = vld [vmem:[%s3 + $0x2b8] sm:$0xff]
    %v2245 = vld [vmem:[%s3 + $0x2c0] sm:$0xff]
    %v2246 = vld [vmem:[%s3 + $0x2c8] sm:$0xff]
    %v2247 = vld [vmem:[%s3 + $0x2d0] sm:$0xff]
    %v2248 = vld [vmem:[%s3 + $0x2d8] sm:$0xff]
    %v2249 = vld [vmem:[%s3 + $0x2e0] sm:$0xff]
    %v2250 = vld [vmem:[%s3 + $0x2e8] sm:$0xff]
    %v2251 = vld [vmem:[%s3 + $0x2f0] sm:$0xff]
    %v2252 = vld [vmem:[%s3 + $0x2f8] sm:$0xff]
    %v2253 = vld [vmem:[%s3 + $0x300] sm:$0xff]
    %v2254 = vld [vmem:[%s3 + $0x308] sm:$0xff]
    %v2255 = vld [vmem:[%s3 + $0x310] sm:$0xff]
    %v2256 = vld [vmem:[%s3 + $0x318] sm:$0xff]
    %v2257 = vld [vmem:[%s3 + $0x320] sm:$0xff]
    %v2258 = vld [vmem:[%s3 + $0x328] sm:$0xff]
    %v2259 = vld [vmem:[%s3 + $0x330] sm:$0xff]
    %v2260 = vld [vmem:[%s3 + $0x338] sm:$0xff]
    %v2261 = vld [vmem:[%s3 + $0x340] sm:$0xff]
    %v2262 = vld [vmem:[%s3 + $0x348] sm:$0xff]
    %v2263 = vld [vmem:[%s3 + $0x350] sm:$0xff]
    %v2264 = vld [vmem:[%s3 + $0x358] sm:$0xff]
    %v2265 = vld [vmem:[%s3 + $0x360] sm:$0xff]
    %v2266 = vld [vmem:[%s3 + $0x368] sm:$0xff]
    %v2267 = vld [vmem:[%s3 + $0x370] sm:$0xff]
    %v2268 = vld [vmem:[%s3 + $0x378] sm:$0xff]
    %v2269 = vld [vmem:[%s3 + $0x380] sm:$0xff]
    %v2270 = vld [vmem:[%s3 + $0x388] sm:$0xff]
    %v2271 = vld [vmem:[%s3 + $0x390] sm:$0xff]
    %v2272 = vld [vmem:[%s3 + $0x398] sm:$0xff]
    %v2273 = vld [vmem:[%s3 + $0x3a0] sm:$0xff]
    %v2274 = vld [vmem:[%s3 + $0x3a8] sm:$0xff]
    %v2275 = vld [vmem:[%s3 + $0x3b0] sm:$0xff]
    %v2276 = vld [vmem:[%s3 + $0x3b8] sm:$0xff]
    %v2277 = vld [vmem:[%s3 + $0x3c0] sm:$0xff]
    %v2278 = vld [vmem:[%s3 + $0x3c8] sm:$0xff]
    %v2279 = vld [vmem:[%s3 + $0x3d0] sm:$0xff]
    %v2280 = vld [vmem:[%s3 + $0x3d8] sm:$0xff]
    %v2281 = vld [vmem:[%s3 + $0x3e0] sm:$0xff]
    %v2282 = vld [vmem:[%s3 + $0x3e8] sm:$0xff]
    %v2283 = vld [vmem:[%s3 + $0x3f0] sm:$0xff]
    %v2284 = vld [vmem:[%s3 + $0x3f8] sm:$0xff]
    %v2285 = vld [vmem:[%s3 + $0x400] sm:$0xff]
    %v2286 = vld [vmem:[%s3 + $0x408] sm:$0xff]
    %v2287 = vld [vmem:[%s3 + $0x410] sm:$0xff]
    %v2288 = vld [vmem:[%s3 + $0x418] sm:$0xff]
    %v2289 = vld [vmem:[%s3 + $0x420] sm:$0xff]
    %v2290 = vld [vmem:[%s3 + $0x428] sm:$0xff]
    %v2291 = vld [vmem:[%s3 + $0x430] sm:$0xff]
    %v2292 = vld [vmem:[%s3 + $0x438] sm:$0xff]
    %v2293 = vld [vmem:[%s3 + $0x440] sm:$0xff]
    %v2294 = vld [vmem:[%s3 + $0x448] sm:$0xff]
    %v2295 = vld [vmem:[%s3 + $0x450] sm:$0xff]
    %v2296 = vld [vmem:[%s3 + $0x458] sm:$0xff]
    %v2297 = vld [vmem:[%s3 + $0x460] sm:$0xff]
    %v2298 = vld [vmem:[%s3 + $0x468] sm:$0xff]
    %v2299 = vld [vmem:[%s3 + $0x470] sm:$0xff]
    %v2300 = vld [vmem:[%s3 + $0x478] sm:$0xff]
    %v2301 = vld [vmem:[%s3 + $0x480] sm:$0xff]
    %v2302 = vld [vmem:[%s3 + $0x488] sm:$0xff]
    %v2303 = vld [vmem:[%s3 + $0x490] sm:$0xff]
    %v2304 = vld [vmem:[%s3 + $0x498] sm:$0xff]
    %v2305 = vld [vmem:[%s3 + $0x4a0] sm:$0xff]
    %v2306 = vld [vmem:[%s3 + $0x4a8] sm:$0xff]
    %v2307 = vld [vmem:[%s3 + $0x4b0] sm:$0xff]
    %v2308 = vld [vmem:[%s3 + $0x4b8] sm:$0xff]
    %v2309 = vld [vmem:[%s3 + $0x4c0] sm:$0xff]
    %v2310 = vld [vmem:[%s3 + $0x4c8] sm:$0xff]
    %v2311 = vld [vmem:[%s3 + $0x4d0] sm:$0xff]
    %v2312 = vld [vmem:[%s3 + $0x4d8] sm:$0xff]
    %v2313 = vld [vmem:[%s3 + $0x4e0] sm:$0xff]
    %v2314 = vld [vmem:[%s3 + $0x4e8] sm:$0xff]
    %v2315 = vld [vmem:[%s3 + $0x4f0] sm:$0xff]
    %v2316 = vld [vmem:[%s3 + $0x4f8] sm:$0xff]
    %v2317 = vld [vmem:[%s3 + $0x500] sm:$0xff]
    %v2318 = vld [vmem:[%s3 + $0x508] sm:$0xff]
    %v2319 = vld [vmem:[%s3 + $0x510] sm:$0xff]
    %v2320 = vld [vmem:[%s3 + $0x518] sm:$0xff]
    %v2321 = vld [vmem:[%s3 + $0x520] sm:$0xff]
    %v2322 = vld [vmem:[%s3 + $0x528] sm:$0xff]
    %v2323 = vld [vmem:[%s3 + $0x530] sm:$0xff]
    %v2324 = vld [vmem:[%s3 + $0x538] sm:$0xff]
    %v2325 = vld [vmem:[%s3 + $0x540] sm:$0xff]
    %v2326 = vld [vmem:[%s3 + $0x548] sm:$0xff]
    %v2327 = vld [vmem:[%s3 + $0x550] sm:$0xff]
    %v2328 = vld [vmem:[%s3 + $0x558] sm:$0xff]
    %v2329 = vld [vmem:[%s3 + $0x560] sm:$0xff]
    %v2330 = vld [vmem:[%s3 + $0x568] sm:$0xff]
    %v2331 = vld [vmem:[%s3 + $0x570] sm:$0xff]
    %v2332 = vld [vmem:[%s3 + $0x578] sm:$0xff]
    %v2333 = vld [vmem:[%s3 + $0x580] sm:$0xff]
    %v2334 = vld [vmem:[%s3 + $0x588] sm:$0xff]
    %v2335 = vld [vmem:[%s3 + $0x590] sm:$0xff]
    %v2336 = vld [vmem:[%s3 + $0x598] sm:$0xff]
    %v2337 = vld [vmem:[%s3 + $0x5a0] sm:$0xff]
    %v2338 = vld [vmem:[%s3 + $0x5a8] sm:$0xff]
    %v2339 = vld [vmem:[%s3 + $0x5b0] sm:$0xff]
    %v2340 = vld [vmem:[%s3 + $0x5b8] sm:$0xff]
    %v2341 = vld [vmem:[%s3 + $0x5c0] sm:$0xff]
    %v2342 = vld [vmem:[%s3 + $0x5c8] sm:$0xff]
    %v2343 = vld [vmem:[%s3 + $0x5d0] sm:$0xff]
    %v2344 = vld [vmem:[%s3 + $0x5d8] sm:$0xff]
    %v2345 = vld [vmem:[%s3 + $0x5e0] sm:$0xff]
    %v2346 = vld [vmem:[%s3 + $0x5e8] sm:$0xff]
    %v2347 = vld [vmem:[%s3 + $0x5f0] sm:$0xff]
    %v2348 = vld [vmem:[%s3 + $0x5f8] sm:$0xff]
    %v2349 = vld [vmem:[%s3 + $0x600] sm:$0xff]
    %v2350 = vld [vmem:[%s3 + $0x608] sm:$0xff]
    %v2351 = vld [vmem:[%s3 + $0x610] sm:$0xff]
    %v2352 = vld [vmem:[%s3 + $0x618] sm:$0xff]
    %v2353 = vld [vmem:[%s3 + $0x620] sm:$0xff]
    %v2354 = vld [vmem:[%s3 + $0x628] sm:$0xff]
    %v2355 = vld [vmem:[%s3 + $0x630] sm:$0xff]
    %v2356 = vld [vmem:[%s3 + $0x638] sm:$0xff]
    %v2357 = vld [vmem:[%s3 + $0x640] sm:$0xff]
    %v2358 = vld [vmem:[%s3 + $0x648] sm:$0xff]
    %v2359 = vld [vmem:[%s3 + $0x650] sm:$0xff]
    %v2360 = vld [vmem:[%s3 + $0x658] sm:$0xff]
    %v2361 = vld [vmem:[%s3 + $0x660] sm:$0xff]
    %v2362 = vld [vmem:[%s3 + $0x668] sm:$0xff]
    %v2363 = vld [vmem:[%s3 + $0x670] sm:$0xff]
    %v2364 = vld [vmem:[%s3 + $0x678] sm:$0xff]
    %v2365 = vld [vmem:[%s3 + $0x680] sm:$0xff]
    %v2366 = vld [vmem:[%s3 + $0x688] sm:$0xff]
    %v2367 = vld [vmem:[%s3 + $0x690] sm:$0xff]
    %v2368 = vld [vmem:[%s3 + $0x698] sm:$0xff]
    %v2369 = vld [vmem:[%s3 + $0x6a0] sm:$0xff]
    %v2370 = vld [vmem:[%s3 + $0x6a8] sm:$0xff]
    %v2371 = vld [vmem:[%s3 + $0x6b0] sm:$0xff]
    %v2372 = vld [vmem:[%s3 + $0x6b8] sm:$0xff]
    %v2373 = vld [vmem:[%s3 + $0x6c0] sm:$0xff]
    %v2374 = vld [vmem:[%s3 + $0x6c8] sm:$0xff]
    %v2375 = vld [vmem:[%s3 + $0x6d0] sm:$0xff]
    %v2376 = vld [vmem:[%s3 + $0x6d8] sm:$0xff]
    %v2377 = vld [vmem:[%s3 + $0x6e0] sm:$0xff]
    %v2378 = vld [vmem:[%s3 + $0x6e8] sm:$0xff]
    %v2379 = vld [vmem:[%s3 + $0x6f0] sm:$0xff]
    %v2380 = vld [vmem:[%s3 + $0x6f8] sm:$0xff]
    %v2381 = vld [vmem:[%s3 + $0x700] sm:$0xff]
    %v2382 = vld [vmem:[%s3 + $0x708] sm:$0xff]
    %v2383 = vld [vmem:[%s3 + $0x710] sm:$0xff]
    %v2384 = vld [vmem:[%s3 + $0x718] sm:$0xff]
    %v2385 = vld [vmem:[%s3 + $0x720] sm:$0xff]
    %v2386 = vld [vmem:[%s3 + $0x728] sm:$0xff]
    %v2387 = vld [vmem:[%s3 + $0x730] sm:$0xff]
    %v2388 = vld [vmem:[%s3 + $0x738] sm:$0xff]
    %v2389 = vld [vmem:[%s3 + $0x740] sm:$0xff]
    %v2390 = vld [vmem:[%s3 + $0x748] sm:$0xff]
    %v2391 = vld [vmem:[%s3 + $0x750] sm:$0xff]
    %v2392 = vld [vmem:[%s3 + $0x758] sm:$0xff]
    %v2393 = vld [vmem:[%s3 + $0x760] sm:$0xff]
    %v2394 = vld [vmem:[%s3 + $0x768] sm:$0xff]
    %v2395 = vld [vmem:[%s3 + $0x770] sm:$0xff]
    %v2396 = vld [vmem:[%s3 + $0x778] sm:$0xff]
    %v2397 = vld [vmem:[%s3 + $0x780] sm:$0xff]
    %v2398 = vld [vmem:[%s3 + $0x788] sm:$0xff]
    %v2399 = vld [vmem:[%s3 + $0x790] sm:$0xff]
    %v2400 = vld [vmem:[%s3 + $0x798] sm:$0xff]
    %v2401 = vld [vmem:[%s3 + $0x7a0] sm:$0xff]
    %v2402 = vld [vmem:[%s3 + $0x7a8] sm:$0xff]
    %v2403 = vld [vmem:[%s3 + $0x7b0] sm:$0xff]
    %v2404 = vld [vmem:[%s3 + $0x7b8] sm:$0xff]
    %v2405 = vld [vmem:[%s3 + $0x7c0] sm:$0xff]
    %v2406 = vld [vmem:[%s3 + $0x7c8] sm:$0xff]
    %v2407 = vld [vmem:[%s3 + $0x7d0] sm:$0xff]
    %v2408 = vld [vmem:[%s3 + $0x7d8] sm:$0xff]
    %v2409 = vld [vmem:[%s3 + $0x7e0] sm:$0xff]
    %v2410 = vld [vmem:[%s3 + $0x7e8] sm:$0xff]
    %v2411 = vld [vmem:[%s3 + $0x7f0] sm:$0xff]
    %v2412 = vld [vmem:[%s3 + $0x7f8] sm:$0xff]
    %v2413 = vld [vmem:[%s3 + $0x800] sm:$0xff]
    %v2414 = vld [vmem:[%s3 + $0x808] sm:$0xff]
    %v2415 = vld [vmem:[%s3 + $0x810] sm:$0xff]
    %v2416 = vld [vmem:[%s3 + $0x818] sm:$0xff]
    %v2417 = vld [vmem:[%s3 + $0x820] sm:$0xff]
    %v2418 = vld [vmem:[%s3 + $0x828] sm:$0xff]
    %v2419 = vld [vmem:[%s3 + $0x830] sm:$0xff]
    %v2420 = vld [vmem:[%s3 + $0x838] sm:$0xff]
    %v2421 = vld [vmem:[%s3 + $0x840] sm:$0xff]
    %v2422 = vld [vmem:[%s3 + $0x848] sm:$0xff]
    %v2423 = vld [vmem:[%s3 + $0x850] sm:$0xff]
    %v2424 = vld [vmem:[%s3 + $0x858] sm:$0xff]
    %v2425 = vld [vmem:[%s3 + $0x860] sm:$0xff]
    %v2426 = vld [vmem:[%s3 + $0x868] sm:$0xff]
    %v2427 = vld [vmem:[%s3 + $0x870] sm:$0xff]
    %v2428 = vld [vmem:[%s3 + $0x878] sm:$0xff]
    %v2429 = vld [vmem:[%s3 + $0x880] sm:$0xff]
    %v2430 = vld [vmem:[%s3 + $0x888] sm:$0xff]
    %v2431 = vld [vmem:[%s3 + $0x890] sm:$0xff]
    %v2432 = vld [vmem:[%s3 + $0x898] sm:$0xff]
    %v2433 = vld [vmem:[%s3 + $0x8a0] sm:$0xff]
    %v2434 = vld [vmem:[%s3 + $0x8a8] sm:$0xff]
    %v2435 = vld [vmem:[%s3 + $0x8b0] sm:$0xff]
    %v2436 = vld [vmem:[%s3 + $0x8b8] sm:$0xff]
    %v2437 = vld [vmem:[%s3 + $0x8c0] sm:$0xff]
    %v2438 = vld [vmem:[%s3 + $0x8c8] sm:$0xff]
    %v2439 = vld [vmem:[%s3 + $0x8d0] sm:$0xff]
    %v2440 = vld [vmem:[%s3 + $0x8d8] sm:$0xff]
    %v2441 = vld [vmem:[%s3 + $0x8e0] sm:$0xff]
    %v2442 = vld [vmem:[%s3 + $0x8e8] sm:$0xff]
    %v2443 = vld [vmem:[%s3 + $0x8f0] sm:$0xff]
    %v2444 = vld [vmem:[%s3 + $0x8f8] sm:$0xff]
    %v2445 = vld [vmem:[%s3 + $0x900] sm:$0xff]
    %v2446 = vld [vmem:[%s3 + $0x908] sm:$0xff]
    %v2447 = vld [vmem:[%s3 + $0x910] sm:$0xff]
    %v2448 = vld [vmem:[%s3 + $0x918] sm:$0xff]
    %v2449 = vld [vmem:[%s3 + $0x920] sm:$0xff]
    %v2450 = vld [vmem:[%s3 + $0x928] sm:$0xff]
    %v2451 = vld [vmem:[%s3 + $0x930] sm:$0xff]
    %v2452 = vld [vmem:[%s3 + $0x938] sm:$0xff]
    %v2453 = vld [vmem:[%s3 + $0x940] sm:$0xff]
    %v2454 = vld [vmem:[%s3 + $0x948] sm:$0xff]
    %v2455 = vld [vmem:[%s3 + $0x950] sm:$0xff]
    %v2456 = vld [vmem:[%s3 + $0x958] sm:$0xff]
    %v2457 = vld [vmem:[%s3 + $0x960] sm:$0xff]
    %v2458 = vld [vmem:[%s3 + $0x968] sm:$0xff]
    %v2459 = vld [vmem:[%s3 + $0x970] sm:$0xff]
    %v2460 = vld [vmem:[%s3 + $0x978] sm:$0xff]
    %v2461 = vld [vmem:[%s3 + $0x980] sm:$0xff]
    %v2462 = vld [vmem:[%s3 + $0x988] sm:$0xff]
    %v2463 = vld [vmem:[%s3 + $0x990] sm:$0xff]
    %v2464 = vld [vmem:[%s3 + $0x998] sm:$0xff]
    %v2465 = vld [vmem:[%s3 + $0x9a0] sm:$0xff]
    %v2466 = vld [vmem:[%s3 + $0x9a8] sm:$0xff]
    %v2467 = vld [vmem:[%s3 + $0x9b0] sm:$0xff]
    %v2468 = vld [vmem:[%s3 + $0x9b8] sm:$0xff]
    %v2469 = vld [vmem:[%s3 + $0x9c0] sm:$0xff]
    %v2470 = vld [vmem:[%s3 + $0x9c8] sm:$0xff]
    %v2471 = vld [vmem:[%s3 + $0x9d0] sm:$0xff]
    %v2472 = vld [vmem:[%s3 + $0x9d8] sm:$0xff]
    %v2473 = vld [vmem:[%s3 + $0x9e0] sm:$0xff]
    %v2474 = vld [vmem:[%s3 + $0x9e8] sm:$0xff]
    %v2475 = vld [vmem:[%s3 + $0x9f0] sm:$0xff]
    %v2476 = vld [vmem:[%s3 + $0x9f8] sm:$0xff]
    %v2477 = vld [vmem:[%s3 + $0xa00] sm:$0xff]
    %v2478 = vld [vmem:[%s3 + $0xa08] sm:$0xff]
    %v2479 = vld [vmem:[%s3 + $0xa10] sm:$0xff]
    %v2480 = vld [vmem:[%s3 + $0xa18] sm:$0xff]
    %v2481 = vld [vmem:[%s3 + $0xa20] sm:$0xff]
    %v2482 = vld [vmem:[%s3 + $0xa28] sm:$0xff]
    %v2483 = vld [vmem:[%s3 + $0xa30] sm:$0xff]
    %v2484 = vld [vmem:[%s3 + $0xa38] sm:$0xff]
    %v2485 = vld [vmem:[%s3 + $0xa40] sm:$0xff]
    %v2486 = vld [vmem:[%s3 + $0xa48] sm:$0xff]
    %v2487 = vld [vmem:[%s3 + $0xa50] sm:$0xff]
    %v2488 = vld [vmem:[%s3 + $0xa58] sm:$0xff]
    %v2489 = vld [vmem:[%s3 + $0xa60] sm:$0xff]
    %v2490 = vld [vmem:[%s3 + $0xa68] sm:$0xff]
    %v2491 = vld [vmem:[%s3 + $0xa70] sm:$0xff]
    %v2492 = vld [vmem:[%s3 + $0xa78] sm:$0xff]
    %v2493 = vld [vmem:[%s3 + $0xa80] sm:$0xff]
    %v2494 = vld [vmem:[%s3 + $0xa88] sm:$0xff]
    %v2495 = vld [vmem:[%s3 + $0xa90] sm:$0xff]
    %v2496 = vld [vmem:[%s3 + $0xa98] sm:$0xff]
    %v2497 = vld [vmem:[%s3 + $0xaa0] sm:$0xff]
    %v2498 = vld [vmem:[%s3 + $0xaa8] sm:$0xff]
    %v2499 = vld [vmem:[%s3 + $0xab0] sm:$0xff]
    %v2500 = vld [vmem:[%s3 + $0xab8] sm:$0xff]
    %v2501 = vld [vmem:[%s3 + $0xac0] sm:$0xff]
    %v2502 = vld [vmem:[%s3 + $0xac8] sm:$0xff]
    %v2503 = vld [vmem:[%s3 + $0xad0] sm:$0xff]
    %v2504 = vld [vmem:[%s3 + $0xad8] sm:$0xff]
    %v2505 = vld [vmem:[%s3 + $0xae0] sm:$0xff]
    %v2506 = vld [vmem:[%s3 + $0xae8] sm:$0xff]
    %v2507 = vld [vmem:[%s3 + $0xaf0] sm:$0xff]
    %v2508 = vld [vmem:[%s3 + $0xaf8] sm:$0xff]
    %v2509 = vld [vmem:[%s3 + $0xb00] sm:$0xff]
    %v2510 = vld [vmem:[%s3 + $0xb08] sm:$0xff]
    %v2511 = vld [vmem:[%s3 + $0xb10] sm:$0xff]
    %v2512 = vld [vmem:[%s3 + $0xb18] sm:$0xff]
    %v2513 = vld [vmem:[%s3 + $0xb20] sm:$0xff]
    %v2514 = vld [vmem:[%s3 + $0xb28] sm:$0xff]
    %v2515 = vld [vmem:[%s3 + $0xb30] sm:$0xff]
    %v2516 = vld [vmem:[%s3 + $0xb38] sm:$0xff]
    %v2517 = vld [vmem:[%s3 + $0xb40] sm:$0xff]
    %v2518 = vld [vmem:[%s3 + $0xb48] sm:$0xff]
    %v2519 = vld [vmem:[%s3 + $0xb50] sm:$0xff]
    %v2520 = vld [vmem:[%s3 + $0xb58] sm:$0xff]
    %v2521 = vld [vmem:[%s3 + $0xb60] sm:$0xff]
    %v2522 = vld [vmem:[%s3 + $0xb68] sm:$0xff]
    %v2523 = vld [vmem:[%s3 + $0xb70] sm:$0xff]
    %v2524 = vld [vmem:[%s3 + $0xb78] sm:$0xff]
    %v2525 = vld [vmem:[%s3 + $0xb80] sm:$0xff]
    %v2526 = vld [vmem:[%s3 + $0xb88] sm:$0xff]
    %v2527 = vld [vmem:[%s3 + $0xb90] sm:$0xff]
    %v2528 = vld [vmem:[%s3 + $0xb98] sm:$0xff]
    %v2529 = vld [vmem:[%s3 + $0xba0] sm:$0xff]
    %v2530 = vld [vmem:[%s3 + $0xba8] sm:$0xff]
    %v2531 = vld [vmem:[%s3 + $0xbb0] sm:$0xff]
    %v2532 = vld [vmem:[%s3 + $0xbb8] sm:$0xff]
    %v2533 = vld [vmem:[%s3 + $0xbc0] sm:$0xff]
    %v2534 = vld [vmem:[%s3 + $0xbc8] sm:$0xff]
    %v2535 = vld [vmem:[%s3 + $0xbd0] sm:$0xff]
    %v2536 = vld [vmem:[%s3 + $0xbd8] sm:$0xff]
    %v2537 = vld [vmem:[%s3 + $0xbe0] sm:$0xff]
    %v2538 = vld [vmem:[%s3 + $0xbe8] sm:$0xff]
    %v2539 = vld [vmem:[%s3 + $0xbf0] sm:$0xff]
    %v2540 = vld [vmem:[%s3 + $0xbf8] sm:$0xff]
    %v2541 = vld [vmem:[%s3 + $0xc00] sm:$0xff]
    %v2542 = vld [vmem:[%s3 + $0xc08] sm:$0xff]
    %v2543 = vld [vmem:[%s3 + $0xc10] sm:$0xff]
    %v2544 = vld [vmem:[%s3 + $0xc18] sm:$0xff]
    %v2545 = vld [vmem:[%s3 + $0xc20] sm:$0xff]
    %v2546 = vld [vmem:[%s3 + $0xc28] sm:$0xff]
    %v2547 = vld [vmem:[%s3 + $0xc30] sm:$0xff]
    %v2548 = vld [vmem:[%s3 + $0xc38] sm:$0xff]
    %v2549 = vld [vmem:[%s4] sm:$0xf]
    %v2551 = vlaneseq
    %v2552 = vshrl.u32 %v2551, 7
    %v2553 = vsub.s32 0, %v2552
    %v2554 = vrot.slane %v2549, %v2553
    %v2555 = vlaneseq
    %v2556 = vshrl.u32 %v2555, 7
    %v2557 = vsub.s32 1, %v2556
    %v2558 = vrot.slane %v2549, %v2557
    %v2559 = vlaneseq
    %v2560 = vshrl.u32 %v2559, 7
    %v2561 = vsub.s32 2, %v2560
    %v2562 = vrot.slane %v2549, %v2561
    %v2563 = vlaneseq
    %v2564 = vshrl.u32 %v2563, 7
    %v2565 = vsub.s32 3, %v2564
    %v2566 = vrot.slane %v2549, %v2565
    %vm2571 = vcmask 130048
    %v2573 = vsel %vm2571, %v2156, 0
    %2575 = vmatprep.subr.mxu0 %v2158
    %2576 = vmatpush1.msra.mxu0 %v2157
    %2577 = vmatprep.subr.mxu0 %v2162
    %2578 = vmatpush1.msra.mxu0 %v2161
    %2579 = vmatprep.subr.mxu0 %v2166
    %2580 = vmatpush1.msra.mxu0 %v2165
    %2581 = vmatprep.subr.mxu0 %v2170
    %2582 = vmatpush1.msra.mxu0 %v2169
    %2583 = vmatprep.subr.mxu0 %v2174
    %2584 = vmatpush1.msra.mxu0 %v2173
    %2585 = vmatprep.subr.mxu0 %v2178
    %2586 = vmatpush1.msra.mxu0 %v2177
    %2587 = vmatprep.subr.mxu0 %v2182
    %2588 = vmatpush1.msra.mxu0 %v2181
    %2589 = vmatprep.subr.mxu0 %v2186
    %2590 = vmatpush1.msra.mxu0 %v2185
    %2591 = vmatprep.subr.mxu0 %v2190
    %2592 = vmatpush1.msra.mxu0 %v2189
    %2593 = vmatprep.subr.mxu0 %v2194
    %2594 = vmatpush1.msra.mxu0 %v2193
    %2595 = vmatprep.subr.mxu0 %v2198
    %2596 = vmatpush1.msra.mxu0 %v2197
    %2597 = vmatprep.subr.mxu0 %v2202
    %2598 = vmatpush1.msra.mxu0 %v2201
    %2599 = vmatprep.subr.mxu0 %v2206
    %2600 = vmatpush1.msra.mxu0 %v2205
    %2601 = vmatprep.subr.mxu0 %v2210
    %2602 = vmatpush1.msra.mxu0 %v2209
    %2603 = vmatprep.subr.mxu0 %v2214
    %2604 = vmatpush1.msra.mxu0 %v2213
    %2605 = vmatprep.subr.mxu0 %v2218
    %2606 = vmatpush1.msra.mxu0 %v2217
    %2607 = vmatprep.subr.mxu0 %v2222
    %2608 = vmatpush1.msra.mxu0 %v2221
    %2609 = vmatprep.subr.mxu0 %v2226
    %2610 = vmatpush1.msra.mxu0 %v2225
    %2611 = vmatprep.subr.mxu0 %v2230
    %2612 = vmatpush1.msra.mxu0 %v2229
    %2613 = vmatprep.subr.mxu0 %v2234
    %2614 = vmatpush1.msra.mxu0 %v2233
    %2615 = vmatprep.subr.mxu0 %v2238
    %2616 = vmatpush1.msra.mxu0 %v2237
    %2617 = vmatprep.subr.mxu0 %v2242
    %2618 = vmatpush1.msra.mxu0 %v2241
    %2619 = vmatprep.subr.mxu0 %v2246
    %2620 = vmatpush1.msra.mxu0 %v2245
    %2621 = vmatprep.subr.mxu0 %v2250
    %2622 = vmatpush1.msra.mxu0 %v2249
    %2623 = vmatprep.subr.mxu0 %v2254
    %2624 = vmatpush1.msra.mxu0 %v2253
    %2625 = vmatprep.subr.mxu0 %v2258
    %2626 = vmatpush1.msra.mxu0 %v2257
    %2627 = vmatprep.subr.mxu0 %v2262
    %2628 = vmatpush1.msra.mxu0 %v2261
    %2629 = vmatprep.subr.mxu0 %v2266
    %2630 = vmatpush1.msra.mxu0 %v2265
    %2631 = vmatprep.subr.mxu0 %v2270
    %2632 = vmatpush1.msra.mxu0 %v2269
    %2633 = vmatprep.subr.mxu0 %v2274
    %2634 = vmatpush1.msra.mxu0 %v2273
    %2635 = vmatprep.subr.mxu0 %v2278
    %2636 = vmatpush1.msra.mxu0 %v2277
    %2637 = vmatprep.subr.mxu0 %v2282
    %2638 = vmatpush1.msra.mxu0 %v2281
    %2639 = vmatprep.mubr.f32.mxu0 %v2151
    %2640 = vmatmul.mubr.f32.gmra.mrb[0].mxu0 %v2150
    %v2641 = vpop.f32.mrb[0].mxu0
    %v2642 = vadd.f32 %v2554, %v2641
    %v2643 = vpop.f32.mrb[0].mxu0
    %v2644 = vadd.f32 %v2558, %v2643
    %2645 = vdwg.mxu0
    %2646 = vmatprep.subr.mxu0 %v2286
    %2647 = vmatpush1.msra.mxu0 %v2285
    %2648 = vmatprep.subr.mxu0 %v2290
    %2649 = vmatpush1.msra.mxu0 %v2289
    %2650 = vmatprep.subr.mxu0 %v2294
    %2651 = vmatpush1.msra.mxu0 %v2293
    %2652 = vmatprep.subr.mxu0 %v2298
    %2653 = vmatpush1.msra.mxu0 %v2297
    %2654 = vmatprep.subr.mxu0 %v2302
    %2655 = vmatpush1.msra.mxu0 %v2301
    %2656 = vmatprep.subr.mxu0 %v2306
    %2657 = vmatpush1.msra.mxu0 %v2305
    %2658 = vmatprep.subr.mxu0 %v2310
    %2659 = vmatpush1.msra.mxu0 %v2309
    %2660 = vmatprep.subr.mxu0 %v2314
    %2661 = vmatpush1.msra.mxu0 %v2313
    %2662 = vmatprep.subr.mxu0 %v2318
    %2663 = vmatpush1.msra.mxu0 %v2317
    %2664 = vmatprep.subr.mxu0 %v2322
    %2665 = vmatpush1.msra.mxu0 %v2321
    %2666 = vmatprep.subr.mxu0 %v2326
    %2667 = vmatpush1.msra.mxu0 %v2325
    %2668 = vmatprep.subr.mxu0 %v2330
    %2669 = vmatpush1.msra.mxu0 %v2329
    %2670 = vmatprep.subr.mxu0 %v2334
    %2671 = vmatpush1.msra.mxu0 %v2333
    %2672 = vmatprep.subr.mxu0 %v2338
    %2673 = vmatpush1.msra.mxu0 %v2337
    %2674 = vmatprep.subr.mxu0 %v2342
    %2675 = vmatpush1.msra.mxu0 %v2341
    %2676 = vmatprep.subr.mxu0 %v2346
    %2677 = vmatpush1.msra.mxu0 %v2345
    %2678 = vmatprep.subr.mxu0 %v2350
    %2679 = vmatpush1.msra.mxu0 %v2349
    %2680 = vmatprep.subr.mxu0 %v2354
    %2681 = vmatpush1.msra.mxu0 %v2353
    %2682 = vmatprep.subr.mxu0 %v2358
    %2683 = vmatpush1.msra.mxu0 %v2357
    %2684 = vmatprep.subr.mxu0 %v2362
    %2685 = vmatpush1.msra.mxu0 %v2361
    %2686 = vmatprep.subr.mxu0 %v2366
    %2687 = vmatpush1.msra.mxu0 %v2365
    %2688 = vmatprep.subr.mxu0 %v2370
    %2689 = vmatpush1.msra.mxu0 %v2369
    %2690 = vmatprep.subr.mxu0 %v2374
    %2691 = vmatpush1.msra.mxu0 %v2373
    %2692 = vmatprep.subr.mxu0 %v2378
    %2693 = vmatpush1.msra.mxu0 %v2377
    %2694 = vmatprep.subr.mxu0 %v2382
    %2695 = vmatpush1.msra.mxu0 %v2381
    %2696 = vmatprep.subr.mxu0 %v2386
    %2697 = vmatpush1.msra.mxu0 %v2385
    %2698 = vmatprep.subr.mxu0 %v2390
    %2699 = vmatpush1.msra.mxu0 %v2389
    %2700 = vmatprep.subr.mxu0 %v2394
    %2701 = vmatpush1.msra.mxu0 %v2393
    %2702 = vmatprep.subr.mxu0 %v2398
    %2703 = vmatpush1.msra.mxu0 %v2397
    %2704 = vmatprep.subr.mxu0 %v2402
    %2705 = vmatpush1.msra.mxu0 %v2401
    %2706 = vmatprep.subr.mxu0 %v2406
    %2707 = vmatpush1.msra.mxu0 %v2405
    %2708 = vmatprep.subr.mxu0 %v2410
    %2709 = vmatpush1.msra.mxu0 %v2409
    %2710 = vmatprep.mubr.f32.mxu0 %v2153
    %2711 = vmatmul.mubr.f32.gmra.mrb[0].mxu0 %v2152
    %v2712 = vpop.f32.mrb[0].mxu0
    %v2713 = vadd.f32 %v2642, %v2712
    %v2714 = vpop.f32.mrb[0].mxu0
    %v2715 = vadd.f32 %v2644, %v2714
    %2716 = vdwg.mxu0
    %2717 = vmatprep.subr.mxu0 %v2414
    %2718 = vmatpush1.msra.mxu0 %v2413
    %2719 = vmatprep.subr.mxu0 %v2418
    %2720 = vmatpush1.msra.mxu0 %v2417
    %2721 = vmatprep.subr.mxu0 %v2422
    %2722 = vmatpush1.msra.mxu0 %v2421
    %2723 = vmatprep.subr.mxu0 %v2426
    %2724 = vmatpush1.msra.mxu0 %v2425
    %2725 = vmatprep.subr.mxu0 %v2430
    %2726 = vmatpush1.msra.mxu0 %v2429
    %2727 = vmatprep.subr.mxu0 %v2434
    %2728 = vmatpush1.msra.mxu0 %v2433
    %2729 = vmatprep.subr.mxu0 %v2438
    %2730 = vmatpush1.msra.mxu0 %v2437
    %2731 = vmatprep.subr.mxu0 %v2442
    %2732 = vmatpush1.msra.mxu0 %v2441
    %2733 = vmatprep.subr.mxu0 %v2446
    %2734 = vmatpush1.msra.mxu0 %v2445
    %2735 = vmatprep.subr.mxu0 %v2450
    %2736 = vmatpush1.msra.mxu0 %v2449
    %2737 = vmatprep.subr.mxu0 %v2454
    %2738 = vmatpush1.msra.mxu0 %v2453
    %2739 = vmatprep.subr.mxu0 %v2458
    %2740 = vmatpush1.msra.mxu0 %v2457
    %2741 = vmatprep.subr.mxu0 %v2462
    %2742 = vmatpush1.msra.mxu0 %v2461
    %2743 = vmatprep.subr.mxu0 %v2466
    %2744 = vmatpush1.msra.mxu0 %v2465
    %2745 = vmatprep.subr.mxu0 %v2470
    %2746 = vmatpush1.msra.mxu0 %v2469
    %2747 = vmatprep.subr.mxu0 %v2474
    %2748 = vmatpush1.msra.mxu0 %v2473
    %2749 = vmatprep.subr.mxu0 %v2478
    %2750 = vmatpush1.msra.mxu0 %v2477
    %2751 = vmatprep.subr.mxu0 %v2482
    %2752 = vmatpush1.msra.mxu0 %v2481
    %2753 = vmatprep.subr.mxu0 %v2486
    %2754 = vmatpush1.msra.mxu0 %v2485
    %2755 = vmatprep.subr.mxu0 %v2490
    %2756 = vmatpush1.msra.mxu0 %v2489
    %2757 = vmatprep.subr.mxu0 %v2494
    %2758 = vmatpush1.msra.mxu0 %v2493
    %2759 = vmatprep.subr.mxu0 %v2498
    %2760 = vmatpush1.msra.mxu0 %v2497
    %2761 = vmatprep.subr.mxu0 %v2502
    %2762 = vmatpush1.msra.mxu0 %v2501
    %2763 = vmatprep.subr.mxu0 %v2506
    %2764 = vmatpush1.msra.mxu0 %v2505
    %2765 = vmatprep.subr.mxu0 %v2510
    %2766 = vmatpush1.msra.mxu0 %v2509
    %2767 = vmatprep.subr.mxu0 %v2514
    %2768 = vmatpush1.msra.mxu0 %v2513
    %2769 = vmatprep.subr.mxu0 %v2518
    %2770 = vmatpush1.msra.mxu0 %v2517
    %2771 = vmatprep.subr.mxu0 %v2522
    %2772 = vmatpush1.msra.mxu0 %v2521
    %2773 = vmatprep.subr.mxu0 %v2526
    %2774 = vmatpush1.msra.mxu0 %v2525
    %2775 = vmatprep.subr.mxu0 %v2530
    %2776 = vmatpush1.msra.mxu0 %v2529
    %2777 = vmatprep.subr.mxu0 %v2534
    %2778 = vmatpush1.msra.mxu0 %v2533
    %2779 = vmatprep.subr.mxu0 %v2538
    %2780 = vmatpush1.msra.mxu0 %v2537
    %2781 = vmatprep.mubr.f32.mxu0 %v2155
    %2782 = vmatmul.mubr.f32.gmra.mrb[0].mxu0 %v2154
    %v2783 = vpop.f32.mrb[0].mxu0
    %v2784 = vadd.f32 %v2713, %v2783
    %v2785 = vpop.f32.mrb[0].mxu0
    %v2786 = vadd.f32 %v2715, %v2785
    %2787 = vdwg.mxu0
    %2788 = vmatprep.subr.mxu0 %v2542
    %2789 = vmatpush1.msra.mxu0 %v2541
    %2790 = vmatprep.subr.mxu0 %v2546
    %2791 = vmatpush1.msra.mxu0 %v2545
    %2792 = vmatprep.subr.mxu0 0.0
    %2793 = vmatpush1.msra.mxu0 0.0
    %2794 = vmatprep.subr.mxu0 0.0
    %2795 = vmatpush1.msra.mxu0 0.0
    %2796 = vmatprep.subr.mxu0 0.0
    %2797 = vmatpush1.msra.mxu0 0.0
    %2798 = vmatprep.subr.mxu0 0.0
    %2799 = vmatpush1.msra.mxu0 0.0
    %2800 = vmatprep.subr.mxu0 0.0
    %2801 = vmatpush1.msra.mxu0 0.0
    %2802 = vmatprep.subr.mxu0 0.0
    %2803 = vmatpush1.msra.mxu0 0.0
    %2804 = vmatprep.subr.mxu0 0.0
    %2805 = vmatpush1.msra.mxu0 0.0
    %2806 = vmatprep.subr.mxu0 0.0
    %2807 = vmatpush1.msra.mxu0 0.0
    %2808 = vmatprep.subr.mxu0 0.0
    %2809 = vmatpush1.msra.mxu0 0.0
    %2810 = vmatprep.subr.mxu0 0.0
    %2811 = vmatpush1.msra.mxu0 0.0
    %2812 = vmatprep.subr.mxu0 0.0
    %2813 = vmatpush1.msra.mxu0 0.0
    %2814 = vmatprep.subr.mxu0 0.0
    %2815 = vmatpush1.msra.mxu0 0.0
    %2816 = vmatprep.subr.mxu0 0.0
    %2817 = vmatpush1.msra.mxu0 0.0
    %2818 = vmatprep.subr.mxu0 0.0
    %2819 = vmatpush1.msra.mxu0 0.0
    %2820 = vmatprep.subr.mxu0 0.0
    %2821 = vmatpush1.msra.mxu0 0.0
    %2822 = vmatprep.subr.mxu0 0.0
    %2823 = vmatpush1.msra.mxu0 0.0
    %2824 = vmatprep.subr.mxu0 0.0
    %2825 = vmatpush1.msra.mxu0 0.0
    %2826 = vmatprep.subr.mxu0 0.0
    %2827 = vmatpush1.msra.mxu0 0.0
    %2828 = vmatprep.subr.mxu0 0.0
    %2829 = vmatpush1.msra.mxu0 0.0
    %2830 = vmatprep.subr.mxu0 0.0
    %2831 = vmatpush1.msra.mxu0 0.0
    %2832 = vmatprep.subr.mxu0 0.0
    %2833 = vmatpush1.msra.mxu0 0.0
    %2834 = vmatprep.subr.mxu0 0.0
    %2835 = vmatpush1.msra.mxu0 0.0
    %2836 = vmatprep.subr.mxu0 0.0
    %2837 = vmatpush1.msra.mxu0 0.0
    %2838 = vmatprep.subr.mxu0 0.0
    %2839 = vmatpush1.msra.mxu0 0.0
    %2840 = vmatprep.subr.mxu0 0.0
    %2841 = vmatpush1.msra.mxu0 0.0
    %2842 = vmatprep.subr.mxu0 0.0
    %2843 = vmatpush1.msra.mxu0 0.0
    %2844 = vmatprep.subr.mxu0 0.0
    %2845 = vmatpush1.msra.mxu0 0.0
    %2846 = vmatprep.subr.mxu0 0.0
    %2847 = vmatpush1.msra.mxu0 0.0
    %2848 = vmatprep.subr.mxu0 0.0
    %2849 = vmatpush1.msra.mxu0 0.0
    %2850 = vmatprep.subr.mxu0 0.0
    %2851 = vmatpush1.msra.mxu0 0.0
    %2852 = vmatprep.mubr.f32.mxu0 0.0
    %2853 = vmatmul.mubr.f32.gmra.mrb[0].mxu0 %v2573
    %v2854 = vpop.f32.mrb[0].mxu0
    %v2855 = vadd.f32 %v2784, %v2854
    %v2856 = vpop.f32.mrb[0].mxu0
    %v2857 = vadd.f32 %v2786, %v2856
    %2858 = vdwg.mxu0
    %2859 = vmatprep.subr.mxu0 %v2160
    %2860 = vmatpush1.msra.mxu0 %v2159
    %2861 = vmatprep.subr.mxu0 %v2164
    %2862 = vmatpush1.msra.mxu0 %v2163
    %2863 = vmatprep.subr.mxu0 %v2168
    %2864 = vmatpush1.msra.mxu0 %v2167
    %2865 = vmatprep.subr.mxu0 %v2172
    %2866 = vmatpush1.msra.mxu0 %v2171
    %2867 = vmatprep.subr.mxu0 %v2176
    %2868 = vmatpush1.msra.mxu0 %v2175
    %2869 = vmatprep.subr.mxu0 %v2180
    %2870 = vmatpush1.msra.mxu0 %v2179
    %2871 = vmatprep.subr.mxu0 %v2184
    %2872 = vmatpush1.msra.mxu0 %v2183
    %2873 = vmatprep.subr.mxu0 %v2188
    %2874 = vmatpush1.msra.mxu0 %v2187
    %2875 = vmatprep.subr.mxu0 %v2192
    %2876 = vmatpush1.msra.mxu0 %v2191
    %2877 = vmatprep.subr.mxu0 %v2196
    %2878 = vmatpush1.msra.mxu0 %v2195
    %2879 = vmatprep.subr.mxu0 %v2200
    %2880 = vmatpush1.msra.mxu0 %v2199
    %2881 = vmatprep.subr.mxu0 %v2204
    %2882 = vmatpush1.msra.mxu0 %v2203
    %2883 = vmatprep.subr.mxu0 %v2208
    %2884 = vmatpush1.msra.mxu0 %v2207
    %2885 = vmatprep.subr.mxu0 %v2212
    %2886 = vmatpush1.msra.mxu0 %v2211
    %2887 = vmatprep.subr.mxu0 %v2216
    %2888 = vmatpush1.msra.mxu0 %v2215
    %2889 = vmatprep.subr.mxu0 %v2220
    %2890 = vmatpush1.msra.mxu0 %v2219
    %2891 = vmatprep.subr.mxu0 %v2224
    %2892 = vmatpush1.msra.mxu0 %v2223
    %2893 = vmatprep.subr.mxu0 %v2228
    %2894 = vmatpush1.msra.mxu0 %v2227
    %2895 = vmatprep.subr.mxu0 %v2232
    %2896 = vmatpush1.msra.mxu0 %v2231
    %2897 = vmatprep.subr.mxu0 %v2236
    %2898 = vmatpush1.msra.mxu0 %v2235
    %2899 = vmatprep.subr.mxu0 %v2240
    %2900 = vmatpush1.msra.mxu0 %v2239
    %2901 = vmatprep.subr.mxu0 %v2244
    %2902 = vmatpush1.msra.mxu0 %v2243
    %2903 = vmatprep.subr.mxu0 %v2248
    %2904 = vmatpush1.msra.mxu0 %v2247
    %2905 = vmatprep.subr.mxu0 %v2252
    %2906 = vmatpush1.msra.mxu0 %v2251
    %2907 = vmatprep.subr.mxu0 %v2256
    %2908 = vmatpush1.msra.mxu0 %v2255
    %2909 = vmatprep.subr.mxu0 %v2260
    %2910 = vmatpush1.msra.mxu0 %v2259
    %2911 = vmatprep.subr.mxu0 %v2264
    %2912 = vmatpush1.msra.mxu0 %v2263
    %2913 = vmatprep.subr.mxu0 %v2268
    %2914 = vmatpush1.msra.mxu0 %v2267
    %2915 = vmatprep.subr.mxu0 %v2272
    %2916 = vmatpush1.msra.mxu0 %v2271
    %2917 = vmatprep.subr.mxu0 %v2276
    %2918 = vmatpush1.msra.mxu0 %v2275
    %2919 = vmatprep.subr.mxu0 %v2280
    %2920 = vmatpush1.msra.mxu0 %v2279
    %2921 = vmatprep.subr.mxu0 %v2284
    %2922 = vmatpush1.msra.mxu0 %v2283
    %2923 = vmatprep.mubr.f32.mxu0 %v2151
    %2924 = vmatmul.mubr.f32.gmra.mrb[0].mxu0 %v2150
    %v2925 = vpop.f32.mrb[0].mxu0
    %v2926 = vadd.f32 %v2562, %v2925
    %v2927 = vpop.f32.mrb[0].mxu0
    %v2928 = vadd.f32 %v2566, %v2927
    %2929 = vdwg.mxu0
    %2930 = vmatprep.subr.mxu0 %v2288
    %2931 = vmatpush1.msra.mxu0 %v2287
    %2932 = vmatprep.subr.mxu0 %v2292
    %2933 = vmatpush1.msra.mxu0 %v2291
    %2934 = vmatprep.subr.mxu0 %v2296
    %2935 = vmatpush1.msra.mxu0 %v2295
    %2936 = vmatprep.subr.mxu0 %v2300
    %2937 = vmatpush1.msra.mxu0 %v2299
    %2938 = vmatprep.subr.mxu0 %v2304
    %2939 = vmatpush1.msra.mxu0 %v2303
    %2940 = vmatprep.subr.mxu0 %v2308
    %2941 = vmatpush1.msra.mxu0 %v2307
    %2942 = vmatprep.subr.mxu0 %v2312
    %2943 = vmatpush1.msra.mxu0 %v2311
    %2944 = vmatprep.subr.mxu0 %v2316
    %2945 = vmatpush1.msra.mxu0 %v2315
    %2946 = vmatprep.subr.mxu0 %v2320
    %2947 = vmatpush1.msra.mxu0 %v2319
    %2948 = vmatprep.subr.mxu0 %v2324
    %2949 = vmatpush1.msra.mxu0 %v2323
    %2950 = vmatprep.subr.mxu0 %v2328
    %2951 = vmatpush1.msra.mxu0 %v2327
    %2952 = vmatprep.subr.mxu0 %v2332
    %2953 = vmatpush1.msra.mxu0 %v2331
    %2954 = vmatprep.subr.mxu0 %v2336
    %2955 = vmatpush1.msra.mxu0 %v2335
    %2956 = vmatprep.subr.mxu0 %v2340
    %2957 = vmatpush1.msra.mxu0 %v2339
    %2958 = vmatprep.subr.mxu0 %v2344
    %2959 = vmatpush1.msra.mxu0 %v2343
    %2960 = vmatprep.subr.mxu0 %v2348
    %2961 = vmatpush1.msra.mxu0 %v2347
    %2962 = vmatprep.subr.mxu0 %v2352
    %2963 = vmatpush1.msra.mxu0 %v2351
    %2964 = vmatprep.subr.mxu0 %v2356
    %2965 = vmatpush1.msra.mxu0 %v2355
    %2966 = vmatprep.subr.mxu0 %v2360
    %2967 = vmatpush1.msra.mxu0 %v2359
    %2968 = vmatprep.subr.mxu0 %v2364
    %2969 = vmatpush1.msra.mxu0 %v2363
    %2970 = vmatprep.subr.mxu0 %v2368
    %2971 = vmatpush1.msra.mxu0 %v2367
    %2972 = vmatprep.subr.mxu0 %v2372
    %2973 = vmatpush1.msra.mxu0 %v2371
    %2974 = vmatprep.subr.mxu0 %v2376
    %2975 = vmatpush1.msra.mxu0 %v2375
    %2976 = vmatprep.subr.mxu0 %v2380
    %2977 = vmatpush1.msra.mxu0 %v2379
    %2978 = vmatprep.subr.mxu0 %v2384
    %2979 = vmatpush1.msra.mxu0 %v2383
    %2980 = vmatprep.subr.mxu0 %v2388
    %2981 = vmatpush1.msra.mxu0 %v2387
    %2982 = vmatprep.subr.mxu0 %v2392
    %2983 = vmatpush1.msra.mxu0 %v2391
    %2984 = vmatprep.subr.mxu0 %v2396
    %2985 = vmatpush1.msra.mxu0 %v2395
    %2986 = vmatprep.subr.mxu0 %v2400
    %2987 = vmatpush1.msra.mxu0 %v2399
    %2988 = vmatprep.subr.mxu0 %v2404
    %2989 = vmatpush1.msra.mxu0 %v2403
    %2990 = vmatprep.subr.mxu0 %v2408
    %2991 = vmatpush1.msra.mxu0 %v2407
    %2992 = vmatprep.subr.mxu0 %v2412
    %2993 = vmatpush1.msra.mxu0 %v2411
    %2994 = vmatprep.mubr.f32.mxu0 %v2153
    %2995 = vmatmul.mubr.f32.gmra.mrb[0].mxu0 %v2152
    %v2996 = vpop.f32.mrb[0].mxu0
    %v2997 = vadd.f32 %v2926, %v2996
    %v2998 = vpop.f32.mrb[0].mxu0
    %v2999 = vadd.f32 %v2928, %v2998
    %3000 = vdwg.mxu0
    %3001 = vmatprep.subr.mxu0 %v2416
    %3002 = vmatpush1.msra.mxu0 %v2415
    %3003 = vmatprep.subr.mxu0 %v2420
    %3004 = vmatpush1.msra.mxu0 %v2419
    %3005 = vmatprep.subr.mxu0 %v2424
    %3006 = vmatpush1.msra.mxu0 %v2423
    %3007 = vmatprep.subr.mxu0 %v2428
    %3008 = vmatpush1.msra.mxu0 %v2427
    %3009 = vmatprep.subr.mxu0 %v2432
    %3010 = vmatpush1.msra.mxu0 %v2431
    %3011 = vmatprep.subr.mxu0 %v2436
    %3012 = vmatpush1.msra.mxu0 %v2435
    %3013 = vmatprep.subr.mxu0 %v2440
    %3014 = vmatpush1.msra.mxu0 %v2439
    %3015 = vmatprep.subr.mxu0 %v2444
    %3016 = vmatpush1.msra.mxu0 %v2443
    %3017 = vmatprep.subr.mxu0 %v2448
    %3018 = vmatpush1.msra.mxu0 %v2447
    %3019 = vmatprep.subr.mxu0 %v2452
    %3020 = vmatpush1.msra.mxu0 %v2451
    %3021 = vmatprep.subr.mxu0 %v2456
    %3022 = vmatpush1.msra.mxu0 %v2455
    %3023 = vmatprep.subr.mxu0 %v2460
    %3024 = vmatpush1.msra.mxu0 %v2459
    %3025 = vmatprep.subr.mxu0 %v2464
    %3026 = vmatpush1.msra.mxu0 %v2463
    %3027 = vmatprep.subr.mxu0 %v2468
    %3028 = vmatpush1.msra.mxu0 %v2467
    %3029 = vmatprep.subr.mxu0 %v2472
    %3030 = vmatpush1.msra.mxu0 %v2471
    %3031 = vmatprep.subr.mxu0 %v2476
    %3032 = vmatpush1.msra.mxu0 %v2475
    %3033 = vmatprep.subr.mxu0 %v2480
    %3034 = vmatpush1.msra.mxu0 %v2479
    %3035 = vmatprep.subr.mxu0 %v2484
    %3036 = vmatpush1.msra.mxu0 %v2483
    %3037 = vmatprep.subr.mxu0 %v2488
    %3038 = vmatpush1.msra.mxu0 %v2487
    %3039 = vmatprep.subr.mxu0 %v2492
    %3040 = vmatpush1.msra.mxu0 %v2491
    %3041 = vmatprep.subr.mxu0 %v2496
    %3042 = vmatpush1.msra.mxu0 %v2495
    %3043 = vmatprep.subr.mxu0 %v2500
    %3044 = vmatpush1.msra.mxu0 %v2499
    %3045 = vmatprep.subr.mxu0 %v2504
    %3046 = vmatpush1.msra.mxu0 %v2503
    %3047 = vmatprep.subr.mxu0 %v2508
    %3048 = vmatpush1.msra.mxu0 %v2507
    %3049 = vmatprep.subr.mxu0 %v2512
    %3050 = vmatpush1.msra.mxu0 %v2511
    %3051 = vmatprep.subr.mxu0 %v2516
    %3052 = vmatpush1.msra.mxu0 %v2515
    %3053 = vmatprep.subr.mxu0 %v2520
    %3054 = vmatpush1.msra.mxu0 %v2519
    %3055 = vmatprep.subr.mxu0 %v2524
    %3056 = vmatpush1.msra.mxu0 %v2523
    %3057 = vmatprep.subr.mxu0 %v2528
    %3058 = vmatpush1.msra.mxu0 %v2527
    %3059 = vmatprep.subr.mxu0 %v2532
    %3060 = vmatpush1.msra.mxu0 %v2531
    %3061 = vmatprep.subr.mxu0 %v2536
    %3062 = vmatpush1.msra.mxu0 %v2535
    %3063 = vmatprep.subr.mxu0 %v2540
    %3064 = vmatpush1.msra.mxu0 %v2539
    %3065 = vmatprep.mubr.f32.mxu0 %v2155
    %3066 = vmatmul.mubr.f32.gmra.mrb[0].mxu0 %v2154
    %v3067 = vpop.f32.mrb[0].mxu0
    %v3068 = vadd.f32 %v2997, %v3067
    %v3069 = vpop.f32.mrb[0].mxu0
    %v3070 = vadd.f32 %v2999, %v3069
    %3071 = vdwg.mxu0
    %3072 = vmatprep.subr.mxu0 %v2544
    %3073 = vmatpush1.msra.mxu0 %v2543
    %3074 = vmatprep.subr.mxu0 %v2548
    %3075 = vmatpush1.msra.mxu0 %v2547
    %3076 = vmatprep.subr.mxu0 0.0
    %3077 = vmatpush1.msra.mxu0 0.0
    %3078 = vmatprep.subr.mxu0 0.0
    %3079 = vmatpush1.msra.mxu0 0.0
    %3080 = vmatprep.subr.mxu0 0.0
    %3081 = vmatpush1.msra.mxu0 0.0
    %3082 = vmatprep.subr.mxu0 0.0
    %3083 = vmatpush1.msra.mxu0 0.0
    %3084 = vmatprep.subr.mxu0 0.0
    %3085 = vmatpush1.msra.mxu0 0.0
    %3086 = vmatprep.subr.mxu0 0.0
    %3087 = vmatpush1.msra.mxu0 0.0
    %3088 = vmatprep.subr.mxu0 0.0
    %3089 = vmatpush1.msra.mxu0 0.0
    %3090 = vmatprep.subr.mxu0 0.0
    %3091 = vmatpush1.msra.mxu0 0.0
    %3092 = vmatprep.subr.mxu0 0.0
    %3093 = vmatpush1.msra.mxu0 0.0
    %3094 = vmatprep.subr.mxu0 0.0
    %3095 = vmatpush1.msra.mxu0 0.0
    %3096 = vmatprep.subr.mxu0 0.0
    %3097 = vmatpush1.msra.mxu0 0.0
    %3098 = vmatprep.subr.mxu0 0.0
    %3099 = vmatpush1.msra.mxu0 0.0
    %3100 = vmatprep.subr.mxu0 0.0
    %3101 = vmatpush1.msra.mxu0 0.0
    %3102 = vmatprep.subr.mxu0 0.0
    %3103 = vmatpush1.msra.mxu0 0.0
    %3104 = vmatprep.subr.mxu0 0.0
    %3105 = vmatpush1.msra.mxu0 0.0
    %3106 = vmatprep.subr.mxu0 0.0
    %3107 = vmatpush1.msra.mxu0 0.0
    %3108 = vmatprep.subr.mxu0 0.0
    %3109 = vmatpush1.msra.mxu0 0.0
    %3110 = vmatprep.subr.mxu0 0.0
    %3111 = vmatpush1.msra.mxu0 0.0
    %3112 = vmatprep.subr.mxu0 0.0
    %3113 = vmatpush1.msra.mxu0 0.0
    %3114 = vmatprep.subr.mxu0 0.0
    %3115 = vmatpush1.msra.mxu0 0.0
    %3116 = vmatprep.subr.mxu0 0.0
    %3117 = vmatpush1.msra.mxu0 0.0
    %3118 = vmatprep.subr.mxu0 0.0
    %3119 = vmatpush1.msra.mxu0 0.0
    %3120 = vmatprep.subr.mxu0 0.0
    %3121 = vmatpush1.msra.mxu0 0.0
    %3122 = vmatprep.subr.mxu0 0.0
    %3123 = vmatpush1.msra.mxu0 0.0
    %3124 = vmatprep.subr.mxu0 0.0
    %3125 = vmatpush1.msra.mxu0 0.0
    %3126 = vmatprep.subr.mxu0 0.0
    %3127 = vmatpush1.msra.mxu0 0.0
    %3128 = vmatprep.subr.mxu0 0.0
    %3129 = vmatpush1.msra.mxu0 0.0
    %3130 = vmatprep.subr.mxu0 0.0
    %3131 = vmatpush1.msra.mxu0 0.0
    %3132 = vmatprep.subr.mxu0 0.0
    %3133 = vmatpush1.msra.mxu0 0.0
    %3134 = vmatprep.subr.mxu0 0.0
    %3135 = vmatpush1.msra.mxu0 0.0
    %3136 = vmatprep.mubr.f32.mxu0 0.0
    %3137 = vmatmul.mubr.f32.gmra.mrb[0].mxu0 %v2573
    %v3138 = vpop.f32.mrb[0].mxu0
    %v3139 = vadd.f32 %v3068, %v3138
    %v3140 = vpop.f32.mrb[0].mxu0
    %v3141 = vadd.f32 %v3070, %v3140
    %3142 = vdwg.mxu0
    %v3143 = vmax.f32 %v2855, 0.0
    %v3144 = vmax.f32 %v2857, 0.0
    %v3145 = vmax.f32 %v3139, 0.0
    %v3146 = vmax.f32 %v3141, 0.0
    %v3147 = vld [vmem:[%s5] sm:$0xff]
    %v3148 = vld [vmem:[%s5 + $0x8] sm:$0xff]
    %v3149 = vld [vmem:[%s5 + $0x10] sm:$0xff]
    %v3150 = vld [vmem:[%s5 + $0x18] sm:$0xff]
    %v3151 = vld [vmem:[%s5 + $0x20] sm:$0xff]
    %v3152 = vld [vmem:[%s5 + $0x28] sm:$0xff]
    %v3153 = vld [vmem:[%s5 + $0x30] sm:$0xff]
    %v3154 = vld [vmem:[%s5 + $0x38] sm:$0xff]
    %v3155 = vld [vmem:[%s5 + $0x40] sm:$0xff]
    %v3156 = vld [vmem:[%s5 + $0x48] sm:$0xff]
    %v3157 = vld [vmem:[%s5 + $0x50] sm:$0xff]
    %v3158 = vld [vmem:[%s5 + $0x58] sm:$0xff]
    %v3159 = vld [vmem:[%s5 + $0x60] sm:$0xff]
    %v3160 = vld [vmem:[%s5 + $0x68] sm:$0xff]
    %v3161 = vld [vmem:[%s5 + $0x70] sm:$0xff]
    %v3162 = vld [vmem:[%s5 + $0x78] sm:$0xff]
    %v3163 = vld [vmem:[%s5 + $0x80] sm:$0xff]
    %v3164 = vld [vmem:[%s5 + $0x88] sm:$0xff]
    %v3165 = vld [vmem:[%s5 + $0x90] sm:$0xff]
    %v3166 = vld [vmem:[%s5 + $0x98] sm:$0xff]
    %v3167 = vld [vmem:[%s5 + $0xa0] sm:$0xff]
    %v3168 = vld [vmem:[%s5 + $0xa8] sm:$0xff]
    %v3169 = vld [vmem:[%s5 + $0xb0] sm:$0xff]
    %v3170 = vld [vmem:[%s5 + $0xb8] sm:$0xff]
    %v3171 = vld [vmem:[%s5 + $0xc0] sm:$0xff]
    %v3172 = vld [vmem:[%s5 + $0xc8] sm:$0xff]
    %v3173 = vld [vmem:[%s5 + $0xd0] sm:$0xff]
    %v3174 = vld [vmem:[%s5 + $0xd8] sm:$0xff]
    %v3175 = vld [vmem:[%s5 + $0xe0] sm:$0xff]
    %v3176 = vld [vmem:[%s5 + $0xe8] sm:$0xff]
    %v3177 = vld [vmem:[%s5 + $0xf0] sm:$0xff]
    %v3178 = vld [vmem:[%s5 + $0xf8] sm:$0xff]
    %v3179 = vld [vmem:[%s5 + $0x100] sm:$0xff]
    %v3180 = vld [vmem:[%s5 + $0x108] sm:$0xff]
    %v3181 = vld [vmem:[%s5 + $0x110] sm:$0xff]
    %v3182 = vld [vmem:[%s5 + $0x118] sm:$0xff]
    %v3183 = vld [vmem:[%s5 + $0x120] sm:$0xff]
    %v3184 = vld [vmem:[%s5 + $0x128] sm:$0xff]
    %v3185 = vld [vmem:[%s5 + $0x130] sm:$0xff]
    %v3186 = vld [vmem:[%s5 + $0x138] sm:$0xff]
    %v3187 = vld [vmem:[%s5 + $0x140] sm:$0xff]
    %v3188 = vld [vmem:[%s5 + $0x148] sm:$0xff]
    %v3189 = vld [vmem:[%s5 + $0x150] sm:$0xff]
    %v3190 = vld [vmem:[%s5 + $0x158] sm:$0xff]
    %v3191 = vld [vmem:[%s5 + $0x160] sm:$0xff]
    %v3192 = vld [vmem:[%s5 + $0x168] sm:$0xff]
    %v3193 = vld [vmem:[%s5 + $0x170] sm:$0xff]
    %v3194 = vld [vmem:[%s5 + $0x178] sm:$0xff]
    %v3195 = vld [vmem:[%s5 + $0x180] sm:$0xff]
    %v3196 = vld [vmem:[%s5 + $0x188] sm:$0xff]
    %v3197 = vld [vmem:[%s5 + $0x190] sm:$0xff]
    %v3198 = vld [vmem:[%s5 + $0x198] sm:$0xff]
    %v3199 = vld [vmem:[%s5 + $0x1a0] sm:$0xff]
    %v3200 = vld [vmem:[%s5 + $0x1a8] sm:$0xff]
    %v3201 = vld [vmem:[%s5 + $0x1b0] sm:$0xff]
    %v3202 = vld [vmem:[%s5 + $0x1b8] sm:$0xff]
    %v3203 = vld [vmem:[%s5 + $0x1c0] sm:$0xff]
    %v3204 = vld [vmem:[%s5 + $0x1c8] sm:$0xff]
    %v3205 = vld [vmem:[%s5 + $0x1d0] sm:$0xff]
    %v3206 = vld [vmem:[%s5 + $0x1d8] sm:$0xff]
    %v3207 = vld [vmem:[%s5 + $0x1e0] sm:$0xff]
    %v3208 = vld [vmem:[%s5 + $0x1e8] sm:$0xff]
    %v3209 = vld [vmem:[%s5 + $0x1f0] sm:$0xff]
    %v3210 = vld [vmem:[%s5 + $0x1f8] sm:$0xff]
    %v3211 = vld [vmem:[%s5 + $0x200] sm:$0xff]
    %v3212 = vld [vmem:[%s5 + $0x208] sm:$0xff]
    %v3213 = vld [vmem:[%s5 + $0x210] sm:$0xff]
    %v3214 = vld [vmem:[%s5 + $0x218] sm:$0xff]
    %v3215 = vld [vmem:[%s5 + $0x220] sm:$0xff]
    %v3216 = vld [vmem:[%s5 + $0x228] sm:$0xff]
    %v3217 = vld [vmem:[%s5 + $0x230] sm:$0xff]
    %v3218 = vld [vmem:[%s5 + $0x238] sm:$0xff]
    %v3219 = vld [vmem:[%s5 + $0x240] sm:$0xff]
    %v3220 = vld [vmem:[%s5 + $0x248] sm:$0xff]
    %v3221 = vld [vmem:[%s5 + $0x250] sm:$0xff]
    %v3222 = vld [vmem:[%s5 + $0x258] sm:$0xff]
    %v3223 = vld [vmem:[%s5 + $0x260] sm:$0xff]
    %v3224 = vld [vmem:[%s5 + $0x268] sm:$0xff]
    %v3225 = vld [vmem:[%s5 + $0x270] sm:$0xff]
    %v3226 = vld [vmem:[%s5 + $0x278] sm:$0xff]
    %v3227 = vld [vmem:[%s5 + $0x280] sm:$0xff]
    %v3228 = vld [vmem:[%s5 + $0x288] sm:$0xff]
    %v3229 = vld [vmem:[%s5 + $0x290] sm:$0xff]
    %v3230 = vld [vmem:[%s5 + $0x298] sm:$0xff]
    %v3231 = vld [vmem:[%s5 + $0x2a0] sm:$0xff]
    %v3232 = vld [vmem:[%s5 + $0x2a8] sm:$0xff]
    %v3233 = vld [vmem:[%s5 + $0x2b0] sm:$0xff]
    %v3234 = vld [vmem:[%s5 + $0x2b8] sm:$0xff]
    %v3235 = vld [vmem:[%s5 + $0x2c0] sm:$0xff]
    %v3236 = vld [vmem:[%s5 + $0x2c8] sm:$0xff]
    %v3237 = vld [vmem:[%s5 + $0x2d0] sm:$0xff]
    %v3238 = vld [vmem:[%s5 + $0x2d8] sm:$0xff]
    %v3239 = vld [vmem:[%s5 + $0x2e0] sm:$0xff]
    %v3240 = vld [vmem:[%s5 + $0x2e8] sm:$0xff]
    %v3241 = vld [vmem:[%s5 + $0x2f0] sm:$0xff]
    %v3242 = vld [vmem:[%s5 + $0x2f8] sm:$0xff]
    %v3243 = vld [vmem:[%s5 + $0x300] sm:$0xff]
    %v3244 = vld [vmem:[%s5 + $0x308] sm:$0xff]
    %v3245 = vld [vmem:[%s5 + $0x310] sm:$0xff]
    %v3246 = vld [vmem:[%s5 + $0x318] sm:$0xff]
    %v3247 = vld [vmem:[%s6] sm:$0x3]
    %v3249 = vlaneseq
    %v3250 = vshrl.u32 %v3249, 7
    %v3251 = vsub.s32 0, %v3250
    %v3252 = vrot.slane %v3247, %v3251
    %v3253 = vlaneseq
    %v3254 = vshrl.u32 %v3253, 7
    %v3255 = vsub.s32 1, %v3254
    %v3256 = vrot.slane %v3247, %v3255
    %v3260 = vsel %vm2571, %v3146, 0
    %3262 = vmatprep.subr.mxu0 %v3148
    %3263 = vmatpush1.msra.mxu0 %v3147
    %3264 = vmatprep.subr.mxu0 %v3150
    %3265 = vmatpush1.msra.mxu0 %v3149
    %3266 = vmatprep.subr.mxu0 %v3152
    %3267 = vmatpush1.msra.mxu0 %v3151
    %3268 = vmatprep.subr.mxu0 %v3154
    %3269 = vmatpush1.msra.mxu0 %v3153
    %3270 = vmatprep.subr.mxu0 %v3156
    %3271 = vmatpush1.msra.mxu0 %v3155
    %3272 = vmatprep.subr.mxu0 %v3158
    %3273 = vmatpush1.msra.mxu0 %v3157
    %3274 = vmatprep.subr.mxu0 %v3160
    %3275 = vmatpush1.msra.mxu0 %v3159
    %3276 = vmatprep.subr.mxu0 %v3162
    %3277 = vmatpush1.msra.mxu0 %v3161
    %3278 = vmatprep.subr.mxu0 %v3164
    %3279 = vmatpush1.msra.mxu0 %v3163
    %3280 = vmatprep.subr.mxu0 %v3166
    %3281 = vmatpush1.msra.mxu0 %v3165
    %3282 = vmatprep.subr.mxu0 %v3168
    %3283 = vmatpush1.msra.mxu0 %v3167
    %3284 = vmatprep.subr.mxu0 %v3170
    %3285 = vmatpush1.msra.mxu0 %v3169
    %3286 = vmatprep.subr.mxu0 %v3172
    %3287 = vmatpush1.msra.mxu0 %v3171
    %3288 = vmatprep.subr.mxu0 %v3174
    %3289 = vmatpush1.msra.mxu0 %v3173
    %3290 = vmatprep.subr.mxu0 %v3176
    %3291 = vmatpush1.msra.mxu0 %v3175
    %3292 = vmatprep.subr.mxu0 %v3178
    %3293 = vmatpush1.msra.mxu0 %v3177
    %3294 = vmatprep.subr.mxu0 %v3180
    %3295 = vmatpush1.msra.mxu0 %v3179
    %3296 = vmatprep.subr.mxu0 %v3182
    %3297 = vmatpush1.msra.mxu0 %v3181
    %3298 = vmatprep.subr.mxu0 %v3184
    %3299 = vmatpush1.msra.mxu0 %v3183
    %3300 = vmatprep.subr.mxu0 %v3186
    %3301 = vmatpush1.msra.mxu0 %v3185
    %3302 = vmatprep.subr.mxu0 %v3188
    %3303 = vmatpush1.msra.mxu0 %v3187
    %3304 = vmatprep.subr.mxu0 %v3190
    %3305 = vmatpush1.msra.mxu0 %v3189
    %3306 = vmatprep.subr.mxu0 %v3192
    %3307 = vmatpush1.msra.mxu0 %v3191
    %3308 = vmatprep.subr.mxu0 %v3194
    %3309 = vmatpush1.msra.mxu0 %v3193
    %3310 = vmatprep.subr.mxu0 %v3196
    %3311 = vmatpush1.msra.mxu0 %v3195
    %3312 = vmatprep.subr.mxu0 %v3198
    %3313 = vmatpush1.msra.mxu0 %v3197
    %3314 = vmatprep.subr.mxu0 %v3200
    %3315 = vmatpush1.msra.mxu0 %v3199
    %3316 = vmatprep.subr.mxu0 %v3202
    %3317 = vmatpush1.msra.mxu0 %v3201
    %3318 = vmatprep.subr.mxu0 %v3204
    %3319 = vmatpush1.msra.mxu0 %v3203
    %3320 = vmatprep.subr.mxu0 %v3206
    %3321 = vmatpush1.msra.mxu0 %v3205
    %3322 = vmatprep.subr.mxu0 %v3208
    %3323 = vmatpush1.msra.mxu0 %v3207
    %3324 = vmatprep.subr.mxu0 %v3210
    %3325 = vmatpush1.msra.mxu0 %v3209
    %3326 = vmatprep.mubr.f32.mxu0 %v3144
    %3327 = vmatmul.mubr.f32.gmra.mrb[0].mxu0 %v3143
    %v3328 = vpop.f32.mrb[0].mxu0
    %v3329 = vadd.f32 %v3252, %v3328
    %v3330 = vpop.f32.mrb[0].mxu0
    %v3331 = vadd.f32 %v3256, %v3330
    %3332 = vdwg.mxu0
    %3333 = vmatprep.subr.mxu0 %v3212
    %3334 = vmatpush1.msra.mxu0 %v3211
    %3335 = vmatprep.subr.mxu0 %v3214
    %3336 = vmatpush1.msra.mxu0 %v3213
    %3337 = vmatprep.subr.mxu0 %v3216
    %3338 = vmatpush1.msra.mxu0 %v3215
    %3339 = vmatprep.subr.mxu0 %v3218
    %3340 = vmatpush1.msra.mxu0 %v3217
    %3341 = vmatprep.subr.mxu0 %v3220
    %3342 = vmatpush1.msra.mxu0 %v3219
    %3343 = vmatprep.subr.mxu0 %v3222
    %3344 = vmatpush1.msra.mxu0 %v3221
    %3345 = vmatprep.subr.mxu0 %v3224
    %3346 = vmatpush1.msra.mxu0 %v3223
    %3347 = vmatprep.subr.mxu0 %v3226
    %3348 = vmatpush1.msra.mxu0 %v3225
    %3349 = vmatprep.subr.mxu0 %v3228
    %3350 = vmatpush1.msra.mxu0 %v3227
    %3351 = vmatprep.subr.mxu0 %v3230
    %3352 = vmatpush1.msra.mxu0 %v3229
    %3353 = vmatprep.subr.mxu0 %v3232
    %3354 = vmatpush1.msra.mxu0 %v3231
    %3355 = vmatprep.subr.mxu0 %v3234
    %3356 = vmatpush1.msra.mxu0 %v3233
    %3357 = vmatprep.subr.mxu0 %v3236
    %3358 = vmatpush1.msra.mxu0 %v3235
    %3359 = vmatprep.subr.mxu0 %v3238
    %3360 = vmatpush1.msra.mxu0 %v3237
    %3361 = vmatprep.subr.mxu0 %v3240
    %3362 = vmatpush1.msra.mxu0 %v3239
    %3363 = vmatprep.subr.mxu0 %v3242
    %3364 = vmatpush1.msra.mxu0 %v3241
    %3365 = vmatprep.subr.mxu0 %v3244
    %3366 = vmatpush1.msra.mxu0 %v3243
    %3367 = vmatprep.subr.mxu0 %v3246
    %3368 = vmatpush1.msra.mxu0 %v3245
    %3369 = vmatprep.subr.mxu0 0.0
    %3370 = vmatpush1.msra.mxu0 0.0
    %3371 = vmatprep.subr.mxu0 0.0
    %3372 = vmatpush1.msra.mxu0 0.0
    %3373 = vmatprep.subr.mxu0 0.0
    %3374 = vmatpush1.msra.mxu0 0.0
    %3375 = vmatprep.subr.mxu0 0.0
    %3376 = vmatpush1.msra.mxu0 0.0
    %3377 = vmatprep.subr.mxu0 0.0
    %3378 = vmatpush1.msra.mxu0 0.0
    %3379 = vmatprep.subr.mxu0 0.0
    %3380 = vmatpush1.msra.mxu0 0.0
    %3381 = vmatprep.subr.mxu0 0.0
    %3382 = vmatpush1.msra.mxu0 0.0
    %3383 = vmatprep.subr.mxu0 0.0
    %3384 = vmatpush1.msra.mxu0 0.0
    %3385 = vmatprep.subr.mxu0 0.0
    %3386 = vmatpush1.msra.mxu0 0.0
    %3387 = vmatprep.subr.mxu0 0.0
    %3388 = vmatpush1.msra.mxu0 0.0
    %3389 = vmatprep.subr.mxu0 0.0
    %3390 = vmatpush1.msra.mxu0 0.0
    %3391 = vmatprep.subr.mxu0 0.0
    %3392 = vmatpush1.msra.mxu0 0.0
    %3393 = vmatprep.subr.mxu0 0.0
    %3394 = vmatpush1.msra.mxu0 0.0
    %3395 = vmatprep.subr.mxu0 0.0
    %3396 = vmatpush1.msra.mxu0 0.0
    %3397 = vmatprep.mubr.f32.mxu0 %v3260
    %3398 = vmatmul.mubr.f32.gmra.mrb[0].mxu0 %v3145
    %v3399 = vpop.f32.mrb[0].mxu0
    %v3400 = vadd.f32 %v3329, %v3399
    %v3401 = vpop.f32.mrb[0].mxu0
    %v3402 = vadd.f32 %v3331, %v3401
    %3403 = vdwg.mxu0
    %v3404 = vmax.f32 %v3400, 0.0
    %v3405 = vmax.f32 %v3402, 0.0
    %v3406 = vld [vmem:[%s7] sm:$0xff]
    %v3407 = vld [vmem:[%s7 + $0x8] sm:$0xff]
    %v3408 = vld [vmem:[%s7 + $0x10] sm:$0xff]
    %v3409 = vld [vmem:[%s7 + $0x18] sm:$0xff]
    %v3410 = vld [vmem:[%s7 + $0x20] sm:$0xff]
    %v3411 = vld [vmem:[%s7 + $0x28] sm:$0xff]
    %v3412 = vld [vmem:[%s7 + $0x30] sm:$0xff]
    %v3413 = vld [vmem:[%s7 + $0x38] sm:$0xff]
    %v3414 = vld [vmem:[%s7 + $0x40] sm:$0xff]
    %v3415 = vld [vmem:[%s7 + $0x48] sm:$0xff]
    %v3416 = vld [vmem:[%s7 + $0x50] sm:$0xff]
    %v3417 = vld [vmem:[%s7 + $0x58] sm:$0xff]
    %v3418 = vld [vmem:[%s7 + $0x60] sm:$0xff]
    %v3419 = vld [vmem:[%s7 + $0x68] sm:$0xff]
    %v3420 = vld [vmem:[%s7 + $0x70] sm:$0xff]
    %v3421 = vld [vmem:[%s7 + $0x78] sm:$0xff]
    %v3422 = vld [vmem:[%s7 + $0x80] sm:$0xff]
    %v3423 = vld [vmem:[%s7 + $0x88] sm:$0xff]
    %v3424 = vld [vmem:[%s8] sm:$0x1]
    %v3426 = vlaneseq
    %v3427 = vshrl.u32 %v3426, 7
    %v3428 = vsub.s32 0, %v3427
    %v3429 = vrot.slane %v3424, %v3428
    %v3432 = vsel %vm2571, %v3405, 0
    %3434 = vmatprep.subr.mxu0 0.0
    %3435 = vmatpush1.msra.mxu0 %v3406
    %3436 = vmatprep.subr.mxu0 0.0
    %3437 = vmatpush1.msra.mxu0 %v3407
    %3438 = vmatprep.subr.mxu0 0.0
    %3439 = vmatpush1.msra.mxu0 %v3408
    %3440 = vmatprep.subr.mxu0 0.0
    %3441 = vmatpush1.msra.mxu0 %v3409
    %3442 = vmatprep.subr.mxu0 0.0
    %3443 = vmatpush1.msra.mxu0 %v3410
    %3444 = vmatprep.subr.mxu0 0.0
    %3445 = vmatpush1.msra.mxu0 %v3411
    %3446 = vmatprep.subr.mxu0 0.0
    %3447 = vmatpush1.msra.mxu0 %v3412
    %3448 = vmatprep.subr.mxu0 0.0
    %3449 = vmatpush1.msra.mxu0 %v3413
    %3450 = vmatprep.subr.mxu0 0.0
    %3451 = vmatpush1.msra.mxu0 %v3414
    %3452 = vmatprep.subr.mxu0 0.0
    %3453 = vmatpush1.msra.mxu0 %v3415
    %3454 = vmatprep.subr.mxu0 0.0
    %3455 = vmatpush1.msra.mxu0 %v3416
    %3456 = vmatprep.subr.mxu0 0.0
    %3457 = vmatpush1.msra.mxu0 %v3417
    %3458 = vmatprep.subr.mxu0 0.0
    %3459 = vmatpush1.msra.mxu0 %v3418
    %3460 = vmatprep.subr.mxu0 0.0
    %3461 = vmatpush1.msra.mxu0 %v3419
    %3462 = vmatprep.subr.mxu0 0.0
    %3463 = vmatpush1.msra.mxu0 %v3420
    %3464 = vmatprep.subr.mxu0 0.0
    %3465 = vmatpush1.msra.mxu0 %v3421
    %3466 = vmatprep.subr.mxu0 0.0
    %3467 = vmatpush1.msra.mxu0 %v3422
    %3468 = vmatprep.subr.mxu0 0.0
    %3469 = vmatpush1.msra.mxu0 %v3423
    %3470 = vmatprep.subr.mxu0 0.0
    %3471 = vmatpush1.msra.mxu0 0.0
    %3472 = vmatprep.subr.mxu0 0.0
    %3473 = vmatpush1.msra.mxu0 0.0
    %3474 = vmatprep.subr.mxu0 0.0
    %3475 = vmatpush1.msra.mxu0 0.0
    %3476 = vmatprep.subr.mxu0 0.0
    %3477 = vmatpush1.msra.mxu0 0.0
    %3478 = vmatprep.subr.mxu0 0.0
    %3479 = vmatpush1.msra.mxu0 0.0
    %3480 = vmatprep.subr.mxu0 0.0
    %3481 = vmatpush1.msra.mxu0 0.0
    %3482 = vmatprep.subr.mxu0 0.0
    %3483 = vmatpush1.msra.mxu0 0.0
    %3484 = vmatprep.subr.mxu0 0.0
    %3485 = vmatpush1.msra.mxu0 0.0
    %3486 = vmatprep.subr.mxu0 0.0
    %3487 = vmatpush1.msra.mxu0 0.0
    %3488 = vmatprep.subr.mxu0 0.0
    %3489 = vmatpush1.msra.mxu0 0.0
    %3490 = vmatprep.subr.mxu0 0.0
    %3491 = vmatpush1.msra.mxu0 0.0
    %3492 = vmatprep.subr.mxu0 0.0
    %3493 = vmatpush1.msra.mxu0 0.0
    %3494 = vmatprep.subr.mxu0 0.0
    %3495 = vmatpush1.msra.mxu0 0.0
    %3496 = vmatprep.subr.mxu0 0.0
    %3497 = vmatpush1.msra.mxu0 0.0
    %3498 = vmatprep.mubr.f32.mxu0 %v3432
    %3499 = vmatmul.mubr.f32.gmra.mrb[0].mxu0 %v3404
    %v3500 = vpop.f32.mrb[0].mxu0
    %v3501 = vadd.f32 %v3429, %v3500
    %v3502 = vpop.f32.mrb[0].mxu0
    %3503 = vdwg.mxu0
    %vm3504 = vcmask 254976
    %v3505 = vsel %vm3504, %v3501, 0.0
    %3506 = vadd.xlane.f32.xlu0 %v3505
    %v3507 = vpop.xlane.xlu0 %3506
    %v3508 = vrcp.pop 32.0
    %v3509 = vmul.f32 %v3507, %v3508
    %v3510 = vsub.f32 %v3501, %v3509
    %v3511 = vmul.f32 %v3510, %v3510
    %v3512 = vsel %vm3504, %v3511, 0.0
    %3513 = vadd.xlane.f32.xlu0 %v3512
    %v3514 = vpop.xlane.xlu0 %3513
    %v3515 = vmul.f32 %v3514, %v3508
    %v3516 = vadd.f32 %v3515, 1e-05
    %v3517 = vrsqrt.pop %v3516
    %v3518 = vmul.f32 %v3510, %v3517
    %v3519 = vld [vmem:[%s9] sm:$0x1]
    %v3521 = vlaneseq
    %v3522 = vshrl.u32 %v3521, 7
    %v3523 = vsub.s32 0, %v3522
    %v3524 = vrot.slane %v3519, %v3523
    %v3526 = vmul.f32 %v3518, %v3524
    %v3527 = vld [vmem:[%s10] sm:$0x1]
    %v3529 = vlaneseq
    %v3530 = vshrl.u32 %v3529, 7
    %v3531 = vsub.s32 0, %v3530
    %v3532 = vrot.slane %v3527, %v3531
    %v3534 = vadd.f32 %v3526, %v3532
    %v3535 = vtanh.pop %v3534
    %3536 = vst.msk [vmem:[#allocation2] sm:$0x3] %vm3504, %v3535
    // Predicated region
    $region46: #{single_view_encoder_forward.1} parent=1 // pred_check
      _
    $region47: #{single_view_encoder_forward.1} parent=1 // pred_check_branch
      %3538 = sbr.rel (0) target = $region49
    $region48: #{single_view_encoder_forward.1} parent=1 // pred_region
      %s3540 = ssub.s32 32, 32
      %3541 = vsyncadd [#allocation3], %s3540
      %s3543 = sshll.u32 [#allocation2], 4
      %s3544 = int_to_ptr.vmem [resolvable:$true] %s3543
      %3546 = dma.vmem_to_hbm [thread:$0]  %s3544, 32, %s11, [#allocation3]
    $region49: #{single_view_encoder_forward.1} parent=1 // pred_fallthru
      _
    // Predicated region
    $region50: #{single_view_encoder_forward.1} parent=1 // pred_check
      _
    $region51: #{single_view_encoder_forward.1} parent=1 // pred_check_branch
      %3548 = sbr.rel (0) target = $region53
    $region52: #{single_view_encoder_forward.1} parent=1 // pred_region
      %3549 = dma.done [#allocation3], 32
    $region53: #{single_view_encoder_forward.1} parent=1 // pred_fallthru
      _
    %3550 = vsyncpa [#allocation3], 1

</llo_original>
